<compile_context>
chip_gen: v7x
topology: tpu7x:2x2x1
jax: 0.10.0
libtpu: 0.0.40
codegen_flags: <defaults>
</compile_context>

<pallas_src>
import math
import functools

import numpy as np
import jax
import jax.numpy as jnp
from jax.experimental import pallas as pl
from jax.experimental.pallas import tpu as pltpu


def _encoder_kernel(x_ref,
                    wqkv_ref, bqkv_ref,
                    wo_ref, bo_ref,
                    g1_ref, be1_ref,
                    wff_ref, bff_ref,
                    g2_ref, be2_ref,
                    wout_ref, bout_ref,
                    out_ref,
                    *, num_heads, mxu_dtype):
    f32 = jnp.float32
    x = x_ref[...].astype(f32)                               # (S, D)
    S, D = x.shape
    H = num_heads
    dk = D // H

    xm = x.astype(mxu_dtype)                                 # cast activations once

    # ---- Fused QKV projection: one full-width (S,D)@(D,3D) MXU matmul ------
    # 1/sqrt(dk) is folded into the Q columns of wqkv/bqkv by the wrapper.
    qkv = (jnp.dot(xm, wqkv_ref[...], preferred_element_type=f32)
           + bqkv_ref[...])                                  # (S, 3D) f32

    def split_heads(t):                                      # (S, D) -> (H, S, dk)
        return jnp.transpose(t.reshape(S, H, dk), (1, 0, 2))

    q = split_heads(qkv[:, 0 * D:1 * D])
    k = split_heads(qkv[:, 1 * D:2 * D])
    v = split_heads(qkv[:, 2 * D:3 * D])

    # ---- Attention: batched q @ k^T (contract last dims), softmax, @ v -----
    s = jnp.einsum('hqe,hke->hqk', q.astype(mxu_dtype), k.astype(mxu_dtype),
                   preferred_element_type=f32)               # (H, S, S)
    s = s - jnp.max(s, axis=-1, keepdims=True)
    p = jnp.exp(s)
    # Divide -> EUP approximate reciprocal + VPU multiply.
    p = p * pl.reciprocal(jnp.sum(p, axis=-1, keepdims=True), approx=True)

    ctx = jnp.einsum('hqk,hke->hqe', p.astype(mxu_dtype), v.astype(mxu_dtype),
                     preferred_element_type=f32)             # (H, S, dk)

    # Merge heads back into a lane-dense (S, D) slab, then a single (S,D)@(D,D)
    # matmul against Wo (== concat(heads) @ Wo.T, no per-head matmuls/sum).
    ctx_flat = jnp.transpose(ctx, (1, 0, 2)).reshape(S, D)
    attn = (jnp.dot(ctx_flat.astype(mxu_dtype), wo_ref[...],
                    preferred_element_type=f32) + bo_ref[...])   # (S, D)

    # ---- Residual + LayerNorm ----------------------------------------------
    def layernorm(t, g_ref, b_ref):
        mu = jnp.mean(t, axis=-1, keepdims=True)
        var = jnp.mean((t - mu) ** 2, axis=-1, keepdims=True)
        return (t - mu) * jax.lax.rsqrt(var + 1e-5) * g_ref[...] + b_ref[...]

    x1 = layernorm(x + attn, g1_ref, be1_ref)

    # ---- Feed-forward (Linear + ReLU), residual + LayerNorm 2 ---------------
    ff = jnp.maximum(
        jnp.dot(x1.astype(mxu_dtype), wff_ref[...], preferred_element_type=f32)
        + bff_ref[...], 0.0)
    x2 = layernorm(x1 + ff, g2_ref, be2_ref)

    # ---- Output projection (padded to a lane-dense width) -------------------
    out = (jnp.dot(x2.astype(mxu_dtype), wout_ref[...],
                   preferred_element_type=f32) + bout_ref[...])  # (S, out_pad)
    out_ref[...] = out.astype(out_ref.dtype)


def _prepare_params(params, num_heads, mxu_dtype, lane_pad=128):
    """Re-layout PyTorch-convention weights for the kernel.

    PyTorch Linear stores W as (out_features, in_features); the kernel wants
    (in, out). Q/K/V are fused into one (D, 3D) weight so the projection is a
    single full-width matmul; 1/sqrt(dk) is folded into the Q columns; the
    output layer is zero-padded to a multiple of 128 lanes (unmasked stores).
    Matmul weights are pre-cast to mxu_dtype; biases / LN params stay float32.
    """
    f32 = jnp.float32
    D = params["wq"].shape[1]
    d_ff = params["wff"].shape[0]
    out_size = params["wout"].shape[0]
    out_pad = pl.cdiv(out_size, lane_pad) * lane_pad
    dk = D // num_heads
    scale = 1.0 / math.sqrt(dk)

    wq = params["wq"].astype(f32).T * scale                   # (D, D) (in, out)
    wk = params["wk"].astype(f32).T
    wv = params["wv"].astype(f32).T
    bq = params["bq"].astype(f32).reshape(1, D) * scale
    bk = params["bk"].astype(f32).reshape(1, D)
    bv = params["bv"].astype(f32).reshape(1, D)

    p = {}
    p["wqkv"] = jnp.concatenate([wq, wk, wv], axis=1).astype(mxu_dtype)  # (D, 3D)
    p["bqkv"] = jnp.concatenate([bq, bk, bv], axis=1)                    # (1, 3D)
    p["wo"] = params["wo"].astype(f32).T.astype(mxu_dtype)               # (D, D)
    p["bo"] = params["bo"].astype(f32).reshape(1, D)
    p["g1"] = params["g1"].astype(f32).reshape(1, D)
    p["be1"] = params["be1"].astype(f32).reshape(1, D)
    p["wff"] = params["wff"].astype(f32).T.astype(mxu_dtype)             # (D, d_ff)
    p["bff"] = params["bff"].astype(f32).reshape(1, d_ff)
    p["g2"] = params["g2"].astype(f32).reshape(1, D)
    p["be2"] = params["be2"].astype(f32).reshape(1, D)
    wout_t = params["wout"].astype(f32).T                                # (d_ff, out)
    p["wout"] = jnp.pad(wout_t, ((0, 0), (0, out_pad - out_size))).astype(mxu_dtype)
    p["bout"] = jnp.pad(params["bout"].astype(f32).reshape(1, out_size),
                        ((0, 0), (0, out_pad - out_size)))
    return p, out_size, out_pad


def transformer_encoder(x, params, num_heads, *, mxu_dtype=jnp.bfloat16):
    """x: (B, S, D) float32.

    mxu_dtype: dtype of MXU operands (weights + activations at matmul inputs).
    bfloat16 (default) is the fast MXU path on v5e/v6e/v7x; accumulation stays
    float32. Pass jnp.float32 for bit-tight accuracy.
    """
    B, S, D = x.shape
    d_ff = params["wff"].shape[0]
    assert d_ff == D, ("reference module computes norm2(x1 + ff(x1)); this only "
                       "typechecks when d_ff == d_model")
    assert D % num_heads == 0

    kp, out_size, out_pad = _prepare_params(params, num_heads, mxu_dtype)

    names = ["wqkv", "bqkv", "wo", "bo", "g1", "be1",
             "wff", "bff", "g2", "be2", "wout", "bout"]
    operands = [x.astype(jnp.float32)] + [kp[n] for n in names]

    kernel = functools.partial(_encoder_kernel, num_heads=num_heads,
                               mxu_dtype=mxu_dtype)

    def build_in_specs(single_buffer_weights):
        def const_spec(arr):
            nd = arr.ndim
            kwargs = {}
            if single_buffer_weights:
                # Block index never changes across the grid -> no double buffer.
                kwargs["pipeline_mode"] = pl.Buffered(1)
            return pl.BlockSpec(arr.shape, lambda b, _nd=nd: (0,) * _nd, **kwargs)
        return ([pl.BlockSpec((None, S, D), lambda b: (b, 0, 0))]
                + [const_spec(kp[n]) for n in names])

    # NOTE: for realistic S / d_model, tile the sequence (grid=(B, S//tq)) with
    # flash-style online softmax instead of materializing (H, S, S) scores.
    def run(single_buffer_weights):
        return pl.pallas_call(
            kernel,
            out_shape=jax.ShapeDtypeStruct((B, S, out_pad), jnp.float32),
            grid=(B,),
            in_specs=build_in_specs(single_buffer_weights),
            out_specs=pl.BlockSpec((None, S, out_pad), lambda b: (b, 0, 0)),
            compiler_params=pltpu.CompilerParams(
                dimension_semantics=("parallel",),
                vmem_limit_bytes=48 * 1024 * 1024),
        )(*operands)

    try:
        out_padded = run(single_buffer_weights=True)
    except Exception:
        # Fall back to default double-buffering if Buffered(1) is rejected.
        out_padded = run(single_buffer_weights=False)

    return out_padded[:, :, :out_size]


def _reference(x, p, num_heads):
    """Pure-JAX reference mirroring the PyTorch forward (PyTorch weight layout)."""
    def lin(v, w, b):
        return v @ w.T + b
    D = x.shape[-1]
    dk = D // num_heads
    q, k, v = lin(x, p["wq"], p["bq"]), lin(x, p["wk"], p["bk"]), lin(x, p["wv"], p["bv"])
    outs = []
    for h in range(num_heads):
        lo, hi = h * dk, (h + 1) * dk
        s = jnp.einsum("bqd,bkd->bqk", q[..., lo:hi], k[..., lo:hi]) / math.sqrt(dk)
        pmat = jax.nn.softmax(s, axis=-1)
        outs.append(jnp.einsum("bqk,bkd->bqd", pmat, v[..., lo:hi]))
    attn = lin(jnp.concatenate(outs, axis=-1), p["wo"], p["bo"])

    def ln(v, g, b):
        mu = jnp.mean(v, axis=-1, keepdims=True)
        var = jnp.mean((v - mu) ** 2, axis=-1, keepdims=True)
        return (v - mu) / jnp.sqrt(var + 1e-5) * g + b

    x1 = ln(x + attn, p["g1"], p["be1"])
    ff = jax.nn.relu(lin(x1, p["wff"], p["bff"]))
    x2 = ln(x1 + ff, p["g2"], p["be2"])
    return lin(x2, p["wout"], p["bout"])


if __name__ == "__main__":
    B, S = 2, 8
    d_model, num_heads, d_ff, output_size = 32, 4, 32, 16  # d_ff == d_model required

    key = jax.random.PRNGKey(0)
    keys = jax.random.split(key, 16)

    def w(k, out_f, in_f):
        return (0.1 * jax.random.normal(k, (out_f, in_f))).astype(jnp.float32)

    def b(k, out_f):
        return (0.1 * jax.random.normal(k, (1, out_f))).astype(jnp.float32)

    params = {
        "wq": w(keys[0], d_model, d_model), "bq": b(keys[1], d_model),
        "wk": w(keys[2], d_model, d_model), "bk": b(keys[3], d_model),
        "wv": w(keys[4], d_model, d_model), "bv": b(keys[5], d_model),
        "wo": w(keys[6], d_model, d_model), "bo": b(keys[7], d_model),
        "g1": jnp.ones((1, d_model), jnp.float32), "be1": jnp.zeros((1, d_model), jnp.float32),
        "wff": w(keys[8], d_ff, d_model), "bff": b(keys[9], d_ff),
        "g2": jnp.ones((1, d_model), jnp.float32), "be2": jnp.zeros((1, d_model), jnp.float32),
        "wout": w(keys[10], output_size, d_ff), "bout": b(keys[11], output_size),
    }

    x = jax.random.normal(keys[12], (B, S, d_model), dtype=jnp.float32)

    ref = _reference(x, params, num_heads)

    # f32 MXU operands: tight correctness check against the reference.
    out_f32 = jax.block_until_ready(
        transformer_encoder(x, params, num_heads, mxu_dtype=jnp.float32))
    ok_f32 = (out_f32.shape == (B, S, output_size)
              and np.allclose(np.asarray(out_f32), np.asarray(ref),
                              atol=5e-3, rtol=5e-3))

    # bf16 MXU operands (default fast path): loose sanity check — error is
    # operand rounding only, accumulation stays f32.
    out_bf16 = jax.block_until_ready(
        transformer_encoder(x, params, num_heads))
    ok_bf16 = (out_bf16.shape == (B, S, output_size)
               and np.allclose(np.asarray(out_bf16), np.asarray(ref),
                               atol=1e-1, rtol=1e-1))

    if ok_f32 and ok_bf16:
        print("KERNEL_OK")
    else:
        print("MISMATCH",
              float(np.max(np.abs(np.asarray(out_f32) - np.asarray(ref)))),
              float(np.max(np.abs(np.asarray(out_bf16) - np.asarray(ref)))))
</pallas_src>

<mosaic_0001>
module attributes {stable_mosaic.version = 11 : i64} {
  func.func @_encoder_kernel(%arg0: i32, %arg1: memref<1x8x32xf32, #tpu.memory_space<vmem>>, %arg2: memref<32x96xf32, #tpu.memory_space<vmem>>, %arg3: memref<1x96xf32, #tpu.memory_space<vmem>>, %arg4: memref<32x32xf32, #tpu.memory_space<vmem>>, %arg5: memref<1x32xf32, #tpu.memory_space<vmem>>, %arg6: memref<1x32xf32, #tpu.memory_space<vmem>>, %arg7: memref<1x32xf32, #tpu.memory_space<vmem>>, %arg8: memref<32x32xf32, #tpu.memory_space<vmem>>, %arg9: memref<1x32xf32, #tpu.memory_space<vmem>>, %arg10: memref<1x32xf32, #tpu.memory_space<vmem>>, %arg11: memref<1x32xf32, #tpu.memory_space<vmem>>, %arg12: memref<32x128xf32, #tpu.memory_space<vmem>>, %arg13: memref<1x128xf32, #tpu.memory_space<vmem>>, %arg14: memref<1x8x128xf32, #tpu.memory_space<vmem>>) attributes {dimension_semantics = [#tpu.dimension_semantics<parallel>], iteration_bounds = array<i64: 2>, scalar_prefetch = 0 : i64, scratch_operands = 0 : i64, tpu.core_type = #tpu.core_type<tc>, window_params = [{transform_indices = @transform_0, window_bounds = array<i64: 1, 8, 32>}, {pipeline_mode = #tpu.pipeline_mode<synchronous>, transform_indices = @transform_1, window_bounds = array<i64: 32, 96>}, {pipeline_mode = #tpu.pipeline_mode<synchronous>, transform_indices = @transform_2, window_bounds = array<i64: 1, 96>}, {pipeline_mode = #tpu.pipeline_mode<synchronous>, transform_indices = @transform_3, window_bounds = array<i64: 32, 32>}, {pipeline_mode = #tpu.pipeline_mode<synchronous>, transform_indices = @transform_4, window_bounds = array<i64: 1, 32>}, {pipeline_mode = #tpu.pipeline_mode<synchronous>, transform_indices = @transform_5, window_bounds = array<i64: 1, 32>}, {pipeline_mode = #tpu.pipeline_mode<synchronous>, transform_indices = @transform_6, window_bounds = array<i64: 1, 32>}, {pipeline_mode = #tpu.pipeline_mode<synchronous>, transform_indices = @transform_7, window_bounds = array<i64: 32, 32>}, {pipeline_mode = #tpu.pipeline_mode<synchronous>, transform_indices = @transform_8, window_bounds = array<i64: 1, 32>}, {pipeline_mode = #tpu.pipeline_mode<synchronous>, transform_indices = @transform_9, window_bounds = array<i64: 1, 32>}, {pipeline_mode = #tpu.pipeline_mode<synchronous>, transform_indices = @transform_10, window_bounds = array<i64: 1, 32>}, {pipeline_mode = #tpu.pipeline_mode<synchronous>, transform_indices = @transform_11, window_bounds = array<i64: 32, 128>}, {pipeline_mode = #tpu.pipeline_mode<synchronous>, transform_indices = @transform_12, window_bounds = array<i64: 1, 128>}, {transform_indices = @transform_13, window_bounds = array<i64: 1, 8, 128>}]} {
    %c0 = arith.constant 0 : index
    %c0_0 = arith.constant 0 : index
    %c0_1 = arith.constant 0 : index
    %0 = vector.load %arg1[%c0, %c0_0, %c0_1] : memref<1x8x32xf32, #tpu.memory_space<vmem>>, vector<1x8x32xf32>
    %1 = vector.shape_cast %0 : vector<1x8x32xf32> to vector<8x32xf32>
    %c0_2 = arith.constant 0 : index
    %c0_3 = arith.constant 0 : index
    %2 = vector.load %arg2[%c0_2, %c0_3] : memref<32x96xf32, #tpu.memory_space<vmem>>, vector<32x96xf32>
    %cst = arith.constant dense<0.000000e+00> : vector<8x96xf32>
    %3 = tpu.matmul %1, %2, %cst {dimension_numbers = #tpu.dot_dimension_numbers<[1], [0], [0], [1], [0, 0, 1, 1], [], []>} : vector<8x32xf32>, vector<32x96xf32>, vector<8x96xf32> -> vector<8x96xf32>
    %c0_4 = arith.constant 0 : index
    %c0_5 = arith.constant 0 : index
    %4 = vector.load %arg3[%c0_4, %c0_5] : memref<1x96xf32, #tpu.memory_space<vmem>>, vector<1x96xf32>
    %5 = vector.broadcast %4 : vector<1x96xf32> to vector<8x96xf32>
    %6 = arith.addf %3, %5 : vector<8x96xf32>
    %7 = vector.extract_strided_slice %6 {offsets = [0, 0], sizes = [8, 32], strides = [1, 1]} : vector<8x96xf32> to vector<8x32xf32>
    %8 = vector.shape_cast %7 : vector<8x32xf32> to vector<8x4x8xf32>
    %9 = tpu.transpose %8, [1, 0, 2] : vector<8x4x8xf32> -> vector<4x8x8xf32>
    %10 = vector.extract_strided_slice %6 {offsets = [0, 32], sizes = [8, 32], strides = [1, 1]} : vector<8x96xf32> to vector<8x32xf32>
    %11 = vector.shape_cast %10 : vector<8x32xf32> to vector<8x4x8xf32>
    %12 = tpu.transpose %11, [1, 0, 2] : vector<8x4x8xf32> -> vector<4x8x8xf32>
    %13 = vector.extract_strided_slice %6 {offsets = [0, 64], sizes = [8, 32], strides = [1, 1]} : vector<8x96xf32> to vector<8x32xf32>
    %14 = vector.shape_cast %13 : vector<8x32xf32> to vector<8x4x8xf32>
    %15 = tpu.transpose %14, [1, 0, 2] : vector<8x4x8xf32> -> vector<4x8x8xf32>
    "tpu.trace_start"() <{level = 10 : i32, message = "hqe,hke->hqk"}> : () -> ()
    %cst_6 = arith.constant dense<0.000000e+00> : vector<4x8x8xf32>
    %16 = tpu.matmul %9, %12, %cst_6 {dimension_numbers = #tpu.dot_dimension_numbers<[2], [2], [1], [1], [0, 0, 0, 1, 1, 1], [0], [0]>} : vector<4x8x8xf32>, vector<4x8x8xf32>, vector<4x8x8xf32> -> vector<4x8x8xf32>
    "tpu.trace_stop"() : () -> ()
    %cst_7 = arith.constant dense<0xFF800000> : vector<4x8xf32>
    %17 = vector.multi_reduction <maximumf>, %16, %cst_7 [2] : vector<4x8x8xf32> to vector<4x8xf32>
    %18 = vector.shape_cast %17 : vector<4x8xf32> to vector<4x8x1xf32>
    %19 = vector.broadcast %18 : vector<4x8x1xf32> to vector<4x8x8xf32>
    %20 = arith.subf %16, %19 : vector<4x8x8xf32>
    %21 = math.exp %20 : vector<4x8x8xf32>
    %cst_8 = arith.constant dense<0.000000e+00> : vector<4x8xf32>
    %22 = vector.multi_reduction <add>, %21, %cst_8 [2] : vector<4x8x8xf32> to vector<4x8xf32>
    %23 = vector.shape_cast %22 : vector<4x8xf32> to vector<4x8x1xf32>
    %24 = tpu.reciprocal %23 {approx = true} : vector<4x8x1xf32> -> vector<4x8x1xf32>
    %25 = vector.broadcast %24 : vector<4x8x1xf32> to vector<4x8x8xf32>
    %26 = arith.mulf %21, %25 : vector<4x8x8xf32>
    "tpu.trace_start"() <{level = 10 : i32, message = "hqk,hke->hqe"}> : () -> ()
    %cst_9 = arith.constant dense<0.000000e+00> : vector<4x8x8xf32>
    %27 = tpu.matmul %26, %15, %cst_9 {dimension_numbers = #tpu.dot_dimension_numbers<[2], [1], [1], [2], [0, 0, 0, 1, 1, 2], [0], [0]>} : vector<4x8x8xf32>, vector<4x8x8xf32>, vector<4x8x8xf32> -> vector<4x8x8xf32>
    "tpu.trace_stop"() : () -> ()
    %28 = tpu.transpose %27, [1, 0, 2] : vector<4x8x8xf32> -> vector<8x4x8xf32>
    %29 = vector.shape_cast %28 : vector<8x4x8xf32> to vector<8x32xf32>
    %c0_10 = arith.constant 0 : index
    %c0_11 = arith.constant 0 : index
    %30 = vector.load %arg4[%c0_10, %c0_11] : memref<32x32xf32, #tpu.memory_space<vmem>>, vector<32x32xf32>
    %cst_12 = arith.constant dense<0.000000e+00> : vector<8x32xf32>
    %31 = tpu.matmul %29, %30, %cst_12 {dimension_numbers = #tpu.dot_dimension_numbers<[1], [0], [0], [1], [0, 0, 1, 1], [], []>} : vector<8x32xf32>, vector<32x32xf32>, vector<8x32xf32> -> vector<8x32xf32>
    %c0_13 = arith.constant 0 : index
    %c0_14 = arith.constant 0 : index
    %32 = vector.load %arg5[%c0_13, %c0_14] : memref<1x32xf32, #tpu.memory_space<vmem>>, vector<1x32xf32>
    %33 = vector.broadcast %32 : vector<1x32xf32> to vector<8x32xf32>
    %34 = arith.addf %31, %33 : vector<8x32xf32>
    %35 = arith.addf %1, %34 : vector<8x32xf32>
    %cst_15 = arith.constant dense<0.000000e+00> : vector<8xf32>
    %36 = vector.multi_reduction <add>, %35, %cst_15 [1] : vector<8x32xf32> to vector<8xf32>
    %37 = vector.shape_cast %36 : vector<8xf32> to vector<8x1xf32>
    %cst_16 = arith.constant 3.200000e+01 : f32
    %38 = vector.broadcast %cst_16 : f32 to vector<8x1xf32>
    %39 = arith.divf %37, %38 : vector<8x1xf32>
    %40 = vector.broadcast %39 : vector<8x1xf32> to vector<8x32xf32>
    %41 = arith.subf %35, %40 : vector<8x32xf32>
    %42 = arith.mulf %41, %41 : vector<8x32xf32>
    %cst_17 = arith.constant dense<0.000000e+00> : vector<8xf32>
    %43 = vector.multi_reduction <add>, %42, %cst_17 [1] : vector<8x32xf32> to vector<8xf32>
    %44 = vector.shape_cast %43 : vector<8xf32> to vector<8x1xf32>
    %cst_18 = arith.constant 3.200000e+01 : f32
    %45 = vector.broadcast %cst_18 : f32 to vector<8x1xf32>
    %46 = arith.divf %44, %45 : vector<8x1xf32>
    %47 = vector.broadcast %39 : vector<8x1xf32> to vector<8x32xf32>
    %48 = arith.subf %35, %47 : vector<8x32xf32>
    %cst_19 = arith.constant 9.99999974E-6 : f32
    %49 = vector.broadcast %cst_19 : f32 to vector<8x1xf32>
    %50 = arith.addf %46, %49 : vector<8x1xf32>
    %51 = math.rsqrt %50 : vector<8x1xf32>
    %52 = vector.broadcast %51 : vector<8x1xf32> to vector<8x32xf32>
    %53 = arith.mulf %48, %52 : vector<8x32xf32>
    %c0_20 = arith.constant 0 : index
    %c0_21 = arith.constant 0 : index
    %54 = vector.load %arg6[%c0_20, %c0_21] : memref<1x32xf32, #tpu.memory_space<vmem>>, vector<1x32xf32>
    %55 = vector.broadcast %54 : vector<1x32xf32> to vector<8x32xf32>
    %56 = arith.mulf %53, %55 : vector<8x32xf32>
    %c0_22 = arith.constant 0 : index
    %c0_23 = arith.constant 0 : index
    %57 = vector.load %arg7[%c0_22, %c0_23] : memref<1x32xf32, #tpu.memory_space<vmem>>, vector<1x32xf32>
    %58 = vector.broadcast %57 : vector<1x32xf32> to vector<8x32xf32>
    %59 = arith.addf %56, %58 : vector<8x32xf32>
    %c0_24 = arith.constant 0 : index
    %c0_25 = arith.constant 0 : index
    %60 = vector.load %arg8[%c0_24, %c0_25] : memref<32x32xf32, #tpu.memory_space<vmem>>, vector<32x32xf32>
    %cst_26 = arith.constant dense<0.000000e+00> : vector<8x32xf32>
    %61 = tpu.matmul %59, %60, %cst_26 {dimension_numbers = #tpu.dot_dimension_numbers<[1], [0], [0], [1], [0, 0, 1, 1], [], []>} : vector<8x32xf32>, vector<32x32xf32>, vector<8x32xf32> -> vector<8x32xf32>
    %c0_27 = arith.constant 0 : index
    %c0_28 = arith.constant 0 : index
    %62 = vector.load %arg9[%c0_27, %c0_28] : memref<1x32xf32, #tpu.memory_space<vmem>>, vector<1x32xf32>
    %63 = vector.broadcast %62 : vector<1x32xf32> to vector<8x32xf32>
    %64 = arith.addf %61, %63 : vector<8x32xf32>
    %cst_29 = arith.constant 0.000000e+00 : f32
    %65 = vector.broadcast %cst_29 : f32 to vector<8x32xf32>
    %66 = arith.maximumf %64, %65 : vector<8x32xf32>
    %67 = arith.addf %59, %66 : vector<8x32xf32>
    %cst_30 = arith.constant dense<0.000000e+00> : vector<8xf32>
    %68 = vector.multi_reduction <add>, %67, %cst_30 [1] : vector<8x32xf32> to vector<8xf32>
    %69 = vector.shape_cast %68 : vector<8xf32> to vector<8x1xf32>
    %cst_31 = arith.constant 3.200000e+01 : f32
    %70 = vector.broadcast %cst_31 : f32 to vector<8x1xf32>
    %71 = arith.divf %69, %70 : vector<8x1xf32>
    %72 = vector.broadcast %71 : vector<8x1xf32> to vector<8x32xf32>
    %73 = arith.subf %67, %72 : vector<8x32xf32>
    %74 = arith.mulf %73, %73 : vector<8x32xf32>
    %cst_32 = arith.constant dense<0.000000e+00> : vector<8xf32>
    %75 = vector.multi_reduction <add>, %74, %cst_32 [1] : vector<8x32xf32> to vector<8xf32>
    %76 = vector.shape_cast %75 : vector<8xf32> to vector<8x1xf32>
    %cst_33 = arith.constant 3.200000e+01 : f32
    %77 = vector.broadcast %cst_33 : f32 to vector<8x1xf32>
    %78 = arith.divf %76, %77 : vector<8x1xf32>
    %79 = vector.broadcast %71 : vector<8x1xf32> to vector<8x32xf32>
    %80 = arith.subf %67, %79 : vector<8x32xf32>
    %cst_34 = arith.constant 9.99999974E-6 : f32
    %81 = vector.broadcast %cst_34 : f32 to vector<8x1xf32>
    %82 = arith.addf %78, %81 : vector<8x1xf32>
    %83 = math.rsqrt %82 : vector<8x1xf32>
    %84 = vector.broadcast %83 : vector<8x1xf32> to vector<8x32xf32>
    %85 = arith.mulf %80, %84 : vector<8x32xf32>
    %c0_35 = arith.constant 0 : index
    %c0_36 = arith.constant 0 : index
    %86 = vector.load %arg10[%c0_35, %c0_36] : memref<1x32xf32, #tpu.memory_space<vmem>>, vector<1x32xf32>
    %87 = vector.broadcast %86 : vector<1x32xf32> to vector<8x32xf32>
    %88 = arith.mulf %85, %87 : vector<8x32xf32>
    %c0_37 = arith.constant 0 : index
    %c0_38 = arith.constant 0 : index
    %89 = vector.load %arg11[%c0_37, %c0_38] : memref<1x32xf32, #tpu.memory_space<vmem>>, vector<1x32xf32>
    %90 = vector.broadcast %89 : vector<1x32xf32> to vector<8x32xf32>
    %91 = arith.addf %88, %90 : vector<8x32xf32>
    %c0_39 = arith.constant 0 : index
    %c0_40 = arith.constant 0 : index
    %92 = vector.load %arg12[%c0_39, %c0_40] : memref<32x128xf32, #tpu.memory_space<vmem>>, vector<32x128xf32>
    %cst_41 = arith.constant dense<0.000000e+00> : vector<8x128xf32>
    %93 = tpu.matmul %91, %92, %cst_41 {dimension_numbers = #tpu.dot_dimension_numbers<[1], [0], [0], [1], [0, 0, 1, 1], [], []>} : vector<8x32xf32>, vector<32x128xf32>, vector<8x128xf32> -> vector<8x128xf32>
    %c0_42 = arith.constant 0 : index
    %c0_43 = arith.constant 0 : index
    %94 = vector.load %arg13[%c0_42, %c0_43] : memref<1x128xf32, #tpu.memory_space<vmem>>, vector<1x128xf32>
    %95 = vector.broadcast %94 : vector<1x128xf32> to vector<8x128xf32>
    %96 = arith.addf %93, %95 : vector<8x128xf32>
    %c0_44 = arith.constant 0 : index
    %c0_45 = arith.constant 0 : index
    %c0_46 = arith.constant 0 : index
    %97 = vector.load %arg14[%c0_44, %c0_45, %c0_46] : memref<1x8x128xf32, #tpu.memory_space<vmem>>, vector<1x8x128xf32>
    %98 = vector.shape_cast %97 : vector<1x8x128xf32> to vector<8x128xf32>
    %99 = vector.shape_cast %96 : vector<8x128xf32> to vector<1x8x128xf32>
    tpu.vector_store %arg14[%c0_44, %c0_45, %c0_46], %99 {strides = array<i32>} : memref<1x8x128xf32, #tpu.memory_space<vmem>>, vector<1x8x128xf32>,
    return
  }
  func.func @transform_0(%arg0: i32) -> (i32, i32, i32) {
    %c0_i32 = arith.constant 0 : i32
    %c0_i32_0 = arith.constant 0 : i32
    %c0_i32_1 = arith.constant 0 : i32
    return %arg0, %c0_i32, %c0_i32_0 : i32, i32, i32
  }
  func.func @transform_1(%arg0: i32) -> (i32, i32) {
    %c0_i32 = arith.constant 0 : i32
    %c0_i32_0 = arith.constant 0 : i32
    %c0_i32_1 = arith.constant 0 : i32
    return %c0_i32, %c0_i32_0 : i32, i32
  }
  func.func @transform_2(%arg0: i32) -> (i32, i32) {
    %c0_i32 = arith.constant 0 : i32
    %c0_i32_0 = arith.constant 0 : i32
    %c0_i32_1 = arith.constant 0 : i32
    return %c0_i32, %c0_i32_0 : i32, i32
  }
  func.func @transform_3(%arg0: i32) -> (i32, i32) {
    %c0_i32 = arith.constant 0 : i32
    %c0_i32_0 = arith.constant 0 : i32
    %c0_i32_1 = arith.constant 0 : i32
    return %c0_i32, %c0_i32_0 : i32, i32
  }
  func.func @transform_4(%arg0: i32) -> (i32, i32) {
    %c0_i32 = arith.constant 0 : i32
    %c0_i32_0 = arith.constant 0 : i32
    %c0_i32_1 = arith.constant 0 : i32
    return %c0_i32, %c0_i32_0 : i32, i32
  }
  func.func @transform_5(%arg0: i32) -> (i32, i32) {
    %c0_i32 = arith.constant 0 : i32
    %c0_i32_0 = arith.constant 0 : i32
    %c0_i32_1 = arith.constant 0 : i32
    return %c0_i32, %c0_i32_0 : i32, i32
  }
  func.func @transform_6(%arg0: i32) -> (i32, i32) {
    %c0_i32 = arith.constant 0 : i32
    %c0_i32_0 = arith.constant 0 : i32
    %c0_i32_1 = arith.constant 0 : i32
    return %c0_i32, %c0_i32_0 : i32, i32
  }
  func.func @transform_7(%arg0: i32) -> (i32, i32) {
    %c0_i32 = arith.constant 0 : i32
    %c0_i32_0 = arith.constant 0 : i32
    %c0_i32_1 = arith.constant 0 : i32
    return %c0_i32, %c0_i32_0 : i32, i32
  }
  func.func @transform_8(%arg0: i32) -> (i32, i32) {
    %c0_i32 = arith.constant 0 : i32
    %c0_i32_0 = arith.constant 0 : i32
    %c0_i32_1 = arith.constant 0 : i32
    return %c0_i32, %c0_i32_0 : i32, i32
  }
  func.func @transform_9(%arg0: i32) -> (i32, i32) {
    %c0_i32 = arith.constant 0 : i32
    %c0_i32_0 = arith.constant 0 : i32
    %c0_i32_1 = arith.constant 0 : i32
    return %c0_i32, %c0_i32_0 : i32, i32
  }
  func.func @transform_10(%arg0: i32) -> (i32, i32) {
    %c0_i32 = arith.constant 0 : i32
    %c0_i32_0 = arith.constant 0 : i32
    %c0_i32_1 = arith.constant 0 : i32
    return %c0_i32, %c0_i32_0 : i32, i32
  }
  func.func @transform_11(%arg0: i32) -> (i32, i32) {
    %c0_i32 = arith.constant 0 : i32
    %c0_i32_0 = arith.constant 0 : i32
    %c0_i32_1 = arith.constant 0 : i32
    return %c0_i32, %c0_i32_0 : i32, i32
  }
  func.func @transform_12(%arg0: i32) -> (i32, i32) {
    %c0_i32 = arith.constant 0 : i32
    %c0_i32_0 = arith.constant 0 : i32
    %c0_i32_1 = arith.constant 0 : i32
    return %c0_i32, %c0_i32_0 : i32, i32
  }
  func.func @transform_13(%arg0: i32) -> (i32, i32, i32) {
    %c0_i32 = arith.constant 0 : i32
    %c0_i32_0 = arith.constant 0 : i32
    %c0_i32_1 = arith.constant 0 : i32
    return %arg0, %c0_i32, %c0_i32_0 : i32, i32, i32
  }
}

module attributes {stable_mosaic.version = 11 : i64} {
  func.func @_encoder_kernel(%arg0: i32, %arg1: memref<1x8x32xf32, #tpu.memory_space<vmem>>, %arg2: memref<32x96xf32, #tpu.memory_space<vmem>>, %arg3: memref<1x96xf32, #tpu.memory_space<vmem>>, %arg4: memref<32x32xf32, #tpu.memory_space<vmem>>, %arg5: memref<1x32xf32, #tpu.memory_space<vmem>>, %arg6: memref<1x32xf32, #tpu.memory_space<vmem>>, %arg7: memref<1x32xf32, #tpu.memory_space<vmem>>, %arg8: memref<32x32xf32, #tpu.memory_space<vmem>>, %arg9: memref<1x32xf32, #tpu.memory_space<vmem>>, %arg10: memref<1x32xf32, #tpu.memory_space<vmem>>, %arg11: memref<1x32xf32, #tpu.memory_space<vmem>>, %arg12: memref<32x128xf32, #tpu.memory_space<vmem>>, %arg13: memref<1x128xf32, #tpu.memory_space<vmem>>, %arg14: memref<1x8x128xf32, #tpu.memory_space<vmem>>) attributes {dimension_semantics = [#tpu.dimension_semantics<parallel>], iteration_bounds = array<i64: 2>, scalar_prefetch = 0 : i64, scratch_operands = 0 : i64, tpu.core_type = #tpu.core_type<tc>, window_params = [{transform_indices = @transform_0, window_bounds = array<i64: 1, 8, 32>}, {pipeline_mode = #tpu.pipeline_mode<synchronous>, transform_indices = @transform_1, window_bounds = array<i64: 32, 96>}, {pipeline_mode = #tpu.pipeline_mode<synchronous>, transform_indices = @transform_2, window_bounds = array<i64: 1, 96>}, {pipeline_mode = #tpu.pipeline_mode<synchronous>, transform_indices = @transform_3, window_bounds = array<i64: 32, 32>}, {pipeline_mode = #tpu.pipeline_mode<synchronous>, transform_indices = @transform_4, window_bounds = array<i64: 1, 32>}, {pipeline_mode = #tpu.pipeline_mode<synchronous>, transform_indices = @transform_5, window_bounds = array<i64: 1, 32>}, {pipeline_mode = #tpu.pipeline_mode<synchronous>, transform_indices = @transform_6, window_bounds = array<i64: 1, 32>}, {pipeline_mode = #tpu.pipeline_mode<synchronous>, transform_indices = @transform_7, window_bounds = array<i64: 32, 32>}, {pipeline_mode = #tpu.pipeline_mode<synchronous>, transform_indices = @transform_8, window_bounds = array<i64: 1, 32>}, {pipeline_mode = #tpu.pipeline_mode<synchronous>, transform_indices = @transform_9, window_bounds = array<i64: 1, 32>}, {pipeline_mode = #tpu.pipeline_mode<synchronous>, transform_indices = @transform_10, window_bounds = array<i64: 1, 32>}, {pipeline_mode = #tpu.pipeline_mode<synchronous>, transform_indices = @transform_11, window_bounds = array<i64: 32, 128>}, {pipeline_mode = #tpu.pipeline_mode<synchronous>, transform_indices = @transform_12, window_bounds = array<i64: 1, 128>}, {transform_indices = @transform_13, window_bounds = array<i64: 1, 8, 128>}]} {
    %c0 = arith.constant 0 : index
    %c0_0 = arith.constant 0 : index
    %c0_1 = arith.constant 0 : index
    %0 = vector.load %arg1[%c0, %c0_0, %c0_1] : memref<1x8x32xf32, #tpu.memory_space<vmem>>, vector<1x8x32xf32>
    %1 = vector.shape_cast %0 : vector<1x8x32xf32> to vector<8x32xf32>
    %c0_2 = arith.constant 0 : index
    %c0_3 = arith.constant 0 : index
    %2 = vector.load %arg2[%c0_2, %c0_3] : memref<32x96xf32, #tpu.memory_space<vmem>>, vector<32x96xf32>
    %cst = arith.constant dense<0.000000e+00> : vector<8x96xf32>
    %3 = tpu.matmul %1, %2, %cst {dimension_numbers = #tpu.dot_dimension_numbers<[1], [0], [0], [1], [0, 0, 1, 1], [], []>} : vector<8x32xf32>, vector<32x96xf32>, vector<8x96xf32> -> vector<8x96xf32>
    %c0_4 = arith.constant 0 : index
    %c0_5 = arith.constant 0 : index
    %4 = vector.load %arg3[%c0_4, %c0_5] : memref<1x96xf32, #tpu.memory_space<vmem>>, vector<1x96xf32>
    %5 = vector.broadcast %4 : vector<1x96xf32> to vector<8x96xf32>
    %6 = arith.addf %3, %5 : vector<8x96xf32>
    %7 = vector.extract_strided_slice %6 {offsets = [0, 0], sizes = [8, 32], strides = [1, 1]} : vector<8x96xf32> to vector<8x32xf32>
    %8 = vector.shape_cast %7 : vector<8x32xf32> to vector<8x4x8xf32>
    %9 = tpu.transpose %8, [1, 0, 2] : vector<8x4x8xf32> -> vector<4x8x8xf32>
    %10 = vector.extract_strided_slice %6 {offsets = [0, 32], sizes = [8, 32], strides = [1, 1]} : vector<8x96xf32> to vector<8x32xf32>
    %11 = vector.shape_cast %10 : vector<8x32xf32> to vector<8x4x8xf32>
    %12 = tpu.transpose %11, [1, 0, 2] : vector<8x4x8xf32> -> vector<4x8x8xf32>
    %13 = vector.extract_strided_slice %6 {offsets = [0, 64], sizes = [8, 32], strides = [1, 1]} : vector<8x96xf32> to vector<8x32xf32>
    %14 = vector.shape_cast %13 : vector<8x32xf32> to vector<8x4x8xf32>
    %15 = tpu.transpose %14, [1, 0, 2] : vector<8x4x8xf32> -> vector<4x8x8xf32>
    "tpu.trace_start"() <{level = 10 : i32, message = "hqe,hke->hqk"}> : () -> ()
    %cst_6 = arith.constant dense<0.000000e+00> : vector<4x8x8xf32>
    %16 = tpu.matmul %9, %12, %cst_6 {dimension_numbers = #tpu.dot_dimension_numbers<[2], [2], [1], [1], [0, 0, 0, 1, 1, 1], [0], [0]>} : vector<4x8x8xf32>, vector<4x8x8xf32>, vector<4x8x8xf32> -> vector<4x8x8xf32>
    "tpu.trace_stop"() : () -> ()
    %cst_7 = arith.constant dense<0xFF800000> : vector<4x8xf32>
    %17 = vector.multi_reduction <maximumf>, %16, %cst_7 [2] : vector<4x8x8xf32> to vector<4x8xf32>
    %18 = vector.shape_cast %17 : vector<4x8xf32> to vector<4x8x1xf32>
    %19 = vector.broadcast %18 : vector<4x8x1xf32> to vector<4x8x8xf32>
    %20 = arith.subf %16, %19 : vector<4x8x8xf32>
    %21 = math.exp %20 : vector<4x8x8xf32>
    %cst_8 = arith.constant dense<0.000000e+00> : vector<4x8xf32>
    %22 = vector.multi_reduction <add>, %21, %cst_8 [2] : vector<4x8x8xf32> to vector<4x8xf32>
    %23 = vector.shape_cast %22 : vector<4x8xf32> to vector<4x8x1xf32>
    %24 = tpu.reciprocal %23 {approx = true} : vector<4x8x1xf32> -> vector<4x8x1xf32>
    %25 = vector.broadcast %24 : vector<4x8x1xf32> to vector<4x8x8xf32>
    %26 = arith.mulf %21, %25 : vector<4x8x8xf32>
    "tpu.trace_start"() <{level = 10 : i32, message = "hqk,hke->hqe"}> : () -> ()
    %cst_9 = arith.constant dense<0.000000e+00> : vector<4x8x8xf32>
    %27 = tpu.matmul %26, %15, %cst_9 {dimension_numbers = #tpu.dot_dimension_numbers<[2], [1], [1], [2], [0, 0, 0, 1, 1, 2], [0], [0]>} : vector<4x8x8xf32>, vector<4x8x8xf32>, vector<4x8x8xf32> -> vector<4x8x8xf32>
    "tpu.trace_stop"() : () -> ()
    %28 = tpu.transpose %27, [1, 0, 2] : vector<4x8x8xf32> -> vector<8x4x8xf32>
    %29 = vector.shape_cast %28 : vector<8x4x8xf32> to vector<8x32xf32>
    %c0_10 = arith.constant 0 : index
    %c0_11 = arith.constant 0 : index
    %30 = vector.load %arg4[%c0_10, %c0_11] : memref<32x32xf32, #tpu.memory_space<vmem>>, vector<32x32xf32>
    %cst_12 = arith.constant dense<0.000000e+00> : vector<8x32xf32>
    %31 = tpu.matmul %29, %30, %cst_12 {dimension_numbers = #tpu.dot_dimension_numbers<[1], [0], [0], [1], [0, 0, 1, 1], [], []>} : vector<8x32xf32>, vector<32x32xf32>, vector<8x32xf32> -> vector<8x32xf32>
    %c0_13 = arith.constant 0 : index
    %c0_14 = arith.constant 0 : index
    %32 = vector.load %arg5[%c0_13, %c0_14] : memref<1x32xf32, #tpu.memory_space<vmem>>, vector<1x32xf32>
    %33 = vector.broadcast %32 : vector<1x32xf32> to vector<8x32xf32>
    %34 = arith.addf %31, %33 : vector<8x32xf32>
    %35 = arith.addf %1, %34 : vector<8x32xf32>
    %cst_15 = arith.constant dense<0.000000e+00> : vector<8xf32>
    %36 = vector.multi_reduction <add>, %35, %cst_15 [1] : vector<8x32xf32> to vector<8xf32>
    %37 = vector.shape_cast %36 : vector<8xf32> to vector<8x1xf32>
    %cst_16 = arith.constant 3.200000e+01 : f32
    %38 = vector.broadcast %cst_16 : f32 to vector<8x1xf32>
    %39 = arith.divf %37, %38 : vector<8x1xf32>
    %40 = vector.broadcast %39 : vector<8x1xf32> to vector<8x32xf32>
    %41 = arith.subf %35, %40 : vector<8x32xf32>
    %42 = arith.mulf %41, %41 : vector<8x32xf32>
    %cst_17 = arith.constant dense<0.000000e+00> : vector<8xf32>
    %43 = vector.multi_reduction <add>, %42, %cst_17 [1] : vector<8x32xf32> to vector<8xf32>
    %44 = vector.shape_cast %43 : vector<8xf32> to vector<8x1xf32>
    %cst_18 = arith.constant 3.200000e+01 : f32
    %45 = vector.broadcast %cst_18 : f32 to vector<8x1xf32>
    %46 = arith.divf %44, %45 : vector<8x1xf32>
    %47 = vector.broadcast %39 : vector<8x1xf32> to vector<8x32xf32>
    %48 = arith.subf %35, %47 : vector<8x32xf32>
    %cst_19 = arith.constant 9.99999974E-6 : f32
    %49 = vector.broadcast %cst_19 : f32 to vector<8x1xf32>
    %50 = arith.addf %46, %49 : vector<8x1xf32>
    %51 = math.rsqrt %50 : vector<8x1xf32>
    %52 = vector.broadcast %51 : vector<8x1xf32> to vector<8x32xf32>
    %53 = arith.mulf %48, %52 : vector<8x32xf32>
    %c0_20 = arith.constant 0 : index
    %c0_21 = arith.constant 0 : index
    %54 = vector.load %arg6[%c0_20, %c0_21] : memref<1x32xf32, #tpu.memory_space<vmem>>, vector<1x32xf32>
    %55 = vector.broadcast %54 : vector<1x32xf32> to vector<8x32xf32>
    %56 = arith.mulf %53, %55 : vector<8x32xf32>
    %c0_22 = arith.constant 0 : index
    %c0_23 = arith.constant 0 : index
    %57 = vector.load %arg7[%c0_22, %c0_23] : memref<1x32xf32, #tpu.memory_space<vmem>>, vector<1x32xf32>
    %58 = vector.broadcast %57 : vector<1x32xf32> to vector<8x32xf32>
    %59 = arith.addf %56, %58 : vector<8x32xf32>
    %c0_24 = arith.constant 0 : index
    %c0_25 = arith.constant 0 : index
    %60 = vector.load %arg8[%c0_24, %c0_25] : memref<32x32xf32, #tpu.memory_space<vmem>>, vector<32x32xf32>
    %cst_26 = arith.constant dense<0.000000e+00> : vector<8x32xf32>
    %61 = tpu.matmul %59, %60, %cst_26 {dimension_numbers = #tpu.dot_dimension_numbers<[1], [0], [0], [1], [0, 0, 1, 1], [], []>} : vector<8x32xf32>, vector<32x32xf32>, vector<8x32xf32> -> vector<8x32xf32>
    %c0_27 = arith.constant 0 : index
    %c0_28 = arith.constant 0 : index
    %62 = vector.load %arg9[%c0_27, %c0_28] : memref<1x32xf32, #tpu.memory_space<vmem>>, vector<1x32xf32>
    %63 = vector.broadcast %62 : vector<1x32xf32> to vector<8x32xf32>
    %64 = arith.addf %61, %63 : vector<8x32xf32>
    %cst_29 = arith.constant 0.000000e+00 : f32
    %65 = vector.broadcast %cst_29 : f32 to vector<8x32xf32>
    %66 = arith.maximumf %64, %65 : vector<8x32xf32>
    %67 = arith.addf %59, %66 : vector<8x32xf32>
    %cst_30 = arith.constant dense<0.000000e+00> : vector<8xf32>
    %68 = vector.multi_reduction <add>, %67, %cst_30 [1] : vector<8x32xf32> to vector<8xf32>
    %69 = vector.shape_cast %68 : vector<8xf32> to vector<8x1xf32>
    %cst_31 = arith.constant 3.200000e+01 : f32
    %70 = vector.broadcast %cst_31 : f32 to vector<8x1xf32>
    %71 = arith.divf %69, %70 : vector<8x1xf32>
    %72 = vector.broadcast %71 : vector<8x1xf32> to vector<8x32xf32>
    %73 = arith.subf %67, %72 : vector<8x32xf32>
    %74 = arith.mulf %73, %73 : vector<8x32xf32>
    %cst_32 = arith.constant dense<0.000000e+00> : vector<8xf32>
    %75 = vector.multi_reduction <add>, %74, %cst_32 [1] : vector<8x32xf32> to vector<8xf32>
    %76 = vector.shape_cast %75 : vector<8xf32> to vector<8x1xf32>
    %cst_33 = arith.constant 3.200000e+01 : f32
    %77 = vector.broadcast %cst_33 : f32 to vector<8x1xf32>
    %78 = arith.divf %76, %77 : vector<8x1xf32>
    %79 = vector.broadcast %71 : vector<8x1xf32> to vector<8x32xf32>
    %80 = arith.subf %67, %79 : vector<8x32xf32>
    %cst_34 = arith.constant 9.99999974E-6 : f32
    %81 = vector.broadcast %cst_34 : f32 to vector<8x1xf32>
    %82 = arith.addf %78, %81 : vector<8x1xf32>
    %83 = math.rsqrt %82 : vector<8x1xf32>
    %84 = vector.broadcast %83 : vector<8x1xf32> to vector<8x32xf32>
    %85 = arith.mulf %80, %84 : vector<8x32xf32>
    %c0_35 = arith.constant 0 : index
    %c0_36 = arith.constant 0 : index
    %86 = vector.load %arg10[%c0_35, %c0_36] : memref<1x32xf32, #tpu.memory_space<vmem>>, vector<1x32xf32>
    %87 = vector.broadcast %86 : vector<1x32xf32> to vector<8x32xf32>
    %88 = arith.mulf %85, %87 : vector<8x32xf32>
    %c0_37 = arith.constant 0 : index
    %c0_38 = arith.constant 0 : index
    %89 = vector.load %arg11[%c0_37, %c0_38] : memref<1x32xf32, #tpu.memory_space<vmem>>, vector<1x32xf32>
    %90 = vector.broadcast %89 : vector<1x32xf32> to vector<8x32xf32>
    %91 = arith.addf %88, %90 : vector<8x32xf32>
    %c0_39 = arith.constant 0 : index
    %c0_40 = arith.constant 0 : index
    %92 = vector.load %arg12[%c0_39, %c0_40] : memref<32x128xf32, #tpu.memory_space<vmem>>, vector<32x128xf32>
    %cst_41 = arith.constant dense<0.000000e+00> : vector<8x128xf32>
    %93 = tpu.matmul %91, %92, %cst_41 {dimension_numbers = #tpu.dot_dimension_numbers<[1], [0], [0], [1], [0, 0, 1, 1], [], []>} : vector<8x32xf32>, vector<32x128xf32>, vector<8x128xf32> -> vector<8x128xf32>
    %c0_42 = arith.constant 0 : index
    %c0_43 = arith.constant 0 : index
    %94 = vector.load %arg13[%c0_42, %c0_43] : memref<1x128xf32, #tpu.memory_space<vmem>>, vector<1x128xf32>
    %95 = vector.broadcast %94 : vector<1x128xf32> to vector<8x128xf32>
    %96 = arith.addf %93, %95 : vector<8x128xf32>
    %c0_44 = arith.constant 0 : index
    %c0_45 = arith.constant 0 : index
    %c0_46 = arith.constant 0 : index
    %97 = vector.load %arg14[%c0_44, %c0_45, %c0_46] : memref<1x8x128xf32, #tpu.memory_space<vmem>>, vector<1x8x128xf32>
    %98 = vector.shape_cast %97 : vector<1x8x128xf32> to vector<8x128xf32>
    %99 = vector.shape_cast %96 : vector<8x128xf32> to vector<1x8x128xf32>
    tpu.vector_store %arg14[%c0_44, %c0_45, %c0_46], %99 {strides = array<i32>} : memref<1x8x128xf32, #tpu.memory_space<vmem>>, vector<1x8x128xf32>,
    return
  }
  func.func @transform_0(%arg0: i32) -> (i32, i32, i32) {
    %c0_i32 = arith.constant 0 : i32
    %c0_i32_0 = arith.constant 0 : i32
    %c0_i32_1 = arith.constant 0 : i32
    return %arg0, %c0_i32, %c0_i32_0 : i32, i32, i32
  }
  func.func @transform_1(%arg0: i32) -> (i32, i32) {
    %c0_i32 = arith.constant 0 : i32
    %c0_i32_0 = arith.constant 0 : i32
    %c0_i32_1 = arith.constant 0 : i32
    return %c0_i32, %c0_i32_0 : i32, i32
  }
  func.func @transform_2(%arg0: i32) -> (i32, i32) {
    %c0_i32 = arith.constant 0 : i32
    %c0_i32_0 = arith.constant 0 : i32
    %c0_i32_1 = arith.constant 0 : i32
    return %c0_i32, %c0_i32_0 : i32, i32
  }
  func.func @transform_3(%arg0: i32) -> (i32, i32) {
    %c0_i32 = arith.constant 0 : i32
    %c0_i32_0 = arith.constant 0 : i32
    %c0_i32_1 = arith.constant 0 : i32
    return %c0_i32, %c0_i32_0 : i32, i32
  }
  func.func @transform_4(%arg0: i32) -> (i32, i32) {
    %c0_i32 = arith.constant 0 : i32
    %c0_i32_0 = arith.constant 0 : i32
    %c0_i32_1 = arith.constant 0 : i32
    return %c0_i32, %c0_i32_0 : i32, i32
  }
  func.func @transform_5(%arg0: i32) -> (i32, i32) {
    %c0_i32 = arith.constant 0 : i32
    %c0_i32_0 = arith.constant 0 : i32
    %c0_i32_1 = arith.constant 0 : i32
    return %c0_i32, %c0_i32_0 : i32, i32
  }
  func.func @transform_6(%arg0: i32) -> (i32, i32) {
    %c0_i32 = arith.constant 0 : i32
    %c0_i32_0 = arith.constant 0 : i32
    %c0_i32_1 = arith.constant 0 : i32
    return %c0_i32, %c0_i32_0 : i32, i32
  }
  func.func @transform_7(%arg0: i32) -> (i32, i32) {
    %c0_i32 = arith.constant 0 : i32
    %c0_i32_0 = arith.constant 0 : i32
    %c0_i32_1 = arith.constant 0 : i32
    return %c0_i32, %c0_i32_0 : i32, i32
  }
  func.func @transform_8(%arg0: i32) -> (i32, i32) {
    %c0_i32 = arith.constant 0 : i32
    %c0_i32_0 = arith.constant 0 : i32
    %c0_i32_1 = arith.constant 0 : i32
    return %c0_i32, %c0_i32_0 : i32, i32
  }
  func.func @transform_9(%arg0: i32) -> (i32, i32) {
    %c0_i32 = arith.constant 0 : i32
    %c0_i32_0 = arith.constant 0 : i32
    %c0_i32_1 = arith.constant 0 : i32
    return %c0_i32, %c0_i32_0 : i32, i32
  }
  func.func @transform_10(%arg0: i32) -> (i32, i32) {
    %c0_i32 = arith.constant 0 : i32
    %c0_i32_0 = arith.constant 0 : i32
    %c0_i32_1 = arith.constant 0 : i32
    return %c0_i32, %c0_i32_0 : i32, i32
  }
  func.func @transform_11(%arg0: i32) -> (i32, i32) {
    %c0_i32 = arith.constant 0 : i32
    %c0_i32_0 = arith.constant 0 : i32
    %c0_i32_1 = arith.constant 0 : i32
    return %c0_i32, %c0_i32_0 : i32, i32
  }
  func.func @transform_12(%arg0: i32) -> (i32, i32) {
    %c0_i32 = arith.constant 0 : i32
    %c0_i32_0 = arith.constant 0 : i32
    %c0_i32_1 = arith.constant 0 : i32
    return %c0_i32, %c0_i32_0 : i32, i32
  }
  func.func @transform_13(%arg0: i32) -> (i32, i32, i32) {
    %c0_i32 = arith.constant 0 : i32
    %c0_i32_0 = arith.constant 0 : i32
    %c0_i32_1 = arith.constant 0 : i32
    return %arg0, %c0_i32, %c0_i32_0 : i32, i32, i32
  }
}

</mosaic_0001>

<llo_original>
// kernel: tpu_custom_call.1
$region0: #{tpu_custom_call.1}
  #allocation0 [shape = 'u32[]', space=smem, size = 0x4, offset = 0x4, fixed_abs, tag = 'smem constant byte address 0x4 - core index']
  #allocation1 [shape = 'u32[144,128]{1,0:T(1,128)}', space=vmem, size = 0x12000, scoped, tag = 'internal scratch']
  %s0 = inlined_call_operand.hbm [shape: f32[2,8,32], index: 0, kind: input, shape index: {}]
  %s1 = inlined_call_operand.hbm [shape: f32[32,96], index: 1, kind: input, shape index: {}]
  %s2 = inlined_call_operand.vmem [shape: f32[1,96], index: 2, kind: input, shape index: {}]
  %s3 = inlined_call_operand.hbm [shape: f32[32,32], index: 3, kind: input, shape index: {}]
  %s4 = inlined_call_operand.vmem [shape: f32[1,32], index: 4, kind: input, shape index: {}]
  %s5 = inlined_call_operand.vmem [shape: f32[1,32], index: 5, kind: input, shape index: {}]
  %s6 = inlined_call_operand.vmem [shape: f32[1,32], index: 6, kind: input, shape index: {}]
  %s7 = inlined_call_operand.hbm [shape: f32[32,32], index: 7, kind: input, shape index: {}]
  %s8 = inlined_call_operand.vmem [shape: f32[1,32], index: 8, kind: input, shape index: {}]
  %s9 = inlined_call_operand.vmem [shape: f32[1,32], index: 9, kind: input, shape index: {}]
  %s10 = inlined_call_operand.vmem [shape: f32[1,32], index: 10, kind: input, shape index: {}]
  %s11 = inlined_call_operand.vmem [shape: f32[32,128], index: 11, kind: input, shape index: {}]
  %s12 = inlined_call_operand.vmem [shape: f32[1,128], index: 12, kind: input, shape index: {}]
  %s13 = inlined_call_operand.hbm [shape: f32[2,8,128], index: 13, kind: output, shape index: {}]
  %s14 = sld [smem:[#allocation0]]
  $region101: #{tpu_custom_call.1} parent=0
    _
  %s16 = ssub.s32 1, %s14
  %s17 = scalar_select 0, %s16, %s14
  $region1: #{tpu_custom_call.1} parent=0
    #allocation2 [shape = 'u8[8192]{0}', space=vmem, size = 0x2000, scoped, tag = 'input window, operand 0']
    #allocation3 [shape = 's32[2]{0}', space=sflag, size = 0x8, scoped, tag = 'scoped memory for tpu_custom_call.1']
    #allocation4 [shape = 's32[2]{0}', space=sflag, size = 0x8, scoped, tag = 'scoped memory for tpu_custom_call.1']
    #allocation5 [shape = 'u8[16384]{0}', space=vmem, size = 0x4000, scoped, tag = 'input window, operand 1, single buffered']
    #allocation6 [shape = 's32[1]{0}', space=sflag, size = 0x4, scoped, tag = 'scoped memory for tpu_custom_call.1']
    #allocation7 [shape = 'u8[16384]{0}', space=vmem, size = 0x4000, scoped, tag = 'input window, operand 3, single buffered']
    #allocation8 [shape = 'u8[16384]{0}', space=vmem, size = 0x4000, scoped, tag = 'input window, operand 7, single buffered']
    #allocation9 [shape = 's32[1]{0}', space=sflag, size = 0x4, scoped, tag = 'scoped memory for tpu_custom_call.1']
    #allocation10 [shape = 'u8[8192]{0}', space=vmem, size = 0x2000, scoped, tag = 'output window, operand 0']
    %18 = vsyncpa [#allocation3], 0
    %s19 = scalar_lea.sflag [#allocation3], 1
    %20 = vsyncpa %s19, 0
    %21 = vsyncpa [#allocation6], 0
    %22 = vsyncpa [#allocation9], 0
    %23 = vsyncpa [#allocation4], 0
    %s24 = scalar_lea.sflag [#allocation4], 1
    %25 = vsyncpa %s24, 0
    loop: start=0, step=1, limit=4
    $region2: #{tpu_custom_call.1} parent=1 // loop_pre_header
      _
    $region3: #{tpu_custom_call.1} parent=1 // loop_header
      %s27 = sphi 0, %s31
      %p28 = scmp.ge.s32.totalorder %s27, 4
      %s37 = sphi 0, %s39
      %s40 = sphi 0, %s37
      %s41 = sphi 0, %s40
      %s57 = sphi 0, %s41
      %s61 = sphi 0, %s61
      %s63 = sphi 0, %s61
      %s64 = sphi 0, %s63
      %s78 = sphi 0, %s64
      %s82 = sphi 0, %s82
      %s84 = sphi 0, %s82
      %s85 = sphi 0, %s84
      %s99 = sphi 0, %s85
      %s103 = sphi 0, %s103
      %s105 = sphi 0, %s103
      %s106 = sphi 0, %s105
      %s120 = sphi 0, %s106
      %s124 = sphi 0, %s124
      %s126 = sphi 0, %s124
      %s127 = sphi 0, %s126
      %s141 = sphi 0, %s127
      %s145 = sphi 0, %s145
      %s147 = sphi 0, %s145
      %s148 = sphi 0, %s147
      %s162 = sphi 0, %s148
      %s166 = sphi 0, %s166
      %s168 = sphi 0, %s166
      %s169 = sphi 0, %s168
      %s183 = sphi 0, %s169
      %s187 = sphi 0, %s187
      %s189 = sphi 0, %s187
      %s190 = sphi 0, %s189
      %s204 = sphi 0, %s190
      %s208 = sphi 0, %s208
      %s210 = sphi 0, %s208
      %s211 = sphi 0, %s210
      %s225 = sphi 0, %s211
      %s229 = sphi 0, %s229
      %s231 = sphi 0, %s229
      %s232 = sphi 0, %s231
      %s246 = sphi 0, %s232
      %s250 = sphi 0, %s250
      %s252 = sphi 0, %s250
      %s253 = sphi 0, %s252
      %s267 = sphi 0, %s253
      %s271 = sphi 0, %s271
      %s273 = sphi 0, %s271
      %s274 = sphi 0, %s273
      %s288 = sphi 0, %s274
      %s292 = sphi 0, %s292
      %s294 = sphi 0, %s292
      %s295 = sphi 0, %s294
      %s309 = sphi 0, %s295
      %s315 = sphi 0, %s317
      %s318 = sphi 0, %s315
      %s319 = sphi 0, %s318
      %s335 = sphi 0, %s319
    $region4: #{tpu_custom_call.1} parent=1 // loop_header_branch
      %30 = sbr.rel (%p28) target = $region8
    $region5: #{tpu_custom_call.1} parent=1 // loop_body
      %s32 = ssub.s32 %s27, 1
      %s33 = ssub.s32 %s27, 2
      %s34 = sadd.s32 %s27, 1
      %s35 = ssub.s32 %s27, %s34
      %p36 = scmp.eq.s32.totalorder %s35, 0
      %s38 = sadd.s32 %s37, 1
      %s39 = scalar_select %p36, %s37, %s38
      %p42 = pneg %p36
      %p43 = scmp.eq.s32.totalorder %s27, 1
      %p44 = por %p42, %p43
      %p45 = scmp.ne.s32.totalorder %s37, %s40
      %p46 = scmp.eq.s32.totalorder %s27, 0
      %p47 = por %p45, %p46
      %p48 = scmp.ne.s32.totalorder %s37, %s40
      %p49 = scmp.eq.s32.totalorder %s32, 1
      %p50 = por %p48, %p49
      %p51 = scmp.ne.s32.totalorder %s40, %s41
      %p52 = scmp.eq.s32.totalorder %s32, 0
      %p53 = por %p51, %p52
      %p54 = scmp.ne.s32.totalorder %s40, %s41
      %p55 = scmp.eq.s32.totalorder %s33, 1
      %p56 = por %p54, %p55
      %p58 = scmp.ne.s32.totalorder %s41, %s57
      %p59 = scmp.eq.s32.totalorder %s33, 0
      %p60 = por %p58, %p59
      %s62 = sadd.s32 %s61, 1
      %p65 = scmp.eq.s32.totalorder %s27, 1
      %p66 = scmp.ne.s32.totalorder %s61, %s63
      %p67 = scmp.eq.s32.totalorder %s27, 0
      %p68 = por %p66, %p67
      %p69 = scmp.ne.s32.totalorder %s61, %s63
      %p70 = scmp.eq.s32.totalorder %s32, 1
      %p71 = por %p69, %p70
      %p72 = scmp.ne.s32.totalorder %s63, %s64
      %p73 = scmp.eq.s32.totalorder %s32, 0
      %p74 = por %p72, %p73
      %p75 = scmp.ne.s32.totalorder %s63, %s64
      %p76 = scmp.eq.s32.totalorder %s33, 1
      %p77 = por %p75, %p76
      %p79 = scmp.ne.s32.totalorder %s64, %s78
      %p80 = scmp.eq.s32.totalorder %s33, 0
      %p81 = por %p79, %p80
      %s83 = sadd.s32 %s82, 1
      %p86 = scmp.eq.s32.totalorder %s27, 1
      %p87 = scmp.ne.s32.totalorder %s82, %s84
      %p88 = scmp.eq.s32.totalorder %s27, 0
      %p89 = por %p87, %p88
      %p90 = scmp.ne.s32.totalorder %s82, %s84
      %p91 = scmp.eq.s32.totalorder %s32, 1
      %p92 = por %p90, %p91
      %p93 = scmp.ne.s32.totalorder %s84, %s85
      %p94 = scmp.eq.s32.totalorder %s32, 0
      %p95 = por %p93, %p94
      %p96 = scmp.ne.s32.totalorder %s84, %s85
      %p97 = scmp.eq.s32.totalorder %s33, 1
      %p98 = por %p96, %p97
      %p100 = scmp.ne.s32.totalorder %s85, %s99
      %p101 = scmp.eq.s32.totalorder %s33, 0
      %p102 = por %p100, %p101
      %s104 = sadd.s32 %s103, 1
      %p107 = scmp.eq.s32.totalorder %s27, 1
      %p108 = scmp.ne.s32.totalorder %s103, %s105
      %p109 = scmp.eq.s32.totalorder %s27, 0
      %p110 = por %p108, %p109
      %p111 = scmp.ne.s32.totalorder %s103, %s105
      %p112 = scmp.eq.s32.totalorder %s32, 1
      %p113 = por %p111, %p112
      %p114 = scmp.ne.s32.totalorder %s105, %s106
      %p115 = scmp.eq.s32.totalorder %s32, 0
      %p116 = por %p114, %p115
      %p117 = scmp.ne.s32.totalorder %s105, %s106
      %p118 = scmp.eq.s32.totalorder %s33, 1
      %p119 = por %p117, %p118
      %p121 = scmp.ne.s32.totalorder %s106, %s120
      %p122 = scmp.eq.s32.totalorder %s33, 0
      %p123 = por %p121, %p122
      %s125 = sadd.s32 %s124, 1
      %p128 = scmp.eq.s32.totalorder %s27, 1
      %p129 = scmp.ne.s32.totalorder %s124, %s126
      %p130 = scmp.eq.s32.totalorder %s27, 0
      %p131 = por %p129, %p130
      %p132 = scmp.ne.s32.totalorder %s124, %s126
      %p133 = scmp.eq.s32.totalorder %s32, 1
      %p134 = por %p132, %p133
      %p135 = scmp.ne.s32.totalorder %s126, %s127
      %p136 = scmp.eq.s32.totalorder %s32, 0
      %p137 = por %p135, %p136
      %p138 = scmp.ne.s32.totalorder %s126, %s127
      %p139 = scmp.eq.s32.totalorder %s33, 1
      %p140 = por %p138, %p139
      %p142 = scmp.ne.s32.totalorder %s127, %s141
      %p143 = scmp.eq.s32.totalorder %s33, 0
      %p144 = por %p142, %p143
      %s146 = sadd.s32 %s145, 1
      %p149 = scmp.eq.s32.totalorder %s27, 1
      %p150 = scmp.ne.s32.totalorder %s145, %s147
      %p151 = scmp.eq.s32.totalorder %s27, 0
      %p152 = por %p150, %p151
      %p153 = scmp.ne.s32.totalorder %s145, %s147
      %p154 = scmp.eq.s32.totalorder %s32, 1
      %p155 = por %p153, %p154
      %p156 = scmp.ne.s32.totalorder %s147, %s148
      %p157 = scmp.eq.s32.totalorder %s32, 0
      %p158 = por %p156, %p157
      %p159 = scmp.ne.s32.totalorder %s147, %s148
      %p160 = scmp.eq.s32.totalorder %s33, 1
      %p161 = por %p159, %p160
      %p163 = scmp.ne.s32.totalorder %s148, %s162
      %p164 = scmp.eq.s32.totalorder %s33, 0
      %p165 = por %p163, %p164
      %s167 = sadd.s32 %s166, 1
      %p170 = scmp.eq.s32.totalorder %s27, 1
      %p171 = scmp.ne.s32.totalorder %s166, %s168
      %p172 = scmp.eq.s32.totalorder %s27, 0
      %p173 = por %p171, %p172
      %p174 = scmp.ne.s32.totalorder %s166, %s168
      %p175 = scmp.eq.s32.totalorder %s32, 1
      %p176 = por %p174, %p175
      %p177 = scmp.ne.s32.totalorder %s168, %s169
      %p178 = scmp.eq.s32.totalorder %s32, 0
      %p179 = por %p177, %p178
      %p180 = scmp.ne.s32.totalorder %s168, %s169
      %p181 = scmp.eq.s32.totalorder %s33, 1
      %p182 = por %p180, %p181
      %p184 = scmp.ne.s32.totalorder %s169, %s183
      %p185 = scmp.eq.s32.totalorder %s33, 0
      %p186 = por %p184, %p185
      %s188 = sadd.s32 %s187, 1
      %p191 = scmp.eq.s32.totalorder %s27, 1
      %p192 = scmp.ne.s32.totalorder %s187, %s189
      %p193 = scmp.eq.s32.totalorder %s27, 0
      %p194 = por %p192, %p193
      %p195 = scmp.ne.s32.totalorder %s187, %s189
      %p196 = scmp.eq.s32.totalorder %s32, 1
      %p197 = por %p195, %p196
      %p198 = scmp.ne.s32.totalorder %s189, %s190
      %p199 = scmp.eq.s32.totalorder %s32, 0
      %p200 = por %p198, %p199
      %p201 = scmp.ne.s32.totalorder %s189, %s190
      %p202 = scmp.eq.s32.totalorder %s33, 1
      %p203 = por %p201, %p202
      %p205 = scmp.ne.s32.totalorder %s190, %s204
      %p206 = scmp.eq.s32.totalorder %s33, 0
      %p207 = por %p205, %p206
      %s209 = sadd.s32 %s208, 1
      %p212 = scmp.eq.s32.totalorder %s27, 1
      %p213 = scmp.ne.s32.totalorder %s208, %s210
      %p214 = scmp.eq.s32.totalorder %s27, 0
      %p215 = por %p213, %p214
      %p216 = scmp.ne.s32.totalorder %s208, %s210
      %p217 = scmp.eq.s32.totalorder %s32, 1
      %p218 = por %p216, %p217
      %p219 = scmp.ne.s32.totalorder %s210, %s211
      %p220 = scmp.eq.s32.totalorder %s32, 0
      %p221 = por %p219, %p220
      %p222 = scmp.ne.s32.totalorder %s210, %s211
      %p223 = scmp.eq.s32.totalorder %s33, 1
      %p224 = por %p222, %p223
      %p226 = scmp.ne.s32.totalorder %s211, %s225
      %p227 = scmp.eq.s32.totalorder %s33, 0
      %p228 = por %p226, %p227
      %s230 = sadd.s32 %s229, 1
      %p233 = scmp.eq.s32.totalorder %s27, 1
      %p234 = scmp.ne.s32.totalorder %s229, %s231
      %p235 = scmp.eq.s32.totalorder %s27, 0
      %p236 = por %p234, %p235
      %p237 = scmp.ne.s32.totalorder %s229, %s231
      %p238 = scmp.eq.s32.totalorder %s32, 1
      %p239 = por %p237, %p238
      %p240 = scmp.ne.s32.totalorder %s231, %s232
      %p241 = scmp.eq.s32.totalorder %s32, 0
      %p242 = por %p240, %p241
      %p243 = scmp.ne.s32.totalorder %s231, %s232
      %p244 = scmp.eq.s32.totalorder %s33, 1
      %p245 = por %p243, %p244
      %p247 = scmp.ne.s32.totalorder %s232, %s246
      %p248 = scmp.eq.s32.totalorder %s33, 0
      %p249 = por %p247, %p248
      %s251 = sadd.s32 %s250, 1
      %p254 = scmp.eq.s32.totalorder %s27, 1
      %p255 = scmp.ne.s32.totalorder %s250, %s252
      %p256 = scmp.eq.s32.totalorder %s27, 0
      %p257 = por %p255, %p256
      %p258 = scmp.ne.s32.totalorder %s250, %s252
      %p259 = scmp.eq.s32.totalorder %s32, 1
      %p260 = por %p258, %p259
      %p261 = scmp.ne.s32.totalorder %s252, %s253
      %p262 = scmp.eq.s32.totalorder %s32, 0
      %p263 = por %p261, %p262
      %p264 = scmp.ne.s32.totalorder %s252, %s253
      %p265 = scmp.eq.s32.totalorder %s33, 1
      %p266 = por %p264, %p265
      %p268 = scmp.ne.s32.totalorder %s253, %s267
      %p269 = scmp.eq.s32.totalorder %s33, 0
      %p270 = por %p268, %p269
      %s272 = sadd.s32 %s271, 1
      %p275 = scmp.eq.s32.totalorder %s27, 1
      %p276 = scmp.ne.s32.totalorder %s271, %s273
      %p277 = scmp.eq.s32.totalorder %s27, 0
      %p278 = por %p276, %p277
      %p279 = scmp.ne.s32.totalorder %s271, %s273
      %p280 = scmp.eq.s32.totalorder %s32, 1
      %p281 = por %p279, %p280
      %p282 = scmp.ne.s32.totalorder %s273, %s274
      %p283 = scmp.eq.s32.totalorder %s32, 0
      %p284 = por %p282, %p283
      %p285 = scmp.ne.s32.totalorder %s273, %s274
      %p286 = scmp.eq.s32.totalorder %s33, 1
      %p287 = por %p285, %p286
      %p289 = scmp.ne.s32.totalorder %s274, %s288
      %p290 = scmp.eq.s32.totalorder %s33, 0
      %p291 = por %p289, %p290
      %s293 = sadd.s32 %s292, 1
      %p296 = scmp.eq.s32.totalorder %s27, 1
      %p297 = scmp.ne.s32.totalorder %s292, %s294
      %p298 = scmp.eq.s32.totalorder %s27, 0
      %p299 = por %p297, %p298
      %p300 = scmp.ne.s32.totalorder %s292, %s294
      %p301 = scmp.eq.s32.totalorder %s32, 1
      %p302 = por %p300, %p301
      %p303 = scmp.ne.s32.totalorder %s294, %s295
      %p304 = scmp.eq.s32.totalorder %s32, 0
      %p305 = por %p303, %p304
      %p306 = scmp.ne.s32.totalorder %s294, %s295
      %p307 = scmp.eq.s32.totalorder %s33, 1
      %p308 = por %p306, %p307
      %p310 = scmp.ne.s32.totalorder %s295, %s309
      %p311 = scmp.eq.s32.totalorder %s33, 0
      %p312 = por %p310, %p311
      %s313 = ssub.s32 %s27, %s34
      %p314 = scmp.eq.s32.totalorder %s313, 0
      %s316 = sadd.s32 %s315, 1
      %s317 = scalar_select %p314, %s315, %s316
      %p320 = pneg %p314
      %p321 = scmp.eq.s32.totalorder %s27, 1
      %p322 = por %p320, %p321
      %p323 = scmp.ne.s32.totalorder %s315, %s318
      %p324 = scmp.eq.s32.totalorder %s27, 0
      %p325 = por %p323, %p324
      %p326 = scmp.ne.s32.totalorder %s315, %s318
      %p327 = scmp.eq.s32.totalorder %s32, 1
      %p328 = por %p326, %p327
      %p329 = scmp.ne.s32.totalorder %s318, %s319
      %p330 = scmp.eq.s32.totalorder %s32, 0
      %p331 = por %p329, %p330
      %p332 = scmp.ne.s32.totalorder %s318, %s319
      %p333 = scmp.eq.s32.totalorder %s33, 1
      %p334 = por %p332, %p333
      %p336 = scmp.ne.s32.totalorder %s319, %s335
      %p337 = scmp.eq.s32.totalorder %s33, 0
      %p338 = por %p336, %p337
      %p339 = scmp.le.s32.totalorder 1, %s27
      %p340 = scmp.lt.s32.totalorder %s27, 3
      %p341 = pnand %p339, %p340
      %p342 = pneg %p341
      // Predicated region
      $region9: #{tpu_custom_call.1} parent=5 // pred_check
        _
      $region10: #{tpu_custom_call.1} parent=5 // pred_check_branch
        %344 = sbr.rel (%p341) target = $region12
      $region11: #{tpu_custom_call.1} parent=5 // pred_region
        %s345 = ssub.s32 %s27, 1
        // Predicated region
        $region13: #{tpu_custom_call.1} parent=11 // pred_check
          %p346 = pneg %p74
        $region14: #{tpu_custom_call.1} parent=11 // pred_check_branch
          %348 = sbr.rel (%p346) target = $region16
        $region15: #{tpu_custom_call.1} parent=11 // pred_region
          %s350 = ssub.s32 512, 512
          %351 = vsyncadd [#allocation6], %s350
          %s352 = sshll.u32 [#allocation5], 4
          %s353 = int_to_ptr.vmem [resolvable:$true] %s352
          %358 = dma.hbm_to_vmem [thread:$0]  %s1, 512, %s353, [#allocation6], 128, 128, 8
        $region16: #{tpu_custom_call.1} parent=11 // pred_fallthru
          _
        // Predicated region
        $region17: #{tpu_custom_call.1} parent=11 // pred_check
          %p359 = pneg %p95
        $region18: #{tpu_custom_call.1} parent=11 // pred_check_branch
          %361 = sbr.rel (%p359) target = $region20
        $region19: #{tpu_custom_call.1} parent=11 // pred_region
          _
        $region20: #{tpu_custom_call.1} parent=11 // pred_fallthru
          _
        // Predicated region
        $region21: #{tpu_custom_call.1} parent=11 // pred_check
          %p362 = pneg %p116
        $region22: #{tpu_custom_call.1} parent=11 // pred_check_branch
          %364 = sbr.rel (%p362) target = $region24
        $region23: #{tpu_custom_call.1} parent=11 // pred_region
          %s366 = ssub.s32 512, 512
          %367 = vsyncadd [#allocation6], %s366
          %s368 = sshll.u32 [#allocation7], 4
          %s369 = int_to_ptr.vmem [resolvable:$true] %s368
          %374 = dma.hbm_to_vmem [thread:$0]  %s3, 512, %s369, [#allocation6], 128, 128, 8
        $region24: #{tpu_custom_call.1} parent=11 // pred_fallthru
          _
        // Predicated region
        $region25: #{tpu_custom_call.1} parent=11 // pred_check
          %p375 = pneg %p137
        $region26: #{tpu_custom_call.1} parent=11 // pred_check_branch
          %377 = sbr.rel (%p375) target = $region28
        $region27: #{tpu_custom_call.1} parent=11 // pred_region
          _
        $region28: #{tpu_custom_call.1} parent=11 // pred_fallthru
          _
        // Predicated region
        $region29: #{tpu_custom_call.1} parent=11 // pred_check
          %p378 = pneg %p158
        $region30: #{tpu_custom_call.1} parent=11 // pred_check_branch
          %380 = sbr.rel (%p378) target = $region32
        $region31: #{tpu_custom_call.1} parent=11 // pred_region
          _
        $region32: #{tpu_custom_call.1} parent=11 // pred_fallthru
          _
        // Predicated region
        $region33: #{tpu_custom_call.1} parent=11 // pred_check
          %p381 = pneg %p179
        $region34: #{tpu_custom_call.1} parent=11 // pred_check_branch
          %383 = sbr.rel (%p381) target = $region36
        $region35: #{tpu_custom_call.1} parent=11 // pred_region
          _
        $region36: #{tpu_custom_call.1} parent=11 // pred_fallthru
          _
        // Predicated region
        $region37: #{tpu_custom_call.1} parent=11 // pred_check
          %p384 = pneg %p200
        $region38: #{tpu_custom_call.1} parent=11 // pred_check_branch
          %386 = sbr.rel (%p384) target = $region40
        $region39: #{tpu_custom_call.1} parent=11 // pred_region
          %s388 = ssub.s32 512, 512
          %389 = vsyncadd [#allocation9], %s388
          %s390 = sshll.u32 [#allocation8], 4
          %s391 = int_to_ptr.vmem [resolvable:$true] %s390
          %396 = dma.hbm_to_vmem [thread:$0]  %s7, 512, %s391, [#allocation9], 128, 128, 8
        $region40: #{tpu_custom_call.1} parent=11 // pred_fallthru
          _
        // Predicated region
        $region41: #{tpu_custom_call.1} parent=11 // pred_check
          %p397 = pneg %p221
        $region42: #{tpu_custom_call.1} parent=11 // pred_check_branch
          %399 = sbr.rel (%p397) target = $region44
        $region43: #{tpu_custom_call.1} parent=11 // pred_region
          _
        $region44: #{tpu_custom_call.1} parent=11 // pred_fallthru
          _
        // Predicated region
        $region45: #{tpu_custom_call.1} parent=11 // pred_check
          %p400 = pneg %p242
        $region46: #{tpu_custom_call.1} parent=11 // pred_check_branch
          %402 = sbr.rel (%p400) target = $region48
        $region47: #{tpu_custom_call.1} parent=11 // pred_region
          _
        $region48: #{tpu_custom_call.1} parent=11 // pred_fallthru
          _
        // Predicated region
        $region49: #{tpu_custom_call.1} parent=11 // pred_check
          %p403 = pneg %p263
        $region50: #{tpu_custom_call.1} parent=11 // pred_check_branch
          %405 = sbr.rel (%p403) target = $region52
        $region51: #{tpu_custom_call.1} parent=11 // pred_region
          _
        $region52: #{tpu_custom_call.1} parent=11 // pred_fallthru
          _
        // Predicated region
        $region53: #{tpu_custom_call.1} parent=11 // pred_check
          %p406 = pneg %p284
        $region54: #{tpu_custom_call.1} parent=11 // pred_check_branch
          %408 = sbr.rel (%p406) target = $region56
        $region55: #{tpu_custom_call.1} parent=11 // pred_region
          _
        $region56: #{tpu_custom_call.1} parent=11 // pred_fallthru
          _
        // Predicated region
        $region57: #{tpu_custom_call.1} parent=11 // pred_check
          %p409 = pneg %p305
        $region58: #{tpu_custom_call.1} parent=11 // pred_check_branch
          %411 = sbr.rel (%p409) target = $region60
        $region59: #{tpu_custom_call.1} parent=11 // pred_region
          _
        $region60: #{tpu_custom_call.1} parent=11 // pred_fallthru
          _
      $region12: #{tpu_custom_call.1} parent=5 // pred_fallthru
        _
      %p412 = scmp.lt.s32.totalorder %s27, 2
      // Predicated region
      $region61: #{tpu_custom_call.1} parent=5 // pred_check
        %p413 = pneg %p412
      $region62: #{tpu_custom_call.1} parent=5 // pred_check_branch
        %415 = sbr.rel (%p413) target = $region64
      $region63: #{tpu_custom_call.1} parent=5 // pred_region
        // Predicated region
        $region65: #{tpu_custom_call.1} parent=63 // pred_check
          %p416 = pneg %p47
        $region66: #{tpu_custom_call.1} parent=63 // pred_check_branch
          %418 = sbr.rel (%p416) target = $region68
        $region67: #{tpu_custom_call.1} parent=63 // pred_region
          %s419 = sand.u32 %s37, 1
          %s420 = scalar_lea.sflag [#allocation3], %s419
          %s421 = sand.u32 %s37, 1
          %s422 = smul.addr %s421, 8
          %s423 = scalar_lea.vmem [#allocation2], %s422
          %s425 = ssub.s32 128, 128
          %426 = vsyncadd %s420, %s425
          %s427 = smul.addr %s27, 128
          %s428 = scalar_lea.hbm %s0, %s427
          %s430 = sshll.u32 %s423, 4
          %s431 = int_to_ptr.vmem [resolvable:$true] %s430
          %433 = dma.hbm_to_vmem [thread:$0]  %s428, 128, %s431, %s420
        $region68: #{tpu_custom_call.1} parent=63 // pred_fallthru
          _
      $region64: #{tpu_custom_call.1} parent=5 // pred_fallthru
        _
      %p434 = scmp.le.s32.totalorder 1, %s27
      %p435 = scmp.lt.s32.totalorder %s27, 3
      %p436 = pnand %p434, %p435
      %p437 = pneg %p436
      // Predicated region
      $region69: #{tpu_custom_call.1} parent=5 // pred_check
        _
      $region70: #{tpu_custom_call.1} parent=5 // pred_check_branch
        %439 = sbr.rel (%p436) target = $region72
      $region71: #{tpu_custom_call.1} parent=5 // pred_region
        %s440 = ssub.s32 %s27, 1
        %s441 = sand.u32 %s40, 1
        %s442 = scalar_lea.sflag [#allocation3], %s441
        %s443 = sand.u32 %s40, 1
        %s444 = smul.addr %s443, 8
        %s445 = scalar_lea.vmem [#allocation2], %s444
        // Predicated region
        $region73: #{tpu_custom_call.1} parent=71 // pred_check
          %p446 = pneg %p53
        $region74: #{tpu_custom_call.1} parent=71 // pred_check_branch
          %448 = sbr.rel (%p446) target = $region76
        $region75: #{tpu_custom_call.1} parent=71 // pred_region
          %449 = dma.done %s442, 128
        $region76: #{tpu_custom_call.1} parent=71 // pred_fallthru
          _
        // Predicated region
        $region77: #{tpu_custom_call.1} parent=71 // pred_check
          %p450 = pneg %p74
        $region78: #{tpu_custom_call.1} parent=71 // pred_check_branch
          %452 = sbr.rel (%p450) target = $region80
        $region79: #{tpu_custom_call.1} parent=71 // pred_region
          %453 = dma.done [#allocation6], 512
        $region80: #{tpu_custom_call.1} parent=71 // pred_fallthru
          _
        // Predicated region
        $region81: #{tpu_custom_call.1} parent=71 // pred_check
          %p454 = pneg %p116
        $region82: #{tpu_custom_call.1} parent=71 // pred_check_branch
          %456 = sbr.rel (%p454) target = $region84
        $region83: #{tpu_custom_call.1} parent=71 // pred_region
          %457 = dma.done [#allocation6], 512
        $region84: #{tpu_custom_call.1} parent=71 // pred_fallthru
          _
        // Predicated region
        $region85: #{tpu_custom_call.1} parent=71 // pred_check
          %p458 = pneg %p200
        $region86: #{tpu_custom_call.1} parent=71 // pred_check_branch
          %460 = sbr.rel (%p458) target = $region88
        $region87: #{tpu_custom_call.1} parent=71 // pred_region
          %461 = dma.done [#allocation9], 512
        $region88: #{tpu_custom_call.1} parent=71 // pred_fallthru
          _
        %s462 = sand.u32 %s40, 1
        %s463 = scalar_lea.sflag [#allocation3], %s462
        %s464 = sand.u32 %s40, 1
        %s465 = smul.addr %s464, 8
        %s466 = scalar_lea.vmem [#allocation2], %s465
        %p467 = pneg %p53
        %p468 = pneg %p50
        %p469 = pneg %p74
        %p470 = pneg %p71
        %p471 = pneg %p95
        %p472 = pneg %p92
        %p473 = pneg %p116
        %p474 = pneg %p113
        %p475 = pneg %p137
        %p476 = pneg %p134
        %p477 = pneg %p158
        %p478 = pneg %p155
        %p479 = pneg %p179
        %p480 = pneg %p176
        %p481 = pneg %p200
        %p482 = pneg %p197
        %p483 = pneg %p221
        %p484 = pneg %p218
        %p485 = pneg %p242
        %p486 = pneg %p239
        %p487 = pneg %p263
        %p488 = pneg %p260
        %p489 = pneg %p284
        %p490 = pneg %p281
        %p491 = pneg %p305
        %p492 = pneg %p302
        %p493 = pneg %p331
        %p494 = pneg %p328
        %s495 = sand.u32 %s318, 1
        %s496 = scalar_lea.sflag [#allocation4], %s495
        %s497 = sand.u32 %s318, 1
        %s498 = smul.addr %s497, 8
        %s499 = scalar_lea.vmem [#allocation10], %s498
        %v500 = vld [vmem:[%s445] sm:$0xff]
        %v501 = vld [vmem:[#allocation5] sm:$0xff]
        %v502 = vld [vmem:[#allocation5 + $0x8] sm:$0xff]
        %v503 = vld [vmem:[#allocation5 + $0x10] sm:$0xff]
        %v504 = vld [vmem:[#allocation5 + $0x18] sm:$0xff]
        %v505 = vld [vmem:[%s2] sm:$0x1]
        %v507 = vlaneseq
        %v508 = vshrl.u32 %v507, 7
        %v509 = vsub.s32 0, %v508
        %v510 = vrot.slane %v505, %v509
        %vm512 = vcmask 261120
        %v514 = vsel %vm512, %v500, 0
        %516 = vmatprep.subr.mxu0 0.0
        %517 = vmatpush1.msra.mxu0 %v501
        %518 = vmatprep.subr.mxu0 0.0
        %519 = vmatpush1.msra.mxu0 %v502
        %520 = vmatprep.subr.mxu0 0.0
        %521 = vmatpush1.msra.mxu0 %v503
        %522 = vmatprep.subr.mxu0 0.0
        %523 = vmatpush1.msra.mxu0 %v504
        %524 = vmatprep.subr.mxu0 0.0
        %525 = vmatpush1.msra.mxu0 0.0
        %526 = vmatprep.subr.mxu0 0.0
        %527 = vmatpush1.msra.mxu0 0.0
        %528 = vmatprep.subr.mxu0 0.0
        %529 = vmatpush1.msra.mxu0 0.0
        %530 = vmatprep.subr.mxu0 0.0
        %531 = vmatpush1.msra.mxu0 0.0
        %532 = vmatprep.subr.mxu0 0.0
        %533 = vmatpush1.msra.mxu0 0.0
        %534 = vmatprep.subr.mxu0 0.0
        %535 = vmatpush1.msra.mxu0 0.0
        %536 = vmatprep.subr.mxu0 0.0
        %537 = vmatpush1.msra.mxu0 0.0
        %538 = vmatprep.subr.mxu0 0.0
        %539 = vmatpush1.msra.mxu0 0.0
        %540 = vmatprep.subr.mxu0 0.0
        %541 = vmatpush1.msra.mxu0 0.0
        %542 = vmatprep.subr.mxu0 0.0
        %543 = vmatpush1.msra.mxu0 0.0
        %544 = vmatprep.subr.mxu0 0.0
        %545 = vmatpush1.msra.mxu0 0.0
        %546 = vmatprep.subr.mxu0 0.0
        %547 = vmatpush1.msra.mxu0 0.0
        %548 = vmatprep.subr.mxu0 0.0
        %549 = vmatpush1.msra.mxu0 0.0
        %550 = vmatprep.subr.mxu0 0.0
        %551 = vmatpush1.msra.mxu0 0.0
        %552 = vmatprep.subr.mxu0 0.0
        %553 = vmatpush1.msra.mxu0 0.0
        %554 = vmatprep.subr.mxu0 0.0
        %555 = vmatpush1.msra.mxu0 0.0
        %556 = vmatprep.subr.mxu0 0.0
        %557 = vmatpush1.msra.mxu0 0.0
        %558 = vmatprep.subr.mxu0 0.0
        %559 = vmatpush1.msra.mxu0 0.0
        %560 = vmatprep.subr.mxu0 0.0
        %561 = vmatpush1.msra.mxu0 0.0
        %562 = vmatprep.subr.mxu0 0.0
        %563 = vmatpush1.msra.mxu0 0.0
        %564 = vmatprep.subr.mxu0 0.0
        %565 = vmatpush1.msra.mxu0 0.0
        %566 = vmatprep.subr.mxu0 0.0
        %567 = vmatpush1.msra.mxu0 0.0
        %568 = vmatprep.subr.mxu0 0.0
        %569 = vmatpush1.msra.mxu0 0.0
        %570 = vmatprep.subr.mxu0 0.0
        %571 = vmatpush1.msra.mxu0 0.0
        %572 = vmatprep.subr.mxu0 0.0
        %573 = vmatpush1.msra.mxu0 0.0
        %574 = vmatprep.subr.mxu0 0.0
        %575 = vmatpush1.msra.mxu0 0.0
        %576 = vmatprep.subr.mxu0 0.0
        %577 = vmatpush1.msra.mxu0 0.0
        %578 = vmatprep.subr.mxu0 0.0
        %579 = vmatpush1.msra.mxu0 0.0
        %580 = vmatprep.mubr.f32.mxu0 0.0
        %581 = vmatmul.mubr.f32.gmra.mrb[0].mxu0 %v514
        %v582 = vpop.f32.mrb[0].mxu0
        %v583 = vadd.f32 %v510, %v582
        %v584 = vpop.f32.mrb[0].mxu0
        %585 = vdwg.mxu0
        %587 = vrot.lane.b32.xlu0 %v583, 120
        %v588 = vpop.permute.xlu0 %587
        %590 = vrot.lane.b32.xlu0 %v583, 112
        %v591 = vpop.permute.xlu0 %590
        %593 = vrot.lane.b32.xlu0 %v583, 104
        %v594 = vpop.permute.xlu0 %593
        %v596 = vcombine.low %v583, %v591
        %v597 = vcombine.high %v583, %v591
        %v599 = vunpack.c.l.s4 1983009808
        %v600 = vunpack.c.0.s8 %v599
        %v601 = vlaneseq
        %v602 = vshrl.u32 %v601, 7
        %v603 = vsub.s32 %v600, %v602
        %v604 = vrot.slane %v596, %v603
        %v606 = vunpack.c.l.s4 1983009808
        %v607 = vunpack.c.0.s8 %v606
        %v608 = vlaneseq
        %v609 = vshrl.u32 %v608, 7
        %v610 = vsub.s32 %v607, %v609
        %v611 = vrot.slane %v597, %v610
        %v612 = vcombine.low %v588, %v594
        %v613 = vcombine.high %v588, %v594
        %v615 = vunpack.c.l.s4 1983009808
        %v616 = vunpack.c.0.s8 %v615
        %v617 = vlaneseq
        %v618 = vshrl.u32 %v617, 7
        %v619 = vsub.s32 %v616, %v618
        %v620 = vrot.slane %v612, %v619
        %v622 = vunpack.c.l.s4 1983009808
        %v623 = vunpack.c.0.s8 %v622
        %v624 = vlaneseq
        %v625 = vshrl.u32 %v624, 7
        %v626 = vsub.s32 %v623, %v625
        %v627 = vrot.slane %v613, %v626
        %v628 = vcombine.low %v604, %v620
        %v629 = vcombine.high %v604, %v620
        %v631 = vunpack.c.l.s4 1934713408
        %v632 = vunpack.c.0.s8 %v631
        %v633 = vlaneseq
        %v634 = vshrl.u32 %v633, 7
        %v635 = vsub.s32 %v632, %v634
        %v636 = vrot.slane %v628, %v635
        %v638 = vunpack.c.l.s4 1934713408
        %v639 = vunpack.c.0.s8 %v638
        %v640 = vlaneseq
        %v641 = vshrl.u32 %v640, 7
        %v642 = vsub.s32 %v639, %v641
        %v643 = vrot.slane %v629, %v642
        %v644 = vcombine.low %v611, %v627
        %v645 = vcombine.high %v611, %v627
        %v647 = vunpack.c.l.s4 1934713408
        %v648 = vunpack.c.0.s8 %v647
        %v649 = vlaneseq
        %v650 = vshrl.u32 %v649, 7
        %v651 = vsub.s32 %v648, %v650
        %v652 = vrot.slane %v644, %v651
        %v654 = vunpack.c.l.s4 1934713408
        %v655 = vunpack.c.0.s8 %v654
        %v656 = vlaneseq
        %v657 = vshrl.u32 %v656, 7
        %v658 = vsub.s32 %v655, %v657
        %v659 = vrot.slane %v645, %v658
        %v660 = vcombine.high %v636, 0.0
        %v661 = vcombine.high %v643, 0.0
        %v662 = vcombine.high %v652, 0.0
        %v663 = vcombine.high %v659, 0.0
        %v664 = vcombine.low %v636, %v643
        %v666 = vunpack.c.l.s4 1983009808
        %v667 = vunpack.c.0.s8 %v666
        %v668 = vlaneseq
        %v669 = vshrl.u32 %v668, 7
        %v670 = vsub.s32 %v667, %v669
        %v671 = vrot.slane %v664, %v670
        %v672 = vcombine.low %v660, %v661
        %v674 = vunpack.c.l.s4 1983009808
        %v675 = vunpack.c.0.s8 %v674
        %v676 = vlaneseq
        %v677 = vshrl.u32 %v676, 7
        %v678 = vsub.s32 %v675, %v677
        %v679 = vrot.slane %v672, %v678
        %v680 = vcombine.low %v652, %v659
        %v682 = vunpack.c.l.s4 1983009808
        %v683 = vunpack.c.0.s8 %v682
        %v684 = vlaneseq
        %v685 = vshrl.u32 %v684, 7
        %v686 = vsub.s32 %v683, %v685
        %v687 = vrot.slane %v680, %v686
        %v688 = vcombine.low %v662, %v663
        %v690 = vunpack.c.l.s4 1983009808
        %v691 = vunpack.c.0.s8 %v690
        %v692 = vlaneseq
        %v693 = vshrl.u32 %v692, 7
        %v694 = vsub.s32 %v691, %v693
        %v695 = vrot.slane %v688, %v694
        %v696 = vcombine.low %v671, %v679
        %v697 = vcombine.high %v671, %v679
        %v699 = vunpack.c.l.s4 1934713408
        %v700 = vunpack.c.0.s8 %v699
        %v701 = vlaneseq
        %v702 = vshrl.u32 %v701, 7
        %v703 = vsub.s32 %v700, %v702
        %v704 = vrot.slane %v696, %v703
        %v706 = vunpack.c.l.s4 1934713408
        %v707 = vunpack.c.0.s8 %v706
        %v708 = vlaneseq
        %v709 = vshrl.u32 %v708, 7
        %v710 = vsub.s32 %v707, %v709
        %v711 = vrot.slane %v697, %v710
        %v712 = vcombine.low %v687, %v695
        %v713 = vcombine.high %v687, %v695
        %v715 = vunpack.c.l.s4 1934713408
        %v716 = vunpack.c.0.s8 %v715
        %v717 = vlaneseq
        %v718 = vshrl.u32 %v717, 7
        %v719 = vsub.s32 %v716, %v718
        %v720 = vrot.slane %v712, %v719
        %v722 = vunpack.c.l.s4 1934713408
        %v723 = vunpack.c.0.s8 %v722
        %v724 = vlaneseq
        %v725 = vshrl.u32 %v724, 7
        %v726 = vsub.s32 %v723, %v725
        %v727 = vrot.slane %v713, %v726
        %v728 = vcombine.low %v704, %v720
        %v729 = vcombine.high %v704, %v720
        %v730 = vcombine.low %v711, %v727
        %v731 = vcombine.high %v711, %v727
        %732 = vrot.lane.b32.xlu0 %v583, 96
        %v733 = vpop.permute.xlu0 %732
        %734 = vrot.lane.b32.xlu0 %v588, 96
        %v735 = vpop.permute.xlu0 %734
        %736 = vrot.lane.b32.xlu0 %v591, 96
        %v737 = vpop.permute.xlu0 %736
        %738 = vrot.lane.b32.xlu0 %v594, 96
        %v739 = vpop.permute.xlu0 %738
        %v744 = vcombine.low %v733, %v737
        %v745 = vcombine.high %v733, %v737
        %v747 = vunpack.c.l.s4 1983009808
        %v748 = vunpack.c.0.s8 %v747
        %v749 = vlaneseq
        %v750 = vshrl.u32 %v749, 7
        %v751 = vsub.s32 %v748, %v750
        %v752 = vrot.slane %v744, %v751
        %v754 = vunpack.c.l.s4 1983009808
        %v755 = vunpack.c.0.s8 %v754
        %v756 = vlaneseq
        %v757 = vshrl.u32 %v756, 7
        %v758 = vsub.s32 %v755, %v757
        %v759 = vrot.slane %v745, %v758
        %v760 = vcombine.low %v735, %v739
        %v761 = vcombine.high %v735, %v739
        %v763 = vunpack.c.l.s4 1983009808
        %v764 = vunpack.c.0.s8 %v763
        %v765 = vlaneseq
        %v766 = vshrl.u32 %v765, 7
        %v767 = vsub.s32 %v764, %v766
        %v768 = vrot.slane %v760, %v767
        %v770 = vunpack.c.l.s4 1983009808
        %v771 = vunpack.c.0.s8 %v770
        %v772 = vlaneseq
        %v773 = vshrl.u32 %v772, 7
        %v774 = vsub.s32 %v771, %v773
        %v775 = vrot.slane %v761, %v774
        %v776 = vcombine.low %v752, %v768
        %v777 = vcombine.high %v752, %v768
        %v779 = vunpack.c.l.s4 1934713408
        %v780 = vunpack.c.0.s8 %v779
        %v781 = vlaneseq
        %v782 = vshrl.u32 %v781, 7
        %v783 = vsub.s32 %v780, %v782
        %v784 = vrot.slane %v776, %v783
        %v786 = vunpack.c.l.s4 1934713408
        %v787 = vunpack.c.0.s8 %v786
        %v788 = vlaneseq
        %v789 = vshrl.u32 %v788, 7
        %v790 = vsub.s32 %v787, %v789
        %v791 = vrot.slane %v777, %v790
        %v792 = vcombine.low %v759, %v775
        %v793 = vcombine.high %v759, %v775
        %v795 = vunpack.c.l.s4 1934713408
        %v796 = vunpack.c.0.s8 %v795
        %v797 = vlaneseq
        %v798 = vshrl.u32 %v797, 7
        %v799 = vsub.s32 %v796, %v798
        %v800 = vrot.slane %v792, %v799
        %v802 = vunpack.c.l.s4 1934713408
        %v803 = vunpack.c.0.s8 %v802
        %v804 = vlaneseq
        %v805 = vshrl.u32 %v804, 7
        %v806 = vsub.s32 %v803, %v805
        %v807 = vrot.slane %v793, %v806
        %v808 = vcombine.high %v784, 0.0
        %v809 = vcombine.high %v791, 0.0
        %v810 = vcombine.high %v800, 0.0
        %v811 = vcombine.high %v807, 0.0
        %v812 = vcombine.low %v784, %v791
        %v814 = vunpack.c.l.s4 1983009808
        %v815 = vunpack.c.0.s8 %v814
        %v816 = vlaneseq
        %v817 = vshrl.u32 %v816, 7
        %v818 = vsub.s32 %v815, %v817
        %v819 = vrot.slane %v812, %v818
        %v820 = vcombine.low %v808, %v809
        %v822 = vunpack.c.l.s4 1983009808
        %v823 = vunpack.c.0.s8 %v822
        %v824 = vlaneseq
        %v825 = vshrl.u32 %v824, 7
        %v826 = vsub.s32 %v823, %v825
        %v827 = vrot.slane %v820, %v826
        %v828 = vcombine.low %v800, %v807
        %v830 = vunpack.c.l.s4 1983009808
        %v831 = vunpack.c.0.s8 %v830
        %v832 = vlaneseq
        %v833 = vshrl.u32 %v832, 7
        %v834 = vsub.s32 %v831, %v833
        %v835 = vrot.slane %v828, %v834
        %v836 = vcombine.low %v810, %v811
        %v838 = vunpack.c.l.s4 1983009808
        %v839 = vunpack.c.0.s8 %v838
        %v840 = vlaneseq
        %v841 = vshrl.u32 %v840, 7
        %v842 = vsub.s32 %v839, %v841
        %v843 = vrot.slane %v836, %v842
        %v844 = vcombine.low %v819, %v827
        %v845 = vcombine.high %v819, %v827
        %v847 = vunpack.c.l.s4 1934713408
        %v848 = vunpack.c.0.s8 %v847
        %v849 = vlaneseq
        %v850 = vshrl.u32 %v849, 7
        %v851 = vsub.s32 %v848, %v850
        %v852 = vrot.slane %v844, %v851
        %v854 = vunpack.c.l.s4 1934713408
        %v855 = vunpack.c.0.s8 %v854
        %v856 = vlaneseq
        %v857 = vshrl.u32 %v856, 7
        %v858 = vsub.s32 %v855, %v857
        %v859 = vrot.slane %v845, %v858
        %v860 = vcombine.low %v835, %v843
        %v861 = vcombine.high %v835, %v843
        %v863 = vunpack.c.l.s4 1934713408
        %v864 = vunpack.c.0.s8 %v863
        %v865 = vlaneseq
        %v866 = vshrl.u32 %v865, 7
        %v867 = vsub.s32 %v864, %v866
        %v868 = vrot.slane %v860, %v867
        %v870 = vunpack.c.l.s4 1934713408
        %v871 = vunpack.c.0.s8 %v870
        %v872 = vlaneseq
        %v873 = vshrl.u32 %v872, 7
        %v874 = vsub.s32 %v871, %v873
        %v875 = vrot.slane %v861, %v874
        %v876 = vcombine.low %v852, %v868
        %v877 = vcombine.high %v852, %v868
        %v878 = vcombine.low %v859, %v875
        %v879 = vcombine.high %v859, %v875
        %880 = vrot.lane.b32.xlu0 %v583, 64
        %v881 = vpop.permute.xlu0 %880
        %882 = vrot.lane.b32.xlu0 %v588, 64
        %v883 = vpop.permute.xlu0 %882
        %884 = vrot.lane.b32.xlu0 %v591, 64
        %v885 = vpop.permute.xlu0 %884
        %886 = vrot.lane.b32.xlu0 %v594, 64
        %v887 = vpop.permute.xlu0 %886
        %v892 = vcombine.low %v881, %v885
        %v893 = vcombine.high %v881, %v885
        %v895 = vunpack.c.l.s4 1983009808
        %v896 = vunpack.c.0.s8 %v895
        %v897 = vlaneseq
        %v898 = vshrl.u32 %v897, 7
        %v899 = vsub.s32 %v896, %v898
        %v900 = vrot.slane %v892, %v899
        %v902 = vunpack.c.l.s4 1983009808
        %v903 = vunpack.c.0.s8 %v902
        %v904 = vlaneseq
        %v905 = vshrl.u32 %v904, 7
        %v906 = vsub.s32 %v903, %v905
        %v907 = vrot.slane %v893, %v906
        %v908 = vcombine.low %v883, %v887
        %v909 = vcombine.high %v883, %v887
        %v911 = vunpack.c.l.s4 1983009808
        %v912 = vunpack.c.0.s8 %v911
        %v913 = vlaneseq
        %v914 = vshrl.u32 %v913, 7
        %v915 = vsub.s32 %v912, %v914
        %v916 = vrot.slane %v908, %v915
        %v918 = vunpack.c.l.s4 1983009808
        %v919 = vunpack.c.0.s8 %v918
        %v920 = vlaneseq
        %v921 = vshrl.u32 %v920, 7
        %v922 = vsub.s32 %v919, %v921
        %v923 = vrot.slane %v909, %v922
        %v924 = vcombine.low %v900, %v916
        %v925 = vcombine.high %v900, %v916
        %v927 = vunpack.c.l.s4 1934713408
        %v928 = vunpack.c.0.s8 %v927
        %v929 = vlaneseq
        %v930 = vshrl.u32 %v929, 7
        %v931 = vsub.s32 %v928, %v930
        %v932 = vrot.slane %v924, %v931
        %v934 = vunpack.c.l.s4 1934713408
        %v935 = vunpack.c.0.s8 %v934
        %v936 = vlaneseq
        %v937 = vshrl.u32 %v936, 7
        %v938 = vsub.s32 %v935, %v937
        %v939 = vrot.slane %v925, %v938
        %v940 = vcombine.low %v907, %v923
        %v941 = vcombine.high %v907, %v923
        %v943 = vunpack.c.l.s4 1934713408
        %v944 = vunpack.c.0.s8 %v943
        %v945 = vlaneseq
        %v946 = vshrl.u32 %v945, 7
        %v947 = vsub.s32 %v944, %v946
        %v948 = vrot.slane %v940, %v947
        %v950 = vunpack.c.l.s4 1934713408
        %v951 = vunpack.c.0.s8 %v950
        %v952 = vlaneseq
        %v953 = vshrl.u32 %v952, 7
        %v954 = vsub.s32 %v951, %v953
        %v955 = vrot.slane %v941, %v954
        %v956 = vcombine.high %v932, 0.0
        %v957 = vcombine.high %v939, 0.0
        %v958 = vcombine.high %v948, 0.0
        %v959 = vcombine.high %v955, 0.0
        %v960 = vcombine.low %v932, %v939
        %v962 = vunpack.c.l.s4 1983009808
        %v963 = vunpack.c.0.s8 %v962
        %v964 = vlaneseq
        %v965 = vshrl.u32 %v964, 7
        %v966 = vsub.s32 %v963, %v965
        %v967 = vrot.slane %v960, %v966
        %v968 = vcombine.low %v956, %v957
        %v970 = vunpack.c.l.s4 1983009808
        %v971 = vunpack.c.0.s8 %v970
        %v972 = vlaneseq
        %v973 = vshrl.u32 %v972, 7
        %v974 = vsub.s32 %v971, %v973
        %v975 = vrot.slane %v968, %v974
        %v976 = vcombine.low %v948, %v955
        %v978 = vunpack.c.l.s4 1983009808
        %v979 = vunpack.c.0.s8 %v978
        %v980 = vlaneseq
        %v981 = vshrl.u32 %v980, 7
        %v982 = vsub.s32 %v979, %v981
        %v983 = vrot.slane %v976, %v982
        %v984 = vcombine.low %v958, %v959
        %v986 = vunpack.c.l.s4 1983009808
        %v987 = vunpack.c.0.s8 %v986
        %v988 = vlaneseq
        %v989 = vshrl.u32 %v988, 7
        %v990 = vsub.s32 %v987, %v989
        %v991 = vrot.slane %v984, %v990
        %v992 = vcombine.low %v967, %v975
        %v993 = vcombine.high %v967, %v975
        %v995 = vunpack.c.l.s4 1934713408
        %v996 = vunpack.c.0.s8 %v995
        %v997 = vlaneseq
        %v998 = vshrl.u32 %v997, 7
        %v999 = vsub.s32 %v996, %v998
        %v1000 = vrot.slane %v992, %v999
        %v1002 = vunpack.c.l.s4 1934713408
        %v1003 = vunpack.c.0.s8 %v1002
        %v1004 = vlaneseq
        %v1005 = vshrl.u32 %v1004, 7
        %v1006 = vsub.s32 %v1003, %v1005
        %v1007 = vrot.slane %v993, %v1006
        %v1008 = vcombine.low %v983, %v991
        %v1009 = vcombine.high %v983, %v991
        %v1011 = vunpack.c.l.s4 1934713408
        %v1012 = vunpack.c.0.s8 %v1011
        %v1013 = vlaneseq
        %v1014 = vshrl.u32 %v1013, 7
        %v1015 = vsub.s32 %v1012, %v1014
        %v1016 = vrot.slane %v1008, %v1015
        %v1018 = vunpack.c.l.s4 1934713408
        %v1019 = vunpack.c.0.s8 %v1018
        %v1020 = vlaneseq
        %v1021 = vshrl.u32 %v1020, 7
        %v1022 = vsub.s32 %v1019, %v1021
        %v1023 = vrot.slane %v1009, %v1022
        %v1024 = vcombine.low %v1000, %v1016
        %v1025 = vcombine.high %v1000, %v1016
        %v1026 = vcombine.low %v1007, %v1023
        %v1027 = vcombine.high %v1007, %v1023
        %vm1028 = vcmask 64512
        %v1030 = vsel %vm1028, %v728, 0
        %v1033 = vsel %vm1028, %v876, 0
        %1035 = vmatprep.subr.mxu0 0.0
        %1036 = vmatpush1.xpose.msra.mxu0 %v1033
        %1037 = vmatprep.subr.mxu0 0.0
        %1038 = vmatpush1.xpose.msra.mxu0 0.0
        %1039 = vmatprep.subr.mxu0 0.0
        %1040 = vmatpush1.xpose.msra.mxu0 0.0
        %1041 = vmatprep.subr.mxu0 0.0
        %1042 = vmatpush1.xpose.msra.mxu0 0.0
        %1043 = vmatprep.subr.mxu0 0.0
        %1044 = vmatpush1.xpose.msra.mxu0 0.0
        %1045 = vmatprep.subr.mxu0 0.0
        %1046 = vmatpush1.xpose.msra.mxu0 0.0
        %1047 = vmatprep.subr.mxu0 0.0
        %1048 = vmatpush1.xpose.msra.mxu0 0.0
        %1049 = vmatprep.subr.mxu0 0.0
        %1050 = vmatpush1.xpose.msra.mxu0 0.0
        %1051 = vmatprep.subr.mxu0 0.0
        %1052 = vmatpush1.xpose.msra.mxu0 0.0
        %1053 = vmatprep.subr.mxu0 0.0
        %1054 = vmatpush1.xpose.msra.mxu0 0.0
        %1055 = vmatprep.subr.mxu0 0.0
        %1056 = vmatpush1.xpose.msra.mxu0 0.0
        %1057 = vmatprep.subr.mxu0 0.0
        %1058 = vmatpush1.xpose.msra.mxu0 0.0
        %1059 = vmatprep.subr.mxu0 0.0
        %1060 = vmatpush1.xpose.msra.mxu0 0.0
        %1061 = vmatprep.subr.mxu0 0.0
        %1062 = vmatpush1.xpose.msra.mxu0 0.0
        %1063 = vmatprep.subr.mxu0 0.0
        %1064 = vmatpush1.xpose.msra.mxu0 0.0
        %1065 = vmatprep.subr.mxu0 0.0
        %1066 = vmatpush1.xpose.msra.mxu0 0.0
        %1067 = vmatprep.subr.mxu0 0.0
        %1068 = vmatpush1.xpose.msra.mxu0 0.0
        %1069 = vmatprep.subr.mxu0 0.0
        %1070 = vmatpush1.xpose.msra.mxu0 0.0
        %1071 = vmatprep.subr.mxu0 0.0
        %1072 = vmatpush1.xpose.msra.mxu0 0.0
        %1073 = vmatprep.subr.mxu0 0.0
        %1074 = vmatpush1.xpose.msra.mxu0 0.0
        %1075 = vmatprep.subr.mxu0 0.0
        %1076 = vmatpush1.xpose.msra.mxu0 0.0
        %1077 = vmatprep.subr.mxu0 0.0
        %1078 = vmatpush1.xpose.msra.mxu0 0.0
        %1079 = vmatprep.subr.mxu0 0.0
        %1080 = vmatpush1.xpose.msra.mxu0 0.0
        %1081 = vmatprep.subr.mxu0 0.0
        %1082 = vmatpush1.xpose.msra.mxu0 0.0
        %1083 = vmatprep.subr.mxu0 0.0
        %1084 = vmatpush1.xpose.msra.mxu0 0.0
        %1085 = vmatprep.subr.mxu0 0.0
        %1086 = vmatpush1.xpose.msra.mxu0 0.0
        %1087 = vmatprep.subr.mxu0 0.0
        %1088 = vmatpush1.xpose.msra.mxu0 0.0
        %1089 = vmatprep.subr.mxu0 0.0
        %1090 = vmatpush1.xpose.msra.mxu0 0.0
        %1091 = vmatprep.subr.mxu0 0.0
        %1092 = vmatpush1.xpose.msra.mxu0 0.0
        %1093 = vmatprep.subr.mxu0 0.0
        %1094 = vmatpush1.xpose.msra.mxu0 0.0
        %1095 = vmatprep.subr.mxu0 0.0
        %1096 = vmatpush1.xpose.msra.mxu0 0.0
        %1097 = vmatprep.subr.mxu0 0.0
        %1098 = vmatpush1.xpose.msra.mxu0 0.0
        %1099 = vmatprep.mubr.f32.mxu0 0.0
        %1100 = vmatmul.mubr.f32.gmra.mrb[0].mxu0 %v1030
        %v1101 = vpop.f32.mrb[0].mxu0
        %v1102 = vadd.f32 0.0, %v1101
        %v1103 = vpop.f32.mrb[0].mxu0
        %1104 = vdwg.mxu0
        %v1106 = vsel %vm1028, %v729, 0
        %v1109 = vsel %vm1028, %v877, 0
        %1111 = vmatprep.subr.mxu0 0.0
        %1112 = vmatpush1.xpose.msra.mxu0 %v1109
        %1113 = vmatprep.subr.mxu0 0.0
        %1114 = vmatpush1.xpose.msra.mxu0 0.0
        %1115 = vmatprep.subr.mxu0 0.0
        %1116 = vmatpush1.xpose.msra.mxu0 0.0
        %1117 = vmatprep.subr.mxu0 0.0
        %1118 = vmatpush1.xpose.msra.mxu0 0.0
        %1119 = vmatprep.subr.mxu0 0.0
        %1120 = vmatpush1.xpose.msra.mxu0 0.0
        %1121 = vmatprep.subr.mxu0 0.0
        %1122 = vmatpush1.xpose.msra.mxu0 0.0
        %1123 = vmatprep.subr.mxu0 0.0
        %1124 = vmatpush1.xpose.msra.mxu0 0.0
        %1125 = vmatprep.subr.mxu0 0.0
        %1126 = vmatpush1.xpose.msra.mxu0 0.0
        %1127 = vmatprep.subr.mxu0 0.0
        %1128 = vmatpush1.xpose.msra.mxu0 0.0
        %1129 = vmatprep.subr.mxu0 0.0
        %1130 = vmatpush1.xpose.msra.mxu0 0.0
        %1131 = vmatprep.subr.mxu0 0.0
        %1132 = vmatpush1.xpose.msra.mxu0 0.0
        %1133 = vmatprep.subr.mxu0 0.0
        %1134 = vmatpush1.xpose.msra.mxu0 0.0
        %1135 = vmatprep.subr.mxu0 0.0
        %1136 = vmatpush1.xpose.msra.mxu0 0.0
        %1137 = vmatprep.subr.mxu0 0.0
        %1138 = vmatpush1.xpose.msra.mxu0 0.0
        %1139 = vmatprep.subr.mxu0 0.0
        %1140 = vmatpush1.xpose.msra.mxu0 0.0
        %1141 = vmatprep.subr.mxu0 0.0
        %1142 = vmatpush1.xpose.msra.mxu0 0.0
        %1143 = vmatprep.subr.mxu0 0.0
        %1144 = vmatpush1.xpose.msra.mxu0 0.0
        %1145 = vmatprep.subr.mxu0 0.0
        %1146 = vmatpush1.xpose.msra.mxu0 0.0
        %1147 = vmatprep.subr.mxu0 0.0
        %1148 = vmatpush1.xpose.msra.mxu0 0.0
        %1149 = vmatprep.subr.mxu0 0.0
        %1150 = vmatpush1.xpose.msra.mxu0 0.0
        %1151 = vmatprep.subr.mxu0 0.0
        %1152 = vmatpush1.xpose.msra.mxu0 0.0
        %1153 = vmatprep.subr.mxu0 0.0
        %1154 = vmatpush1.xpose.msra.mxu0 0.0
        %1155 = vmatprep.subr.mxu0 0.0
        %1156 = vmatpush1.xpose.msra.mxu0 0.0
        %1157 = vmatprep.subr.mxu0 0.0
        %1158 = vmatpush1.xpose.msra.mxu0 0.0
        %1159 = vmatprep.subr.mxu0 0.0
        %1160 = vmatpush1.xpose.msra.mxu0 0.0
        %1161 = vmatprep.subr.mxu0 0.0
        %1162 = vmatpush1.xpose.msra.mxu0 0.0
        %1163 = vmatprep.subr.mxu0 0.0
        %1164 = vmatpush1.xpose.msra.mxu0 0.0
        %1165 = vmatprep.subr.mxu0 0.0
        %1166 = vmatpush1.xpose.msra.mxu0 0.0
        %1167 = vmatprep.subr.mxu0 0.0
        %1168 = vmatpush1.xpose.msra.mxu0 0.0
        %1169 = vmatprep.subr.mxu0 0.0
        %1170 = vmatpush1.xpose.msra.mxu0 0.0
        %1171 = vmatprep.subr.mxu0 0.0
        %1172 = vmatpush1.xpose.msra.mxu0 0.0
        %1173 = vmatprep.subr.mxu0 0.0
        %1174 = vmatpush1.xpose.msra.mxu0 0.0
        %1175 = vmatprep.mubr.f32.mxu0 0.0
        %1176 = vmatmul.mubr.f32.gmra.mrb[0].mxu0 %v1106
        %v1177 = vpop.f32.mrb[0].mxu0
        %v1178 = vadd.f32 0.0, %v1177
        %v1179 = vpop.f32.mrb[0].mxu0
        %1180 = vdwg.mxu0
        %v1182 = vsel %vm1028, %v730, 0
        %v1185 = vsel %vm1028, %v878, 0
        %1187 = vmatprep.subr.mxu0 0.0
        %1188 = vmatpush1.xpose.msra.mxu0 %v1185
        %1189 = vmatprep.subr.mxu0 0.0
        %1190 = vmatpush1.xpose.msra.mxu0 0.0
        %1191 = vmatprep.subr.mxu0 0.0
        %1192 = vmatpush1.xpose.msra.mxu0 0.0
        %1193 = vmatprep.subr.mxu0 0.0
        %1194 = vmatpush1.xpose.msra.mxu0 0.0
        %1195 = vmatprep.subr.mxu0 0.0
        %1196 = vmatpush1.xpose.msra.mxu0 0.0
        %1197 = vmatprep.subr.mxu0 0.0
        %1198 = vmatpush1.xpose.msra.mxu0 0.0
        %1199 = vmatprep.subr.mxu0 0.0
        %1200 = vmatpush1.xpose.msra.mxu0 0.0
        %1201 = vmatprep.subr.mxu0 0.0
        %1202 = vmatpush1.xpose.msra.mxu0 0.0
        %1203 = vmatprep.subr.mxu0 0.0
        %1204 = vmatpush1.xpose.msra.mxu0 0.0
        %1205 = vmatprep.subr.mxu0 0.0
        %1206 = vmatpush1.xpose.msra.mxu0 0.0
        %1207 = vmatprep.subr.mxu0 0.0
        %1208 = vmatpush1.xpose.msra.mxu0 0.0
        %1209 = vmatprep.subr.mxu0 0.0
        %1210 = vmatpush1.xpose.msra.mxu0 0.0
        %1211 = vmatprep.subr.mxu0 0.0
        %1212 = vmatpush1.xpose.msra.mxu0 0.0
        %1213 = vmatprep.subr.mxu0 0.0
        %1214 = vmatpush1.xpose.msra.mxu0 0.0
        %1215 = vmatprep.subr.mxu0 0.0
        %1216 = vmatpush1.xpose.msra.mxu0 0.0
        %1217 = vmatprep.subr.mxu0 0.0
        %1218 = vmatpush1.xpose.msra.mxu0 0.0
        %1219 = vmatprep.subr.mxu0 0.0
        %1220 = vmatpush1.xpose.msra.mxu0 0.0
        %1221 = vmatprep.subr.mxu0 0.0
        %1222 = vmatpush1.xpose.msra.mxu0 0.0
        %1223 = vmatprep.subr.mxu0 0.0
        %1224 = vmatpush1.xpose.msra.mxu0 0.0
        %1225 = vmatprep.subr.mxu0 0.0
        %1226 = vmatpush1.xpose.msra.mxu0 0.0
        %1227 = vmatprep.subr.mxu0 0.0
        %1228 = vmatpush1.xpose.msra.mxu0 0.0
        %1229 = vmatprep.subr.mxu0 0.0
        %1230 = vmatpush1.xpose.msra.mxu0 0.0
        %1231 = vmatprep.subr.mxu0 0.0
        %1232 = vmatpush1.xpose.msra.mxu0 0.0
        %1233 = vmatprep.subr.mxu0 0.0
        %1234 = vmatpush1.xpose.msra.mxu0 0.0
        %1235 = vmatprep.subr.mxu0 0.0
        %1236 = vmatpush1.xpose.msra.mxu0 0.0
        %1237 = vmatprep.subr.mxu0 0.0
        %1238 = vmatpush1.xpose.msra.mxu0 0.0
        %1239 = vmatprep.subr.mxu0 0.0
        %1240 = vmatpush1.xpose.msra.mxu0 0.0
        %1241 = vmatprep.subr.mxu0 0.0
        %1242 = vmatpush1.xpose.msra.mxu0 0.0
        %1243 = vmatprep.subr.mxu0 0.0
        %1244 = vmatpush1.xpose.msra.mxu0 0.0
        %1245 = vmatprep.subr.mxu0 0.0
        %1246 = vmatpush1.xpose.msra.mxu0 0.0
        %1247 = vmatprep.subr.mxu0 0.0
        %1248 = vmatpush1.xpose.msra.mxu0 0.0
        %1249 = vmatprep.subr.mxu0 0.0
        %1250 = vmatpush1.xpose.msra.mxu0 0.0
        %1251 = vmatprep.mubr.f32.mxu0 0.0
        %1252 = vmatmul.mubr.f32.gmra.mrb[0].mxu0 %v1182
        %v1253 = vpop.f32.mrb[0].mxu0
        %v1254 = vadd.f32 0.0, %v1253
        %v1255 = vpop.f32.mrb[0].mxu0
        %1256 = vdwg.mxu0
        %v1258 = vsel %vm1028, %v731, 0
        %v1261 = vsel %vm1028, %v879, 0
        %1263 = vmatprep.subr.mxu0 0.0
        %1264 = vmatpush1.xpose.msra.mxu0 %v1261
        %1265 = vmatprep.subr.mxu0 0.0
        %1266 = vmatpush1.xpose.msra.mxu0 0.0
        %1267 = vmatprep.subr.mxu0 0.0
        %1268 = vmatpush1.xpose.msra.mxu0 0.0
        %1269 = vmatprep.subr.mxu0 0.0
        %1270 = vmatpush1.xpose.msra.mxu0 0.0
        %1271 = vmatprep.subr.mxu0 0.0
        %1272 = vmatpush1.xpose.msra.mxu0 0.0
        %1273 = vmatprep.subr.mxu0 0.0
        %1274 = vmatpush1.xpose.msra.mxu0 0.0
        %1275 = vmatprep.subr.mxu0 0.0
        %1276 = vmatpush1.xpose.msra.mxu0 0.0
        %1277 = vmatprep.subr.mxu0 0.0
        %1278 = vmatpush1.xpose.msra.mxu0 0.0
        %1279 = vmatprep.subr.mxu0 0.0
        %1280 = vmatpush1.xpose.msra.mxu0 0.0
        %1281 = vmatprep.subr.mxu0 0.0
        %1282 = vmatpush1.xpose.msra.mxu0 0.0
        %1283 = vmatprep.subr.mxu0 0.0
        %1284 = vmatpush1.xpose.msra.mxu0 0.0
        %1285 = vmatprep.subr.mxu0 0.0
        %1286 = vmatpush1.xpose.msra.mxu0 0.0
        %1287 = vmatprep.subr.mxu0 0.0
        %1288 = vmatpush1.xpose.msra.mxu0 0.0
        %1289 = vmatprep.subr.mxu0 0.0
        %1290 = vmatpush1.xpose.msra.mxu0 0.0
        %1291 = vmatprep.subr.mxu0 0.0
        %1292 = vmatpush1.xpose.msra.mxu0 0.0
        %1293 = vmatprep.subr.mxu0 0.0
        %1294 = vmatpush1.xpose.msra.mxu0 0.0
        %1295 = vmatprep.subr.mxu0 0.0
        %1296 = vmatpush1.xpose.msra.mxu0 0.0
        %1297 = vmatprep.subr.mxu0 0.0
        %1298 = vmatpush1.xpose.msra.mxu0 0.0
        %1299 = vmatprep.subr.mxu0 0.0
        %1300 = vmatpush1.xpose.msra.mxu0 0.0
        %1301 = vmatprep.subr.mxu0 0.0
        %1302 = vmatpush1.xpose.msra.mxu0 0.0
        %1303 = vmatprep.subr.mxu0 0.0
        %1304 = vmatpush1.xpose.msra.mxu0 0.0
        %1305 = vmatprep.subr.mxu0 0.0
        %1306 = vmatpush1.xpose.msra.mxu0 0.0
        %1307 = vmatprep.subr.mxu0 0.0
        %1308 = vmatpush1.xpose.msra.mxu0 0.0
        %1309 = vmatprep.subr.mxu0 0.0
        %1310 = vmatpush1.xpose.msra.mxu0 0.0
        %1311 = vmatprep.subr.mxu0 0.0
        %1312 = vmatpush1.xpose.msra.mxu0 0.0
        %1313 = vmatprep.subr.mxu0 0.0
        %1314 = vmatpush1.xpose.msra.mxu0 0.0
        %1315 = vmatprep.subr.mxu0 0.0
        %1316 = vmatpush1.xpose.msra.mxu0 0.0
        %1317 = vmatprep.subr.mxu0 0.0
        %1318 = vmatpush1.xpose.msra.mxu0 0.0
        %1319 = vmatprep.subr.mxu0 0.0
        %1320 = vmatpush1.xpose.msra.mxu0 0.0
        %1321 = vmatprep.subr.mxu0 0.0
        %1322 = vmatpush1.xpose.msra.mxu0 0.0
        %1323 = vmatprep.subr.mxu0 0.0
        %1324 = vmatpush1.xpose.msra.mxu0 0.0
        %1325 = vmatprep.subr.mxu0 0.0
        %1326 = vmatpush1.xpose.msra.mxu0 0.0
        %1327 = vmatprep.mubr.f32.mxu0 0.0
        %1328 = vmatmul.mubr.f32.gmra.mrb[0].mxu0 %v1258
        %v1329 = vpop.f32.mrb[0].mxu0
        %v1330 = vadd.f32 0.0, %v1329
        %v1331 = vpop.f32.mrb[0].mxu0
        %1332 = vdwg.mxu0
        %v1333 = vsel %vm1028, %v1102, -inf
        %1334 = vmax.xlane.f32.xlu0 %v1333
        %v1335 = vpop.xlane.xlu0 %1334
        %v1336 = vsel %vm1028, %v1178, -inf
        %1337 = vmax.xlane.f32.xlu0 %v1336
        %v1338 = vpop.xlane.xlu0 %1337
        %v1339 = vsel %vm1028, %v1254, -inf
        %1340 = vmax.xlane.f32.xlu0 %v1339
        %v1341 = vpop.xlane.xlu0 %1340
        %v1342 = vsel %vm1028, %v1330, -inf
        %1343 = vmax.xlane.f32.xlu0 %v1342
        %v1344 = vpop.xlane.xlu0 %1343
        %v1345 = vsub.f32 %v1102, %v1335
        %v1346 = vsub.f32 %v1178, %v1338
        %v1347 = vsub.f32 %v1254, %v1341
        %v1348 = vsub.f32 %v1330, %v1344
        %v1349 = vmul.f32 %v1345, 1.442695
        %v1350 = vpow.pop %v1349
        %v1351 = vmul.f32 %v1346, 1.442695
        %v1352 = vpow.pop %v1351
        %v1353 = vmul.f32 %v1347, 1.442695
        %v1354 = vpow.pop %v1353
        %v1355 = vmul.f32 %v1348, 1.442695
        %v1356 = vpow.pop %v1355
        %v1357 = vsel %vm1028, %v1350, 0.0
        %1358 = vadd.xlane.f32.xlu0 %v1357
        %v1359 = vpop.xlane.xlu0 %1358
        %v1360 = vsel %vm1028, %v1352, 0.0
        %1361 = vadd.xlane.f32.xlu0 %v1360
        %v1362 = vpop.xlane.xlu0 %1361
        %v1363 = vsel %vm1028, %v1354, 0.0
        %1364 = vadd.xlane.f32.xlu0 %v1363
        %v1365 = vpop.xlane.xlu0 %1364
        %v1366 = vsel %vm1028, %v1356, 0.0
        %1367 = vadd.xlane.f32.xlu0 %v1366
        %v1368 = vpop.xlane.xlu0 %1367
        %v1369 = vrcp.pop %v1359
        %v1370 = vrcp.pop %v1362
        %v1371 = vrcp.pop %v1365
        %v1372 = vrcp.pop %v1368
        %v1373 = vmul.f32 %v1350, %v1369
        %v1374 = vmul.f32 %v1352, %v1370
        %v1375 = vmul.f32 %v1354, %v1371
        %v1376 = vmul.f32 %v1356, %v1372
        %v1378 = vsel %vm1028, %v1373, 0
        %1380 = vmatprep.subr.mxu0 0.0
        %1381 = vmatpush1.msra.mxu0 %v1024
        %1382 = vmatprep.subr.mxu0 0.0
        %1383 = vmatpush1.msra.mxu0 0.0
        %1384 = vmatprep.subr.mxu0 0.0
        %1385 = vmatpush1.msra.mxu0 0.0
        %1386 = vmatprep.subr.mxu0 0.0
        %1387 = vmatpush1.msra.mxu0 0.0
        %1388 = vmatprep.subr.mxu0 0.0
        %1389 = vmatpush1.msra.mxu0 0.0
        %1390 = vmatprep.subr.mxu0 0.0
        %1391 = vmatpush1.msra.mxu0 0.0
        %1392 = vmatprep.subr.mxu0 0.0
        %1393 = vmatpush1.msra.mxu0 0.0
        %1394 = vmatprep.subr.mxu0 0.0
        %1395 = vmatpush1.msra.mxu0 0.0
        %1396 = vmatprep.subr.mxu0 0.0
        %1397 = vmatpush1.msra.mxu0 0.0
        %1398 = vmatprep.subr.mxu0 0.0
        %1399 = vmatpush1.msra.mxu0 0.0
        %1400 = vmatprep.subr.mxu0 0.0
        %1401 = vmatpush1.msra.mxu0 0.0
        %1402 = vmatprep.subr.mxu0 0.0
        %1403 = vmatpush1.msra.mxu0 0.0
        %1404 = vmatprep.subr.mxu0 0.0
        %1405 = vmatpush1.msra.mxu0 0.0
        %1406 = vmatprep.subr.mxu0 0.0
        %1407 = vmatpush1.msra.mxu0 0.0
        %1408 = vmatprep.subr.mxu0 0.0
        %1409 = vmatpush1.msra.mxu0 0.0
        %1410 = vmatprep.subr.mxu0 0.0
        %1411 = vmatpush1.msra.mxu0 0.0
        %1412 = vmatprep.subr.mxu0 0.0
        %1413 = vmatpush1.msra.mxu0 0.0
        %1414 = vmatprep.subr.mxu0 0.0
        %1415 = vmatpush1.msra.mxu0 0.0
        %1416 = vmatprep.subr.mxu0 0.0
        %1417 = vmatpush1.msra.mxu0 0.0
        %1418 = vmatprep.subr.mxu0 0.0
        %1419 = vmatpush1.msra.mxu0 0.0
        %1420 = vmatprep.subr.mxu0 0.0
        %1421 = vmatpush1.msra.mxu0 0.0
        %1422 = vmatprep.subr.mxu0 0.0
        %1423 = vmatpush1.msra.mxu0 0.0
        %1424 = vmatprep.subr.mxu0 0.0
        %1425 = vmatpush1.msra.mxu0 0.0
        %1426 = vmatprep.subr.mxu0 0.0
        %1427 = vmatpush1.msra.mxu0 0.0
        %1428 = vmatprep.subr.mxu0 0.0
        %1429 = vmatpush1.msra.mxu0 0.0
        %1430 = vmatprep.subr.mxu0 0.0
        %1431 = vmatpush1.msra.mxu0 0.0
        %1432 = vmatprep.subr.mxu0 0.0
        %1433 = vmatpush1.msra.mxu0 0.0
        %1434 = vmatprep.subr.mxu0 0.0
        %1435 = vmatpush1.msra.mxu0 0.0
        %1436 = vmatprep.subr.mxu0 0.0
        %1437 = vmatpush1.msra.mxu0 0.0
        %1438 = vmatprep.subr.mxu0 0.0
        %1439 = vmatpush1.msra.mxu0 0.0
        %1440 = vmatprep.subr.mxu0 0.0
        %1441 = vmatpush1.msra.mxu0 0.0
        %1442 = vmatprep.subr.mxu0 0.0
        %1443 = vmatpush1.msra.mxu0 0.0
        %1444 = vmatprep.mubr.f32.mxu0 0.0
        %1445 = vmatmul.mubr.f32.gmra.mrb[0].mxu0 %v1378
        %v1446 = vpop.f32.mrb[0].mxu0
        %v1447 = vadd.f32 0.0, %v1446
        %v1448 = vpop.f32.mrb[0].mxu0
        %1449 = vdwg.mxu0
        %v1451 = vsel %vm1028, %v1374, 0
        %1453 = vmatprep.subr.mxu0 0.0
        %1454 = vmatpush1.msra.mxu0 %v1025
        %1455 = vmatprep.subr.mxu0 0.0
        %1456 = vmatpush1.msra.mxu0 0.0
        %1457 = vmatprep.subr.mxu0 0.0
        %1458 = vmatpush1.msra.mxu0 0.0
        %1459 = vmatprep.subr.mxu0 0.0
        %1460 = vmatpush1.msra.mxu0 0.0
        %1461 = vmatprep.subr.mxu0 0.0
        %1462 = vmatpush1.msra.mxu0 0.0
        %1463 = vmatprep.subr.mxu0 0.0
        %1464 = vmatpush1.msra.mxu0 0.0
        %1465 = vmatprep.subr.mxu0 0.0
        %1466 = vmatpush1.msra.mxu0 0.0
        %1467 = vmatprep.subr.mxu0 0.0
        %1468 = vmatpush1.msra.mxu0 0.0
        %1469 = vmatprep.subr.mxu0 0.0
        %1470 = vmatpush1.msra.mxu0 0.0
        %1471 = vmatprep.subr.mxu0 0.0
        %1472 = vmatpush1.msra.mxu0 0.0
        %1473 = vmatprep.subr.mxu0 0.0
        %1474 = vmatpush1.msra.mxu0 0.0
        %1475 = vmatprep.subr.mxu0 0.0
        %1476 = vmatpush1.msra.mxu0 0.0
        %1477 = vmatprep.subr.mxu0 0.0
        %1478 = vmatpush1.msra.mxu0 0.0
        %1479 = vmatprep.subr.mxu0 0.0
        %1480 = vmatpush1.msra.mxu0 0.0
        %1481 = vmatprep.subr.mxu0 0.0
        %1482 = vmatpush1.msra.mxu0 0.0
        %1483 = vmatprep.subr.mxu0 0.0
        %1484 = vmatpush1.msra.mxu0 0.0
        %1485 = vmatprep.subr.mxu0 0.0
        %1486 = vmatpush1.msra.mxu0 0.0
        %1487 = vmatprep.subr.mxu0 0.0
        %1488 = vmatpush1.msra.mxu0 0.0
        %1489 = vmatprep.subr.mxu0 0.0
        %1490 = vmatpush1.msra.mxu0 0.0
        %1491 = vmatprep.subr.mxu0 0.0
        %1492 = vmatpush1.msra.mxu0 0.0
        %1493 = vmatprep.subr.mxu0 0.0
        %1494 = vmatpush1.msra.mxu0 0.0
        %1495 = vmatprep.subr.mxu0 0.0
        %1496 = vmatpush1.msra.mxu0 0.0
        %1497 = vmatprep.subr.mxu0 0.0
        %1498 = vmatpush1.msra.mxu0 0.0
        %1499 = vmatprep.subr.mxu0 0.0
        %1500 = vmatpush1.msra.mxu0 0.0
        %1501 = vmatprep.subr.mxu0 0.0
        %1502 = vmatpush1.msra.mxu0 0.0
        %1503 = vmatprep.subr.mxu0 0.0
        %1504 = vmatpush1.msra.mxu0 0.0
        %1505 = vmatprep.subr.mxu0 0.0
        %1506 = vmatpush1.msra.mxu0 0.0
        %1507 = vmatprep.subr.mxu0 0.0
        %1508 = vmatpush1.msra.mxu0 0.0
        %1509 = vmatprep.subr.mxu0 0.0
        %1510 = vmatpush1.msra.mxu0 0.0
        %1511 = vmatprep.subr.mxu0 0.0
        %1512 = vmatpush1.msra.mxu0 0.0
        %1513 = vmatprep.subr.mxu0 0.0
        %1514 = vmatpush1.msra.mxu0 0.0
        %1515 = vmatprep.subr.mxu0 0.0
        %1516 = vmatpush1.msra.mxu0 0.0
        %1517 = vmatprep.mubr.f32.mxu0 0.0
        %1518 = vmatmul.mubr.f32.gmra.mrb[0].mxu0 %v1451
        %v1519 = vpop.f32.mrb[0].mxu0
        %v1520 = vadd.f32 0.0, %v1519
        %v1521 = vpop.f32.mrb[0].mxu0
        %1522 = vdwg.mxu0
        %v1524 = vsel %vm1028, %v1375, 0
        %1526 = vmatprep.subr.mxu0 0.0
        %1527 = vmatpush1.msra.mxu0 %v1026
        %1528 = vmatprep.subr.mxu0 0.0
        %1529 = vmatpush1.msra.mxu0 0.0
        %1530 = vmatprep.subr.mxu0 0.0
        %1531 = vmatpush1.msra.mxu0 0.0
        %1532 = vmatprep.subr.mxu0 0.0
        %1533 = vmatpush1.msra.mxu0 0.0
        %1534 = vmatprep.subr.mxu0 0.0
        %1535 = vmatpush1.msra.mxu0 0.0
        %1536 = vmatprep.subr.mxu0 0.0
        %1537 = vmatpush1.msra.mxu0 0.0
        %1538 = vmatprep.subr.mxu0 0.0
        %1539 = vmatpush1.msra.mxu0 0.0
        %1540 = vmatprep.subr.mxu0 0.0
        %1541 = vmatpush1.msra.mxu0 0.0
        %1542 = vmatprep.subr.mxu0 0.0
        %1543 = vmatpush1.msra.mxu0 0.0
        %1544 = vmatprep.subr.mxu0 0.0
        %1545 = vmatpush1.msra.mxu0 0.0
        %1546 = vmatprep.subr.mxu0 0.0
        %1547 = vmatpush1.msra.mxu0 0.0
        %1548 = vmatprep.subr.mxu0 0.0
        %1549 = vmatpush1.msra.mxu0 0.0
        %1550 = vmatprep.subr.mxu0 0.0
        %1551 = vmatpush1.msra.mxu0 0.0
        %1552 = vmatprep.subr.mxu0 0.0
        %1553 = vmatpush1.msra.mxu0 0.0
        %1554 = vmatprep.subr.mxu0 0.0
        %1555 = vmatpush1.msra.mxu0 0.0
        %1556 = vmatprep.subr.mxu0 0.0
        %1557 = vmatpush1.msra.mxu0 0.0
        %1558 = vmatprep.subr.mxu0 0.0
        %1559 = vmatpush1.msra.mxu0 0.0
        %1560 = vmatprep.subr.mxu0 0.0
        %1561 = vmatpush1.msra.mxu0 0.0
        %1562 = vmatprep.subr.mxu0 0.0
        %1563 = vmatpush1.msra.mxu0 0.0
        %1564 = vmatprep.subr.mxu0 0.0
        %1565 = vmatpush1.msra.mxu0 0.0
        %1566 = vmatprep.subr.mxu0 0.0
        %1567 = vmatpush1.msra.mxu0 0.0
        %1568 = vmatprep.subr.mxu0 0.0
        %1569 = vmatpush1.msra.mxu0 0.0
        %1570 = vmatprep.subr.mxu0 0.0
        %1571 = vmatpush1.msra.mxu0 0.0
        %1572 = vmatprep.subr.mxu0 0.0
        %1573 = vmatpush1.msra.mxu0 0.0
        %1574 = vmatprep.subr.mxu0 0.0
        %1575 = vmatpush1.msra.mxu0 0.0
        %1576 = vmatprep.subr.mxu0 0.0
        %1577 = vmatpush1.msra.mxu0 0.0
        %1578 = vmatprep.subr.mxu0 0.0
        %1579 = vmatpush1.msra.mxu0 0.0
        %1580 = vmatprep.subr.mxu0 0.0
        %1581 = vmatpush1.msra.mxu0 0.0
        %1582 = vmatprep.subr.mxu0 0.0
        %1583 = vmatpush1.msra.mxu0 0.0
        %1584 = vmatprep.subr.mxu0 0.0
        %1585 = vmatpush1.msra.mxu0 0.0
        %1586 = vmatprep.subr.mxu0 0.0
        %1587 = vmatpush1.msra.mxu0 0.0
        %1588 = vmatprep.subr.mxu0 0.0
        %1589 = vmatpush1.msra.mxu0 0.0
        %1590 = vmatprep.mubr.f32.mxu0 0.0
        %1591 = vmatmul.mubr.f32.gmra.mrb[0].mxu0 %v1524
        %v1592 = vpop.f32.mrb[0].mxu0
        %v1593 = vadd.f32 0.0, %v1592
        %v1594 = vpop.f32.mrb[0].mxu0
        %1595 = vdwg.mxu0
        %v1597 = vsel %vm1028, %v1376, 0
        %1599 = vmatprep.subr.mxu0 0.0
        %1600 = vmatpush1.msra.mxu0 %v1027
        %1601 = vmatprep.subr.mxu0 0.0
        %1602 = vmatpush1.msra.mxu0 0.0
        %1603 = vmatprep.subr.mxu0 0.0
        %1604 = vmatpush1.msra.mxu0 0.0
        %1605 = vmatprep.subr.mxu0 0.0
        %1606 = vmatpush1.msra.mxu0 0.0
        %1607 = vmatprep.subr.mxu0 0.0
        %1608 = vmatpush1.msra.mxu0 0.0
        %1609 = vmatprep.subr.mxu0 0.0
        %1610 = vmatpush1.msra.mxu0 0.0
        %1611 = vmatprep.subr.mxu0 0.0
        %1612 = vmatpush1.msra.mxu0 0.0
        %1613 = vmatprep.subr.mxu0 0.0
        %1614 = vmatpush1.msra.mxu0 0.0
        %1615 = vmatprep.subr.mxu0 0.0
        %1616 = vmatpush1.msra.mxu0 0.0
        %1617 = vmatprep.subr.mxu0 0.0
        %1618 = vmatpush1.msra.mxu0 0.0
        %1619 = vmatprep.subr.mxu0 0.0
        %1620 = vmatpush1.msra.mxu0 0.0
        %1621 = vmatprep.subr.mxu0 0.0
        %1622 = vmatpush1.msra.mxu0 0.0
        %1623 = vmatprep.subr.mxu0 0.0
        %1624 = vmatpush1.msra.mxu0 0.0
        %1625 = vmatprep.subr.mxu0 0.0
        %1626 = vmatpush1.msra.mxu0 0.0
        %1627 = vmatprep.subr.mxu0 0.0
        %1628 = vmatpush1.msra.mxu0 0.0
        %1629 = vmatprep.subr.mxu0 0.0
        %1630 = vmatpush1.msra.mxu0 0.0
        %1631 = vmatprep.subr.mxu0 0.0
        %1632 = vmatpush1.msra.mxu0 0.0
        %1633 = vmatprep.subr.mxu0 0.0
        %1634 = vmatpush1.msra.mxu0 0.0
        %1635 = vmatprep.subr.mxu0 0.0
        %1636 = vmatpush1.msra.mxu0 0.0
        %1637 = vmatprep.subr.mxu0 0.0
        %1638 = vmatpush1.msra.mxu0 0.0
        %1639 = vmatprep.subr.mxu0 0.0
        %1640 = vmatpush1.msra.mxu0 0.0
        %1641 = vmatprep.subr.mxu0 0.0
        %1642 = vmatpush1.msra.mxu0 0.0
        %1643 = vmatprep.subr.mxu0 0.0
        %1644 = vmatpush1.msra.mxu0 0.0
        %1645 = vmatprep.subr.mxu0 0.0
        %1646 = vmatpush1.msra.mxu0 0.0
        %1647 = vmatprep.subr.mxu0 0.0
        %1648 = vmatpush1.msra.mxu0 0.0
        %1649 = vmatprep.subr.mxu0 0.0
        %1650 = vmatpush1.msra.mxu0 0.0
        %1651 = vmatprep.subr.mxu0 0.0
        %1652 = vmatpush1.msra.mxu0 0.0
        %1653 = vmatprep.subr.mxu0 0.0
        %1654 = vmatpush1.msra.mxu0 0.0
        %1655 = vmatprep.subr.mxu0 0.0
        %1656 = vmatpush1.msra.mxu0 0.0
        %1657 = vmatprep.subr.mxu0 0.0
        %1658 = vmatpush1.msra.mxu0 0.0
        %1659 = vmatprep.subr.mxu0 0.0
        %1660 = vmatpush1.msra.mxu0 0.0
        %1661 = vmatprep.subr.mxu0 0.0
        %1662 = vmatpush1.msra.mxu0 0.0
        %1663 = vmatprep.mubr.f32.mxu0 0.0
        %1664 = vmatmul.mubr.f32.gmra.mrb[0].mxu0 %v1597
        %v1665 = vpop.f32.mrb[0].mxu0
        %v1666 = vadd.f32 0.0, %v1665
        %v1667 = vpop.f32.mrb[0].mxu0
        %1668 = vdwg.mxu0
        %v1669 = vcombine.low %v1447, %v1593
        %v1670 = vcombine.high %v1447, %v1593
        %v1672 = vunpack.c.l.s4 1983009808
        %v1673 = vunpack.c.0.s8 %v1672
        %v1674 = vlaneseq
        %v1675 = vshrl.u32 %v1674, 7
        %v1676 = vsub.s32 %v1673, %v1675
        %v1677 = vrot.slane %v1669, %v1676
        %v1679 = vunpack.c.l.s4 1983009808
        %v1680 = vunpack.c.0.s8 %v1679
        %v1681 = vlaneseq
        %v1682 = vshrl.u32 %v1681, 7
        %v1683 = vsub.s32 %v1680, %v1682
        %v1684 = vrot.slane %v1670, %v1683
        %v1685 = vcombine.low %v1520, %v1666
        %v1686 = vcombine.high %v1520, %v1666
        %v1688 = vunpack.c.l.s4 1983009808
        %v1689 = vunpack.c.0.s8 %v1688
        %v1690 = vlaneseq
        %v1691 = vshrl.u32 %v1690, 7
        %v1692 = vsub.s32 %v1689, %v1691
        %v1693 = vrot.slane %v1685, %v1692
        %v1695 = vunpack.c.l.s4 1983009808
        %v1696 = vunpack.c.0.s8 %v1695
        %v1697 = vlaneseq
        %v1698 = vshrl.u32 %v1697, 7
        %v1699 = vsub.s32 %v1696, %v1698
        %v1700 = vrot.slane %v1686, %v1699
        %v1701 = vcombine.low %v1677, %v1693
        %v1702 = vcombine.high %v1677, %v1693
        %v1704 = vunpack.c.l.s4 1934713408
        %v1705 = vunpack.c.0.s8 %v1704
        %v1706 = vlaneseq
        %v1707 = vshrl.u32 %v1706, 7
        %v1708 = vsub.s32 %v1705, %v1707
        %v1709 = vrot.slane %v1701, %v1708
        %v1711 = vunpack.c.l.s4 1934713408
        %v1712 = vunpack.c.0.s8 %v1711
        %v1713 = vlaneseq
        %v1714 = vshrl.u32 %v1713, 7
        %v1715 = vsub.s32 %v1712, %v1714
        %v1716 = vrot.slane %v1702, %v1715
        %v1717 = vcombine.low %v1684, %v1700
        %v1718 = vcombine.high %v1684, %v1700
        %v1720 = vunpack.c.l.s4 1934713408
        %v1721 = vunpack.c.0.s8 %v1720
        %v1722 = vlaneseq
        %v1723 = vshrl.u32 %v1722, 7
        %v1724 = vsub.s32 %v1721, %v1723
        %v1725 = vrot.slane %v1717, %v1724
        %v1727 = vunpack.c.l.s4 1934713408
        %v1728 = vunpack.c.0.s8 %v1727
        %v1729 = vlaneseq
        %v1730 = vshrl.u32 %v1729, 7
        %v1731 = vsub.s32 %v1728, %v1730
        %v1732 = vrot.slane %v1718, %v1731
        %v1733 = vcombine.high %v1709, 0.0
        %v1734 = vcombine.high %v1716, 0.0
        %v1735 = vcombine.high %v1725, 0.0
        %v1736 = vcombine.high %v1732, 0.0
        %v1737 = vcombine.low %v1709, %v1716
        %v1739 = vunpack.c.l.s4 1983009808
        %v1740 = vunpack.c.0.s8 %v1739
        %v1741 = vlaneseq
        %v1742 = vshrl.u32 %v1741, 7
        %v1743 = vsub.s32 %v1740, %v1742
        %v1744 = vrot.slane %v1737, %v1743
        %v1745 = vcombine.low %v1733, %v1734
        %v1747 = vunpack.c.l.s4 1983009808
        %v1748 = vunpack.c.0.s8 %v1747
        %v1749 = vlaneseq
        %v1750 = vshrl.u32 %v1749, 7
        %v1751 = vsub.s32 %v1748, %v1750
        %v1752 = vrot.slane %v1745, %v1751
        %v1753 = vcombine.low %v1725, %v1732
        %v1755 = vunpack.c.l.s4 1983009808
        %v1756 = vunpack.c.0.s8 %v1755
        %v1757 = vlaneseq
        %v1758 = vshrl.u32 %v1757, 7
        %v1759 = vsub.s32 %v1756, %v1758
        %v1760 = vrot.slane %v1753, %v1759
        %v1761 = vcombine.low %v1735, %v1736
        %v1763 = vunpack.c.l.s4 1983009808
        %v1764 = vunpack.c.0.s8 %v1763
        %v1765 = vlaneseq
        %v1766 = vshrl.u32 %v1765, 7
        %v1767 = vsub.s32 %v1764, %v1766
        %v1768 = vrot.slane %v1761, %v1767
        %v1769 = vcombine.low %v1744, %v1752
        %v1770 = vcombine.high %v1744, %v1752
        %v1772 = vunpack.c.l.s4 1934713408
        %v1773 = vunpack.c.0.s8 %v1772
        %v1774 = vlaneseq
        %v1775 = vshrl.u32 %v1774, 7
        %v1776 = vsub.s32 %v1773, %v1775
        %v1777 = vrot.slane %v1769, %v1776
        %v1779 = vunpack.c.l.s4 1934713408
        %v1780 = vunpack.c.0.s8 %v1779
        %v1781 = vlaneseq
        %v1782 = vshrl.u32 %v1781, 7
        %v1783 = vsub.s32 %v1780, %v1782
        %v1784 = vrot.slane %v1770, %v1783
        %v1785 = vcombine.low %v1760, %v1768
        %v1786 = vcombine.high %v1760, %v1768
        %v1788 = vunpack.c.l.s4 1934713408
        %v1789 = vunpack.c.0.s8 %v1788
        %v1790 = vlaneseq
        %v1791 = vshrl.u32 %v1790, 7
        %v1792 = vsub.s32 %v1789, %v1791
        %v1793 = vrot.slane %v1785, %v1792
        %v1795 = vunpack.c.l.s4 1934713408
        %v1796 = vunpack.c.0.s8 %v1795
        %v1797 = vlaneseq
        %v1798 = vshrl.u32 %v1797, 7
        %v1799 = vsub.s32 %v1796, %v1798
        %v1800 = vrot.slane %v1786, %v1799
        %v1801 = vcombine.low %v1777, %v1793
        %v1802 = vcombine.high %v1777, %v1793
        %v1803 = vcombine.low %v1784, %v1800
        %v1804 = vcombine.high %v1784, %v1800
        %1806 = vrot.lane.b32.xlu0 %v1802, 8
        %v1807 = vpop.permute.xlu0 %1806
        %1810 = vrot.lane.b32.xlu0 %v1803, 16
        %v1811 = vpop.permute.xlu0 %1810
        %1814 = vrot.lane.b32.xlu0 %v1804, 24
        %v1815 = vpop.permute.xlu0 %1814
        %v1817 = vsel %vm1028, %v1801, %v1807
        %vm1818 = vcmask 130048
        %v1819 = vsel %vm1818, %v1817, %v1811
        %vm1820 = vcmask 195584
        %v1821 = vsel %vm1820, %v1819, %v1815
        %v1822 = vld [vmem:[#allocation7] sm:$0xff]
        %v1823 = vld [vmem:[#allocation7 + $0x8] sm:$0xff]
        %v1824 = vld [vmem:[#allocation7 + $0x10] sm:$0xff]
        %v1825 = vld [vmem:[#allocation7 + $0x18] sm:$0xff]
        %v1826 = vld [vmem:[%s4] sm:$0x1]
        %v1828 = vlaneseq
        %v1829 = vshrl.u32 %v1828, 7
        %v1830 = vsub.s32 0, %v1829
        %v1831 = vrot.slane %v1826, %v1830
        %v1834 = vsel %vm512, %v1821, 0
        %1836 = vmatprep.subr.mxu0 0.0
        %1837 = vmatpush1.msra.mxu0 %v1822
        %1838 = vmatprep.subr.mxu0 0.0
        %1839 = vmatpush1.msra.mxu0 %v1823
        %1840 = vmatprep.subr.mxu0 0.0
        %1841 = vmatpush1.msra.mxu0 %v1824
        %1842 = vmatprep.subr.mxu0 0.0
        %1843 = vmatpush1.msra.mxu0 %v1825
        %1844 = vmatprep.subr.mxu0 0.0
        %1845 = vmatpush1.msra.mxu0 0.0
        %1846 = vmatprep.subr.mxu0 0.0
        %1847 = vmatpush1.msra.mxu0 0.0
        %1848 = vmatprep.subr.mxu0 0.0
        %1849 = vmatpush1.msra.mxu0 0.0
        %1850 = vmatprep.subr.mxu0 0.0
        %1851 = vmatpush1.msra.mxu0 0.0
        %1852 = vmatprep.subr.mxu0 0.0
        %1853 = vmatpush1.msra.mxu0 0.0
        %1854 = vmatprep.subr.mxu0 0.0
        %1855 = vmatpush1.msra.mxu0 0.0
        %1856 = vmatprep.subr.mxu0 0.0
        %1857 = vmatpush1.msra.mxu0 0.0
        %1858 = vmatprep.subr.mxu0 0.0
        %1859 = vmatpush1.msra.mxu0 0.0
        %1860 = vmatprep.subr.mxu0 0.0
        %1861 = vmatpush1.msra.mxu0 0.0
        %1862 = vmatprep.subr.mxu0 0.0
        %1863 = vmatpush1.msra.mxu0 0.0
        %1864 = vmatprep.subr.mxu0 0.0
        %1865 = vmatpush1.msra.mxu0 0.0
        %1866 = vmatprep.subr.mxu0 0.0
        %1867 = vmatpush1.msra.mxu0 0.0
        %1868 = vmatprep.subr.mxu0 0.0
        %1869 = vmatpush1.msra.mxu0 0.0
        %1870 = vmatprep.subr.mxu0 0.0
        %1871 = vmatpush1.msra.mxu0 0.0
        %1872 = vmatprep.subr.mxu0 0.0
        %1873 = vmatpush1.msra.mxu0 0.0
        %1874 = vmatprep.subr.mxu0 0.0
        %1875 = vmatpush1.msra.mxu0 0.0
        %1876 = vmatprep.subr.mxu0 0.0
        %1877 = vmatpush1.msra.mxu0 0.0
        %1878 = vmatprep.subr.mxu0 0.0
        %1879 = vmatpush1.msra.mxu0 0.0
        %1880 = vmatprep.subr.mxu0 0.0
        %1881 = vmatpush1.msra.mxu0 0.0
        %1882 = vmatprep.subr.mxu0 0.0
        %1883 = vmatpush1.msra.mxu0 0.0
        %1884 = vmatprep.subr.mxu0 0.0
        %1885 = vmatpush1.msra.mxu0 0.0
        %1886 = vmatprep.subr.mxu0 0.0
        %1887 = vmatpush1.msra.mxu0 0.0
        %1888 = vmatprep.subr.mxu0 0.0
        %1889 = vmatpush1.msra.mxu0 0.0
        %1890 = vmatprep.subr.mxu0 0.0
        %1891 = vmatpush1.msra.mxu0 0.0
        %1892 = vmatprep.subr.mxu0 0.0
        %1893 = vmatpush1.msra.mxu0 0.0
        %1894 = vmatprep.subr.mxu0 0.0
        %1895 = vmatpush1.msra.mxu0 0.0
        %1896 = vmatprep.subr.mxu0 0.0
        %1897 = vmatpush1.msra.mxu0 0.0
        %1898 = vmatprep.subr.mxu0 0.0
        %1899 = vmatpush1.msra.mxu0 0.0
        %1900 = vmatprep.mubr.f32.mxu0 0.0
        %1901 = vmatmul.mubr.f32.gmra.mrb[0].mxu0 %v1834
        %v1902 = vpop.f32.mrb[0].mxu0
        %v1903 = vadd.f32 %v1831, %v1902
        %v1904 = vpop.f32.mrb[0].mxu0
        %1905 = vdwg.mxu0
        %v1906 = vadd.f32 %v500, %v1903
        %v1907 = vsel %vm512, %v1906, 0.0
        %1908 = vadd.xlane.f32.xlu0 %v1907
        %v1909 = vpop.xlane.xlu0 %1908
        %v1910 = vrcp.pop 32.0
        %v1911 = vmul.f32 %v1909, %v1910
        %v1912 = vsub.f32 %v1906, %v1911
        %v1913 = vmul.f32 %v1912, %v1912
        %v1914 = vsel %vm512, %v1913, 0.0
        %1915 = vadd.xlane.f32.xlu0 %v1914
        %v1916 = vpop.xlane.xlu0 %1915
        %v1917 = vmul.f32 %v1916, %v1910
        %v1918 = vadd.f32 %v1917, 1e-05
        %v1919 = vrsqrt.pop %v1918
        %v1920 = vmul.f32 %v1912, %v1919
        %v1921 = vld [vmem:[%s5] sm:$0x1]
        %v1923 = vlaneseq
        %v1924 = vshrl.u32 %v1923, 7
        %v1925 = vsub.s32 0, %v1924
        %v1926 = vrot.slane %v1921, %v1925
        %v1928 = vmul.f32 %v1920, %v1926
        %v1929 = vld [vmem:[%s6] sm:$0x1]
        %v1931 = vlaneseq
        %v1932 = vshrl.u32 %v1931, 7
        %v1933 = vsub.s32 0, %v1932
        %v1934 = vrot.slane %v1929, %v1933
        %v1936 = vadd.f32 %v1928, %v1934
        %v1937 = vld [vmem:[#allocation8] sm:$0xff]
        %v1938 = vld [vmem:[#allocation8 + $0x8] sm:$0xff]
        %v1939 = vld [vmem:[#allocation8 + $0x10] sm:$0xff]
        %v1940 = vld [vmem:[#allocation8 + $0x18] sm:$0xff]
        %v1941 = vld [vmem:[%s8] sm:$0x1]
        %v1943 = vlaneseq
        %v1944 = vshrl.u32 %v1943, 7
        %v1945 = vsub.s32 0, %v1944
        %v1946 = vrot.slane %v1941, %v1945
        %v1949 = vsel %vm512, %v1936, 0
        %1951 = vmatprep.subr.mxu0 0.0
        %1952 = vmatpush1.msra.mxu0 %v1937
        %1953 = vmatprep.subr.mxu0 0.0
        %1954 = vmatpush1.msra.mxu0 %v1938
        %1955 = vmatprep.subr.mxu0 0.0
        %1956 = vmatpush1.msra.mxu0 %v1939
        %1957 = vmatprep.subr.mxu0 0.0
        %1958 = vmatpush1.msra.mxu0 %v1940
        %1959 = vmatprep.subr.mxu0 0.0
        %1960 = vmatpush1.msra.mxu0 0.0
        %1961 = vmatprep.subr.mxu0 0.0
        %1962 = vmatpush1.msra.mxu0 0.0
        %1963 = vmatprep.subr.mxu0 0.0
        %1964 = vmatpush1.msra.mxu0 0.0
        %1965 = vmatprep.subr.mxu0 0.0
        %1966 = vmatpush1.msra.mxu0 0.0
        %1967 = vmatprep.subr.mxu0 0.0
        %1968 = vmatpush1.msra.mxu0 0.0
        %1969 = vmatprep.subr.mxu0 0.0
        %1970 = vmatpush1.msra.mxu0 0.0
        %1971 = vmatprep.subr.mxu0 0.0
        %1972 = vmatpush1.msra.mxu0 0.0
        %1973 = vmatprep.subr.mxu0 0.0
        %1974 = vmatpush1.msra.mxu0 0.0
        %1975 = vmatprep.subr.mxu0 0.0
        %1976 = vmatpush1.msra.mxu0 0.0
        %1977 = vmatprep.subr.mxu0 0.0
        %1978 = vmatpush1.msra.mxu0 0.0
        %1979 = vmatprep.subr.mxu0 0.0
        %1980 = vmatpush1.msra.mxu0 0.0
        %1981 = vmatprep.subr.mxu0 0.0
        %1982 = vmatpush1.msra.mxu0 0.0
        %1983 = vmatprep.subr.mxu0 0.0
        %1984 = vmatpush1.msra.mxu0 0.0
        %1985 = vmatprep.subr.mxu0 0.0
        %1986 = vmatpush1.msra.mxu0 0.0
        %1987 = vmatprep.subr.mxu0 0.0
        %1988 = vmatpush1.msra.mxu0 0.0
        %1989 = vmatprep.subr.mxu0 0.0
        %1990 = vmatpush1.msra.mxu0 0.0
        %1991 = vmatprep.subr.mxu0 0.0
        %1992 = vmatpush1.msra.mxu0 0.0
        %1993 = vmatprep.subr.mxu0 0.0
        %1994 = vmatpush1.msra.mxu0 0.0
        %1995 = vmatprep.subr.mxu0 0.0
        %1996 = vmatpush1.msra.mxu0 0.0
        %1997 = vmatprep.subr.mxu0 0.0
        %1998 = vmatpush1.msra.mxu0 0.0
        %1999 = vmatprep.subr.mxu0 0.0
        %2000 = vmatpush1.msra.mxu0 0.0
        %2001 = vmatprep.subr.mxu0 0.0
        %2002 = vmatpush1.msra.mxu0 0.0
        %2003 = vmatprep.subr.mxu0 0.0
        %2004 = vmatpush1.msra.mxu0 0.0
        %2005 = vmatprep.subr.mxu0 0.0
        %2006 = vmatpush1.msra.mxu0 0.0
        %2007 = vmatprep.subr.mxu0 0.0
        %2008 = vmatpush1.msra.mxu0 0.0
        %2009 = vmatprep.subr.mxu0 0.0
        %2010 = vmatpush1.msra.mxu0 0.0
        %2011 = vmatprep.subr.mxu0 0.0
        %2012 = vmatpush1.msra.mxu0 0.0
        %2013 = vmatprep.subr.mxu0 0.0
        %2014 = vmatpush1.msra.mxu0 0.0
        %2015 = vmatprep.mubr.f32.mxu0 0.0
        %2016 = vmatmul.mubr.f32.gmra.mrb[0].mxu0 %v1949
        %v2017 = vpop.f32.mrb[0].mxu0
        %v2018 = vadd.f32 %v1946, %v2017
        %v2019 = vpop.f32.mrb[0].mxu0
        %2020 = vdwg.mxu0
        %v2021 = vmax.f32 %v2018, 0.0
        %v2022 = vadd.f32 %v1936, %v2021
        %v2023 = vsel %vm512, %v2022, 0.0
        %2024 = vadd.xlane.f32.xlu0 %v2023
        %v2025 = vpop.xlane.xlu0 %2024
        %v2026 = vmul.f32 %v2025, %v1910
        %v2027 = vsub.f32 %v2022, %v2026
        %v2028 = vmul.f32 %v2027, %v2027
        %v2029 = vsel %vm512, %v2028, 0.0
        %2030 = vadd.xlane.f32.xlu0 %v2029
        %v2031 = vpop.xlane.xlu0 %2030
        %v2032 = vmul.f32 %v2031, %v1910
        %v2033 = vadd.f32 %v2032, 1e-05
        %v2034 = vrsqrt.pop %v2033
        %v2035 = vmul.f32 %v2027, %v2034
        %v2036 = vld [vmem:[%s9] sm:$0x1]
        %v2038 = vlaneseq
        %v2039 = vshrl.u32 %v2038, 7
        %v2040 = vsub.s32 0, %v2039
        %v2041 = vrot.slane %v2036, %v2040
        %v2043 = vmul.f32 %v2035, %v2041
        %v2044 = vld [vmem:[%s10] sm:$0x1]
        %v2046 = vlaneseq
        %v2047 = vshrl.u32 %v2046, 7
        %v2048 = vsub.s32 0, %v2047
        %v2049 = vrot.slane %v2044, %v2048
        %v2051 = vadd.f32 %v2043, %v2049
        %v2052 = vld [vmem:[%s11] sm:$0xff]
        %v2053 = vld [vmem:[%s11 + $0x8] sm:$0xff]
        %v2054 = vld [vmem:[%s11 + $0x10] sm:$0xff]
        %v2055 = vld [vmem:[%s11 + $0x18] sm:$0xff]
        %v2056 = vld [vmem:[%s12] sm:$0x1]
        %v2058 = vlaneseq
        %v2059 = vshrl.u32 %v2058, 7
        %v2060 = vsub.s32 0, %v2059
        %v2061 = vrot.slane %v2056, %v2060
        %v2064 = vsel %vm512, %v2051, 0
        %2066 = vmatprep.subr.mxu0 0.0
        %2067 = vmatpush1.msra.mxu0 %v2052
        %2068 = vmatprep.subr.mxu0 0.0
        %2069 = vmatpush1.msra.mxu0 %v2053
        %2070 = vmatprep.subr.mxu0 0.0
        %2071 = vmatpush1.msra.mxu0 %v2054
        %2072 = vmatprep.subr.mxu0 0.0
        %2073 = vmatpush1.msra.mxu0 %v2055
        %2074 = vmatprep.subr.mxu0 0.0
        %2075 = vmatpush1.msra.mxu0 0.0
        %2076 = vmatprep.subr.mxu0 0.0
        %2077 = vmatpush1.msra.mxu0 0.0
        %2078 = vmatprep.subr.mxu0 0.0
        %2079 = vmatpush1.msra.mxu0 0.0
        %2080 = vmatprep.subr.mxu0 0.0
        %2081 = vmatpush1.msra.mxu0 0.0
        %2082 = vmatprep.subr.mxu0 0.0
        %2083 = vmatpush1.msra.mxu0 0.0
        %2084 = vmatprep.subr.mxu0 0.0
        %2085 = vmatpush1.msra.mxu0 0.0
        %2086 = vmatprep.subr.mxu0 0.0
        %2087 = vmatpush1.msra.mxu0 0.0
        %2088 = vmatprep.subr.mxu0 0.0
        %2089 = vmatpush1.msra.mxu0 0.0
        %2090 = vmatprep.subr.mxu0 0.0
        %2091 = vmatpush1.msra.mxu0 0.0
        %2092 = vmatprep.subr.mxu0 0.0
        %2093 = vmatpush1.msra.mxu0 0.0
        %2094 = vmatprep.subr.mxu0 0.0
        %2095 = vmatpush1.msra.mxu0 0.0
        %2096 = vmatprep.subr.mxu0 0.0
        %2097 = vmatpush1.msra.mxu0 0.0
        %2098 = vmatprep.subr.mxu0 0.0
        %2099 = vmatpush1.msra.mxu0 0.0
        %2100 = vmatprep.subr.mxu0 0.0
        %2101 = vmatpush1.msra.mxu0 0.0
        %2102 = vmatprep.subr.mxu0 0.0
        %2103 = vmatpush1.msra.mxu0 0.0
        %2104 = vmatprep.subr.mxu0 0.0
        %2105 = vmatpush1.msra.mxu0 0.0
        %2106 = vmatprep.subr.mxu0 0.0
        %2107 = vmatpush1.msra.mxu0 0.0
        %2108 = vmatprep.subr.mxu0 0.0
        %2109 = vmatpush1.msra.mxu0 0.0
        %2110 = vmatprep.subr.mxu0 0.0
        %2111 = vmatpush1.msra.mxu0 0.0
        %2112 = vmatprep.subr.mxu0 0.0
        %2113 = vmatpush1.msra.mxu0 0.0
        %2114 = vmatprep.subr.mxu0 0.0
        %2115 = vmatpush1.msra.mxu0 0.0
        %2116 = vmatprep.subr.mxu0 0.0
        %2117 = vmatpush1.msra.mxu0 0.0
        %2118 = vmatprep.subr.mxu0 0.0
        %2119 = vmatpush1.msra.mxu0 0.0
        %2120 = vmatprep.subr.mxu0 0.0
        %2121 = vmatpush1.msra.mxu0 0.0
        %2122 = vmatprep.subr.mxu0 0.0
        %2123 = vmatpush1.msra.mxu0 0.0
        %2124 = vmatprep.subr.mxu0 0.0
        %2125 = vmatpush1.msra.mxu0 0.0
        %2126 = vmatprep.subr.mxu0 0.0
        %2127 = vmatpush1.msra.mxu0 0.0
        %2128 = vmatprep.subr.mxu0 0.0
        %2129 = vmatpush1.msra.mxu0 0.0
        %2130 = vmatprep.mubr.f32.mxu0 0.0
        %2131 = vmatmul.mubr.f32.gmra.mrb[0].mxu0 %v2064
        %v2132 = vpop.f32.mrb[0].mxu0
        %v2133 = vadd.f32 %v2061, %v2132
        %v2134 = vpop.f32.mrb[0].mxu0
        %2135 = vdwg.mxu0
        %2136 = vst [vmem:[%s499] sm:$0xff] %v2133
        %s2137 = sand.u32 %s318, 1
        %s2138 = scalar_lea.sflag [#allocation4], %s2137
        %s2139 = sand.u32 %s318, 1
        %s2140 = smul.addr %s2139, 8
        %s2141 = scalar_lea.vmem [#allocation10], %s2140
        // Predicated region
        $region89: #{tpu_custom_call.1} parent=71 // pred_check
          %p2142 = pneg %p328
        $region90: #{tpu_custom_call.1} parent=71 // pred_check_branch
          %2144 = sbr.rel (%p2142) target = $region92
        $region91: #{tpu_custom_call.1} parent=71 // pred_region
          %s2146 = ssub.s32 128, 128
          %2147 = vsyncadd %s2138, %s2146
          %s2148 = smul.addr %s32, 128
          %s2149 = scalar_lea.hbm %s13, %s2148
          %s2151 = sshll.u32 %s2141, 4
          %s2152 = int_to_ptr.vmem [resolvable:$true] %s2151
          %2154 = dma.vmem_to_hbm [thread:$0]  %s2152, 128, %s2149, %s2138
        $region92: #{tpu_custom_call.1} parent=71 // pred_fallthru
          _
      $region72: #{tpu_custom_call.1} parent=5 // pred_fallthru
        _
      %p2155 = scmp.le.s32.totalorder 2, %s27
      // Predicated region
      $region93: #{tpu_custom_call.1} parent=5 // pred_check
        %p2156 = pneg %p2155
      $region94: #{tpu_custom_call.1} parent=5 // pred_check_branch
        %2158 = sbr.rel (%p2156) target = $region96
      $region95: #{tpu_custom_call.1} parent=5 // pred_region
        %s2159 = ssub.s32 %s27, 2
        // Predicated region
        $region97: #{tpu_custom_call.1} parent=95 // pred_check
          %p2160 = pneg %p334
        $region98: #{tpu_custom_call.1} parent=95 // pred_check_branch
          %2162 = sbr.rel (%p2160) target = $region100
        $region99: #{tpu_custom_call.1} parent=95 // pred_region
          %s2163 = sand.u32 %s319, 1
          %s2164 = scalar_lea.sflag [#allocation4], %s2163
          %s2165 = sand.u32 %s319, 1
          %s2166 = smul.addr %s2165, 8
          %s2167 = scalar_lea.vmem [#allocation10], %s2166
          %2168 = dma.done %s2164, 128
        $region100: #{tpu_custom_call.1} parent=95 // pred_fallthru
          _
      $region96: #{tpu_custom_call.1} parent=5 // pred_fallthru
        _
    $region6: #{tpu_custom_call.1} parent=1 // loop_footer
      %s31 = sadd.s32 1, %s27
    $region7: #{tpu_custom_call.1} parent=1 // loop_footer_branch
      %26 = sbr.rel target = $region3
    $region8: #{tpu_custom_call.1} parent=1 // loop_exit
      _
    %2169 = vsyncpa [#allocation3], 1
    %s2170 = scalar_lea.sflag [#allocation3], 1
    %2171 = vsyncpa %s2170, 1
    %2172 = vsyncpa [#allocation6], 1
    %2173 = vsyncpa [#allocation9], 1
    %2174 = vsyncpa [#allocation4], 1
    %s2175 = scalar_lea.sflag [#allocation4], 1
    %2176 = vsyncpa %s2175, 1

// kernel: tpu_custom_call.1
$region0: #{tpu_custom_call.1}
  #allocation0 [shape = 'u32[]', space=smem, size = 0x4, offset = 0x4, fixed_abs, tag = 'smem constant byte address 0x4 - core index']
  #allocation1 [shape = 'u32[144,128]{1,0:T(1,128)}', space=vmem, size = 0x12000, scoped, tag = 'internal scratch']
  %s0 = inlined_call_operand.hbm [shape: f32[2,8,32], index: 0, kind: input, shape index: {}]
  %s1 = inlined_call_operand.hbm [shape: f32[32,96], index: 1, kind: input, shape index: {}]
  %s2 = inlined_call_operand.vmem [shape: f32[1,96], index: 2, kind: input, shape index: {}]
  %s3 = inlined_call_operand.hbm [shape: f32[32,32], index: 3, kind: input, shape index: {}]
  %s4 = inlined_call_operand.vmem [shape: f32[1,32], index: 4, kind: input, shape index: {}]
  %s5 = inlined_call_operand.vmem [shape: f32[1,32], index: 5, kind: input, shape index: {}]
  %s6 = inlined_call_operand.vmem [shape: f32[1,32], index: 6, kind: input, shape index: {}]
  %s7 = inlined_call_operand.hbm [shape: f32[32,32], index: 7, kind: input, shape index: {}]
  %s8 = inlined_call_operand.vmem [shape: f32[1,32], index: 8, kind: input, shape index: {}]
  %s9 = inlined_call_operand.vmem [shape: f32[1,32], index: 9, kind: input, shape index: {}]
  %s10 = inlined_call_operand.vmem [shape: f32[1,32], index: 10, kind: input, shape index: {}]
  %s11 = inlined_call_operand.vmem [shape: f32[32,128], index: 11, kind: input, shape index: {}]
  %s12 = inlined_call_operand.vmem [shape: f32[1,128], index: 12, kind: input, shape index: {}]
  %s13 = inlined_call_operand.hbm [shape: f32[2,8,128], index: 13, kind: output, shape index: {}]
  %s14 = sld [smem:[#allocation0]]
  $region101: #{tpu_custom_call.1} parent=0
    _
  %s16 = ssub.s32 1, %s14
  %s17 = scalar_select 0, %s16, %s14
  $region1: #{tpu_custom_call.1} parent=0
    #allocation2 [shape = 'u8[8192]{0}', space=vmem, size = 0x2000, scoped, tag = 'input window, operand 0']
    #allocation3 [shape = 's32[2]{0}', space=sflag, size = 0x8, scoped, tag = 'scoped memory for tpu_custom_call.1']
    #allocation4 [shape = 's32[2]{0}', space=sflag, size = 0x8, scoped, tag = 'scoped memory for tpu_custom_call.1']
    #allocation5 [shape = 'u8[16384]{0}', space=vmem, size = 0x4000, scoped, tag = 'input window, operand 1, single buffered']
    #allocation6 [shape = 's32[1]{0}', space=sflag, size = 0x4, scoped, tag = 'scoped memory for tpu_custom_call.1']
    #allocation7 [shape = 'u8[16384]{0}', space=vmem, size = 0x4000, scoped, tag = 'input window, operand 3, single buffered']
    #allocation8 [shape = 'u8[16384]{0}', space=vmem, size = 0x4000, scoped, tag = 'input window, operand 7, single buffered']
    #allocation9 [shape = 's32[1]{0}', space=sflag, size = 0x4, scoped, tag = 'scoped memory for tpu_custom_call.1']
    #allocation10 [shape = 'u8[8192]{0}', space=vmem, size = 0x2000, scoped, tag = 'output window, operand 0']
    %18 = vsyncpa [#allocation3], 0
    %s19 = scalar_lea.sflag [#allocation3], 1
    %20 = vsyncpa %s19, 0
    %21 = vsyncpa [#allocation6], 0
    %22 = vsyncpa [#allocation9], 0
    %23 = vsyncpa [#allocation4], 0
    %s24 = scalar_lea.sflag [#allocation4], 1
    %25 = vsyncpa %s24, 0
    loop: start=0, step=1, limit=4
    $region2: #{tpu_custom_call.1} parent=1 // loop_pre_header
      _
    $region3: #{tpu_custom_call.1} parent=1 // loop_header
      %s27 = sphi 0, %s31
      %p28 = scmp.ge.s32.totalorder %s27, 4
      %s37 = sphi 0, %s39
      %s40 = sphi 0, %s37
      %s41 = sphi 0, %s40
      %s57 = sphi 0, %s41
      %s61 = sphi 0, %s61
      %s63 = sphi 0, %s61
      %s64 = sphi 0, %s63
      %s78 = sphi 0, %s64
      %s82 = sphi 0, %s82
      %s84 = sphi 0, %s82
      %s85 = sphi 0, %s84
      %s99 = sphi 0, %s85
      %s103 = sphi 0, %s103
      %s105 = sphi 0, %s103
      %s106 = sphi 0, %s105
      %s120 = sphi 0, %s106
      %s124 = sphi 0, %s124
      %s126 = sphi 0, %s124
      %s127 = sphi 0, %s126
      %s141 = sphi 0, %s127
      %s145 = sphi 0, %s145
      %s147 = sphi 0, %s145
      %s148 = sphi 0, %s147
      %s162 = sphi 0, %s148
      %s166 = sphi 0, %s166
      %s168 = sphi 0, %s166
      %s169 = sphi 0, %s168
      %s183 = sphi 0, %s169
      %s187 = sphi 0, %s187
      %s189 = sphi 0, %s187
      %s190 = sphi 0, %s189
      %s204 = sphi 0, %s190
      %s208 = sphi 0, %s208
      %s210 = sphi 0, %s208
      %s211 = sphi 0, %s210
      %s225 = sphi 0, %s211
      %s229 = sphi 0, %s229
      %s231 = sphi 0, %s229
      %s232 = sphi 0, %s231
      %s246 = sphi 0, %s232
      %s250 = sphi 0, %s250
      %s252 = sphi 0, %s250
      %s253 = sphi 0, %s252
      %s267 = sphi 0, %s253
      %s271 = sphi 0, %s271
      %s273 = sphi 0, %s271
      %s274 = sphi 0, %s273
      %s288 = sphi 0, %s274
      %s292 = sphi 0, %s292
      %s294 = sphi 0, %s292
      %s295 = sphi 0, %s294
      %s309 = sphi 0, %s295
      %s315 = sphi 0, %s317
      %s318 = sphi 0, %s315
      %s319 = sphi 0, %s318
      %s335 = sphi 0, %s319
    $region4: #{tpu_custom_call.1} parent=1 // loop_header_branch
      %30 = sbr.rel (%p28) target = $region8
    $region5: #{tpu_custom_call.1} parent=1 // loop_body
      %s32 = ssub.s32 %s27, 1
      %s33 = ssub.s32 %s27, 2
      %s34 = sadd.s32 %s27, 1
      %s35 = ssub.s32 %s27, %s34
      %p36 = scmp.eq.s32.totalorder %s35, 0
      %s38 = sadd.s32 %s37, 1
      %s39 = scalar_select %p36, %s37, %s38
      %p42 = pneg %p36
      %p43 = scmp.eq.s32.totalorder %s27, 1
      %p44 = por %p42, %p43
      %p45 = scmp.ne.s32.totalorder %s37, %s40
      %p46 = scmp.eq.s32.totalorder %s27, 0
      %p47 = por %p45, %p46
      %p48 = scmp.ne.s32.totalorder %s37, %s40
      %p49 = scmp.eq.s32.totalorder %s32, 1
      %p50 = por %p48, %p49
      %p51 = scmp.ne.s32.totalorder %s40, %s41
      %p52 = scmp.eq.s32.totalorder %s32, 0
      %p53 = por %p51, %p52
      %p54 = scmp.ne.s32.totalorder %s40, %s41
      %p55 = scmp.eq.s32.totalorder %s33, 1
      %p56 = por %p54, %p55
      %p58 = scmp.ne.s32.totalorder %s41, %s57
      %p59 = scmp.eq.s32.totalorder %s33, 0
      %p60 = por %p58, %p59
      %s62 = sadd.s32 %s61, 1
      %p65 = scmp.eq.s32.totalorder %s27, 1
      %p66 = scmp.ne.s32.totalorder %s61, %s63
      %p67 = scmp.eq.s32.totalorder %s27, 0
      %p68 = por %p66, %p67
      %p69 = scmp.ne.s32.totalorder %s61, %s63
      %p70 = scmp.eq.s32.totalorder %s32, 1
      %p71 = por %p69, %p70
      %p72 = scmp.ne.s32.totalorder %s63, %s64
      %p73 = scmp.eq.s32.totalorder %s32, 0
      %p74 = por %p72, %p73
      %p75 = scmp.ne.s32.totalorder %s63, %s64
      %p76 = scmp.eq.s32.totalorder %s33, 1
      %p77 = por %p75, %p76
      %p79 = scmp.ne.s32.totalorder %s64, %s78
      %p80 = scmp.eq.s32.totalorder %s33, 0
      %p81 = por %p79, %p80
      %s83 = sadd.s32 %s82, 1
      %p86 = scmp.eq.s32.totalorder %s27, 1
      %p87 = scmp.ne.s32.totalorder %s82, %s84
      %p88 = scmp.eq.s32.totalorder %s27, 0
      %p89 = por %p87, %p88
      %p90 = scmp.ne.s32.totalorder %s82, %s84
      %p91 = scmp.eq.s32.totalorder %s32, 1
      %p92 = por %p90, %p91
      %p93 = scmp.ne.s32.totalorder %s84, %s85
      %p94 = scmp.eq.s32.totalorder %s32, 0
      %p95 = por %p93, %p94
      %p96 = scmp.ne.s32.totalorder %s84, %s85
      %p97 = scmp.eq.s32.totalorder %s33, 1
      %p98 = por %p96, %p97
      %p100 = scmp.ne.s32.totalorder %s85, %s99
      %p101 = scmp.eq.s32.totalorder %s33, 0
      %p102 = por %p100, %p101
      %s104 = sadd.s32 %s103, 1
      %p107 = scmp.eq.s32.totalorder %s27, 1
      %p108 = scmp.ne.s32.totalorder %s103, %s105
      %p109 = scmp.eq.s32.totalorder %s27, 0
      %p110 = por %p108, %p109
      %p111 = scmp.ne.s32.totalorder %s103, %s105
      %p112 = scmp.eq.s32.totalorder %s32, 1
      %p113 = por %p111, %p112
      %p114 = scmp.ne.s32.totalorder %s105, %s106
      %p115 = scmp.eq.s32.totalorder %s32, 0
      %p116 = por %p114, %p115
      %p117 = scmp.ne.s32.totalorder %s105, %s106
      %p118 = scmp.eq.s32.totalorder %s33, 1
      %p119 = por %p117, %p118
      %p121 = scmp.ne.s32.totalorder %s106, %s120
      %p122 = scmp.eq.s32.totalorder %s33, 0
      %p123 = por %p121, %p122
      %s125 = sadd.s32 %s124, 1
      %p128 = scmp.eq.s32.totalorder %s27, 1
      %p129 = scmp.ne.s32.totalorder %s124, %s126
      %p130 = scmp.eq.s32.totalorder %s27, 0
      %p131 = por %p129, %p130
      %p132 = scmp.ne.s32.totalorder %s124, %s126
      %p133 = scmp.eq.s32.totalorder %s32, 1
      %p134 = por %p132, %p133
      %p135 = scmp.ne.s32.totalorder %s126, %s127
      %p136 = scmp.eq.s32.totalorder %s32, 0
      %p137 = por %p135, %p136
      %p138 = scmp.ne.s32.totalorder %s126, %s127
      %p139 = scmp.eq.s32.totalorder %s33, 1
      %p140 = por %p138, %p139
      %p142 = scmp.ne.s32.totalorder %s127, %s141
      %p143 = scmp.eq.s32.totalorder %s33, 0
      %p144 = por %p142, %p143
      %s146 = sadd.s32 %s145, 1
      %p149 = scmp.eq.s32.totalorder %s27, 1
      %p150 = scmp.ne.s32.totalorder %s145, %s147
      %p151 = scmp.eq.s32.totalorder %s27, 0
      %p152 = por %p150, %p151
      %p153 = scmp.ne.s32.totalorder %s145, %s147
      %p154 = scmp.eq.s32.totalorder %s32, 1
      %p155 = por %p153, %p154
      %p156 = scmp.ne.s32.totalorder %s147, %s148
      %p157 = scmp.eq.s32.totalorder %s32, 0
      %p158 = por %p156, %p157
      %p159 = scmp.ne.s32.totalorder %s147, %s148
      %p160 = scmp.eq.s32.totalorder %s33, 1
      %p161 = por %p159, %p160
      %p163 = scmp.ne.s32.totalorder %s148, %s162
      %p164 = scmp.eq.s32.totalorder %s33, 0
      %p165 = por %p163, %p164
      %s167 = sadd.s32 %s166, 1
      %p170 = scmp.eq.s32.totalorder %s27, 1
      %p171 = scmp.ne.s32.totalorder %s166, %s168
      %p172 = scmp.eq.s32.totalorder %s27, 0
      %p173 = por %p171, %p172
      %p174 = scmp.ne.s32.totalorder %s166, %s168
      %p175 = scmp.eq.s32.totalorder %s32, 1
      %p176 = por %p174, %p175
      %p177 = scmp.ne.s32.totalorder %s168, %s169
      %p178 = scmp.eq.s32.totalorder %s32, 0
      %p179 = por %p177, %p178
      %p180 = scmp.ne.s32.totalorder %s168, %s169
      %p181 = scmp.eq.s32.totalorder %s33, 1
      %p182 = por %p180, %p181
      %p184 = scmp.ne.s32.totalorder %s169, %s183
      %p185 = scmp.eq.s32.totalorder %s33, 0
      %p186 = por %p184, %p185
      %s188 = sadd.s32 %s187, 1
      %p191 = scmp.eq.s32.totalorder %s27, 1
      %p192 = scmp.ne.s32.totalorder %s187, %s189
      %p193 = scmp.eq.s32.totalorder %s27, 0
      %p194 = por %p192, %p193
      %p195 = scmp.ne.s32.totalorder %s187, %s189
      %p196 = scmp.eq.s32.totalorder %s32, 1
      %p197 = por %p195, %p196
      %p198 = scmp.ne.s32.totalorder %s189, %s190
      %p199 = scmp.eq.s32.totalorder %s32, 0
      %p200 = por %p198, %p199
      %p201 = scmp.ne.s32.totalorder %s189, %s190
      %p202 = scmp.eq.s32.totalorder %s33, 1
      %p203 = por %p201, %p202
      %p205 = scmp.ne.s32.totalorder %s190, %s204
      %p206 = scmp.eq.s32.totalorder %s33, 0
      %p207 = por %p205, %p206
      %s209 = sadd.s32 %s208, 1
      %p212 = scmp.eq.s32.totalorder %s27, 1
      %p213 = scmp.ne.s32.totalorder %s208, %s210
      %p214 = scmp.eq.s32.totalorder %s27, 0
      %p215 = por %p213, %p214
      %p216 = scmp.ne.s32.totalorder %s208, %s210
      %p217 = scmp.eq.s32.totalorder %s32, 1
      %p218 = por %p216, %p217
      %p219 = scmp.ne.s32.totalorder %s210, %s211
      %p220 = scmp.eq.s32.totalorder %s32, 0
      %p221 = por %p219, %p220
      %p222 = scmp.ne.s32.totalorder %s210, %s211
      %p223 = scmp.eq.s32.totalorder %s33, 1
      %p224 = por %p222, %p223
      %p226 = scmp.ne.s32.totalorder %s211, %s225
      %p227 = scmp.eq.s32.totalorder %s33, 0
      %p228 = por %p226, %p227
      %s230 = sadd.s32 %s229, 1
      %p233 = scmp.eq.s32.totalorder %s27, 1
      %p234 = scmp.ne.s32.totalorder %s229, %s231
      %p235 = scmp.eq.s32.totalorder %s27, 0
      %p236 = por %p234, %p235
      %p237 = scmp.ne.s32.totalorder %s229, %s231
      %p238 = scmp.eq.s32.totalorder %s32, 1
      %p239 = por %p237, %p238
      %p240 = scmp.ne.s32.totalorder %s231, %s232
      %p241 = scmp.eq.s32.totalorder %s32, 0
      %p242 = por %p240, %p241
      %p243 = scmp.ne.s32.totalorder %s231, %s232
      %p244 = scmp.eq.s32.totalorder %s33, 1
      %p245 = por %p243, %p244
      %p247 = scmp.ne.s32.totalorder %s232, %s246
      %p248 = scmp.eq.s32.totalorder %s33, 0
      %p249 = por %p247, %p248
      %s251 = sadd.s32 %s250, 1
      %p254 = scmp.eq.s32.totalorder %s27, 1
      %p255 = scmp.ne.s32.totalorder %s250, %s252
      %p256 = scmp.eq.s32.totalorder %s27, 0
      %p257 = por %p255, %p256
      %p258 = scmp.ne.s32.totalorder %s250, %s252
      %p259 = scmp.eq.s32.totalorder %s32, 1
      %p260 = por %p258, %p259
      %p261 = scmp.ne.s32.totalorder %s252, %s253
      %p262 = scmp.eq.s32.totalorder %s32, 0
      %p263 = por %p261, %p262
      %p264 = scmp.ne.s32.totalorder %s252, %s253
      %p265 = scmp.eq.s32.totalorder %s33, 1
      %p266 = por %p264, %p265
      %p268 = scmp.ne.s32.totalorder %s253, %s267
      %p269 = scmp.eq.s32.totalorder %s33, 0
      %p270 = por %p268, %p269
      %s272 = sadd.s32 %s271, 1
      %p275 = scmp.eq.s32.totalorder %s27, 1
      %p276 = scmp.ne.s32.totalorder %s271, %s273
      %p277 = scmp.eq.s32.totalorder %s27, 0
      %p278 = por %p276, %p277
      %p279 = scmp.ne.s32.totalorder %s271, %s273
      %p280 = scmp.eq.s32.totalorder %s32, 1
      %p281 = por %p279, %p280
      %p282 = scmp.ne.s32.totalorder %s273, %s274
      %p283 = scmp.eq.s32.totalorder %s32, 0
      %p284 = por %p282, %p283
      %p285 = scmp.ne.s32.totalorder %s273, %s274
      %p286 = scmp.eq.s32.totalorder %s33, 1
      %p287 = por %p285, %p286
      %p289 = scmp.ne.s32.totalorder %s274, %s288
      %p290 = scmp.eq.s32.totalorder %s33, 0
      %p291 = por %p289, %p290
      %s293 = sadd.s32 %s292, 1
      %p296 = scmp.eq.s32.totalorder %s27, 1
      %p297 = scmp.ne.s32.totalorder %s292, %s294
      %p298 = scmp.eq.s32.totalorder %s27, 0
      %p299 = por %p297, %p298
      %p300 = scmp.ne.s32.totalorder %s292, %s294
      %p301 = scmp.eq.s32.totalorder %s32, 1
      %p302 = por %p300, %p301
      %p303 = scmp.ne.s32.totalorder %s294, %s295
      %p304 = scmp.eq.s32.totalorder %s32, 0
      %p305 = por %p303, %p304
      %p306 = scmp.ne.s32.totalorder %s294, %s295
      %p307 = scmp.eq.s32.totalorder %s33, 1
      %p308 = por %p306, %p307
      %p310 = scmp.ne.s32.totalorder %s295, %s309
      %p311 = scmp.eq.s32.totalorder %s33, 0
      %p312 = por %p310, %p311
      %s313 = ssub.s32 %s27, %s34
      %p314 = scmp.eq.s32.totalorder %s313, 0
      %s316 = sadd.s32 %s315, 1
      %s317 = scalar_select %p314, %s315, %s316
      %p320 = pneg %p314
      %p321 = scmp.eq.s32.totalorder %s27, 1
      %p322 = por %p320, %p321
      %p323 = scmp.ne.s32.totalorder %s315, %s318
      %p324 = scmp.eq.s32.totalorder %s27, 0
      %p325 = por %p323, %p324
      %p326 = scmp.ne.s32.totalorder %s315, %s318
      %p327 = scmp.eq.s32.totalorder %s32, 1
      %p328 = por %p326, %p327
      %p329 = scmp.ne.s32.totalorder %s318, %s319
      %p330 = scmp.eq.s32.totalorder %s32, 0
      %p331 = por %p329, %p330
      %p332 = scmp.ne.s32.totalorder %s318, %s319
      %p333 = scmp.eq.s32.totalorder %s33, 1
      %p334 = por %p332, %p333
      %p336 = scmp.ne.s32.totalorder %s319, %s335
      %p337 = scmp.eq.s32.totalorder %s33, 0
      %p338 = por %p336, %p337
      %p339 = scmp.le.s32.totalorder 1, %s27
      %p340 = scmp.lt.s32.totalorder %s27, 3
      %p341 = pnand %p339, %p340
      %p342 = pneg %p341
      // Predicated region
      $region9: #{tpu_custom_call.1} parent=5 // pred_check
        _
      $region10: #{tpu_custom_call.1} parent=5 // pred_check_branch
        %344 = sbr.rel (%p341) target = $region12
      $region11: #{tpu_custom_call.1} parent=5 // pred_region
        %s345 = ssub.s32 %s27, 1
        // Predicated region
        $region13: #{tpu_custom_call.1} parent=11 // pred_check
          %p346 = pneg %p74
        $region14: #{tpu_custom_call.1} parent=11 // pred_check_branch
          %348 = sbr.rel (%p346) target = $region16
        $region15: #{tpu_custom_call.1} parent=11 // pred_region
          %s350 = ssub.s32 512, 512
          %351 = vsyncadd [#allocation6], %s350
          %s352 = sshll.u32 [#allocation5], 4
          %s353 = int_to_ptr.vmem [resolvable:$true] %s352
          %358 = dma.hbm_to_vmem [thread:$0]  %s1, 512, %s353, [#allocation6], 128, 128, 8
        $region16: #{tpu_custom_call.1} parent=11 // pred_fallthru
          _
        // Predicated region
        $region17: #{tpu_custom_call.1} parent=11 // pred_check
          %p359 = pneg %p95
        $region18: #{tpu_custom_call.1} parent=11 // pred_check_branch
          %361 = sbr.rel (%p359) target = $region20
        $region19: #{tpu_custom_call.1} parent=11 // pred_region
          _
        $region20: #{tpu_custom_call.1} parent=11 // pred_fallthru
          _
        // Predicated region
        $region21: #{tpu_custom_call.1} parent=11 // pred_check
          %p362 = pneg %p116
        $region22: #{tpu_custom_call.1} parent=11 // pred_check_branch
          %364 = sbr.rel (%p362) target = $region24
        $region23: #{tpu_custom_call.1} parent=11 // pred_region
          %s366 = ssub.s32 512, 512
          %367 = vsyncadd [#allocation6], %s366
          %s368 = sshll.u32 [#allocation7], 4
          %s369 = int_to_ptr.vmem [resolvable:$true] %s368
          %374 = dma.hbm_to_vmem [thread:$0]  %s3, 512, %s369, [#allocation6], 128, 128, 8
        $region24: #{tpu_custom_call.1} parent=11 // pred_fallthru
          _
        // Predicated region
        $region25: #{tpu_custom_call.1} parent=11 // pred_check
          %p375 = pneg %p137
        $region26: #{tpu_custom_call.1} parent=11 // pred_check_branch
          %377 = sbr.rel (%p375) target = $region28
        $region27: #{tpu_custom_call.1} parent=11 // pred_region
          _
        $region28: #{tpu_custom_call.1} parent=11 // pred_fallthru
          _
        // Predicated region
        $region29: #{tpu_custom_call.1} parent=11 // pred_check
          %p378 = pneg %p158
        $region30: #{tpu_custom_call.1} parent=11 // pred_check_branch
          %380 = sbr.rel (%p378) target = $region32
        $region31: #{tpu_custom_call.1} parent=11 // pred_region
          _
        $region32: #{tpu_custom_call.1} parent=11 // pred_fallthru
          _
        // Predicated region
        $region33: #{tpu_custom_call.1} parent=11 // pred_check
          %p381 = pneg %p179
        $region34: #{tpu_custom_call.1} parent=11 // pred_check_branch
          %383 = sbr.rel (%p381) target = $region36
        $region35: #{tpu_custom_call.1} parent=11 // pred_region
          _
        $region36: #{tpu_custom_call.1} parent=11 // pred_fallthru
          _
        // Predicated region
        $region37: #{tpu_custom_call.1} parent=11 // pred_check
          %p384 = pneg %p200
        $region38: #{tpu_custom_call.1} parent=11 // pred_check_branch
          %386 = sbr.rel (%p384) target = $region40
        $region39: #{tpu_custom_call.1} parent=11 // pred_region
          %s388 = ssub.s32 512, 512
          %389 = vsyncadd [#allocation9], %s388
          %s390 = sshll.u32 [#allocation8], 4
          %s391 = int_to_ptr.vmem [resolvable:$true] %s390
          %396 = dma.hbm_to_vmem [thread:$0]  %s7, 512, %s391, [#allocation9], 128, 128, 8
        $region40: #{tpu_custom_call.1} parent=11 // pred_fallthru
          _
        // Predicated region
        $region41: #{tpu_custom_call.1} parent=11 // pred_check
          %p397 = pneg %p221
        $region42: #{tpu_custom_call.1} parent=11 // pred_check_branch
          %399 = sbr.rel (%p397) target = $region44
        $region43: #{tpu_custom_call.1} parent=11 // pred_region
          _
        $region44: #{tpu_custom_call.1} parent=11 // pred_fallthru
          _
        // Predicated region
        $region45: #{tpu_custom_call.1} parent=11 // pred_check
          %p400 = pneg %p242
        $region46: #{tpu_custom_call.1} parent=11 // pred_check_branch
          %402 = sbr.rel (%p400) target = $region48
        $region47: #{tpu_custom_call.1} parent=11 // pred_region
          _
        $region48: #{tpu_custom_call.1} parent=11 // pred_fallthru
          _
        // Predicated region
        $region49: #{tpu_custom_call.1} parent=11 // pred_check
          %p403 = pneg %p263
        $region50: #{tpu_custom_call.1} parent=11 // pred_check_branch
          %405 = sbr.rel (%p403) target = $region52
        $region51: #{tpu_custom_call.1} parent=11 // pred_region
          _
        $region52: #{tpu_custom_call.1} parent=11 // pred_fallthru
          _
        // Predicated region
        $region53: #{tpu_custom_call.1} parent=11 // pred_check
          %p406 = pneg %p284
        $region54: #{tpu_custom_call.1} parent=11 // pred_check_branch
          %408 = sbr.rel (%p406) target = $region56
        $region55: #{tpu_custom_call.1} parent=11 // pred_region
          _
        $region56: #{tpu_custom_call.1} parent=11 // pred_fallthru
          _
        // Predicated region
        $region57: #{tpu_custom_call.1} parent=11 // pred_check
          %p409 = pneg %p305
        $region58: #{tpu_custom_call.1} parent=11 // pred_check_branch
          %411 = sbr.rel (%p409) target = $region60
        $region59: #{tpu_custom_call.1} parent=11 // pred_region
          _
        $region60: #{tpu_custom_call.1} parent=11 // pred_fallthru
          _
      $region12: #{tpu_custom_call.1} parent=5 // pred_fallthru
        _
      %p412 = scmp.lt.s32.totalorder %s27, 2
      // Predicated region
      $region61: #{tpu_custom_call.1} parent=5 // pred_check
        %p413 = pneg %p412
      $region62: #{tpu_custom_call.1} parent=5 // pred_check_branch
        %415 = sbr.rel (%p413) target = $region64
      $region63: #{tpu_custom_call.1} parent=5 // pred_region
        // Predicated region
        $region65: #{tpu_custom_call.1} parent=63 // pred_check
          %p416 = pneg %p47
        $region66: #{tpu_custom_call.1} parent=63 // pred_check_branch
          %418 = sbr.rel (%p416) target = $region68
        $region67: #{tpu_custom_call.1} parent=63 // pred_region
          %s419 = sand.u32 %s37, 1
          %s420 = scalar_lea.sflag [#allocation3], %s419
          %s421 = sand.u32 %s37, 1
          %s422 = smul.addr %s421, 8
          %s423 = scalar_lea.vmem [#allocation2], %s422
          %s425 = ssub.s32 128, 128
          %426 = vsyncadd %s420, %s425
          %s427 = smul.addr %s27, 128
          %s428 = scalar_lea.hbm %s0, %s427
          %s430 = sshll.u32 %s423, 4
          %s431 = int_to_ptr.vmem [resolvable:$true] %s430
          %433 = dma.hbm_to_vmem [thread:$0]  %s428, 128, %s431, %s420
        $region68: #{tpu_custom_call.1} parent=63 // pred_fallthru
          _
      $region64: #{tpu_custom_call.1} parent=5 // pred_fallthru
        _
      %p434 = scmp.le.s32.totalorder 1, %s27
      %p435 = scmp.lt.s32.totalorder %s27, 3
      %p436 = pnand %p434, %p435
      %p437 = pneg %p436
      // Predicated region
      $region69: #{tpu_custom_call.1} parent=5 // pred_check
        _
      $region70: #{tpu_custom_call.1} parent=5 // pred_check_branch
        %439 = sbr.rel (%p436) target = $region72
      $region71: #{tpu_custom_call.1} parent=5 // pred_region
        %s440 = ssub.s32 %s27, 1
        %s441 = sand.u32 %s40, 1
        %s442 = scalar_lea.sflag [#allocation3], %s441
        %s443 = sand.u32 %s40, 1
        %s444 = smul.addr %s443, 8
        %s445 = scalar_lea.vmem [#allocation2], %s444
        // Predicated region
        $region73: #{tpu_custom_call.1} parent=71 // pred_check
          %p446 = pneg %p53
        $region74: #{tpu_custom_call.1} parent=71 // pred_check_branch
          %448 = sbr.rel (%p446) target = $region76
        $region75: #{tpu_custom_call.1} parent=71 // pred_region
          %449 = dma.done %s442, 128
        $region76: #{tpu_custom_call.1} parent=71 // pred_fallthru
          _
        // Predicated region
        $region77: #{tpu_custom_call.1} parent=71 // pred_check
          %p450 = pneg %p74
        $region78: #{tpu_custom_call.1} parent=71 // pred_check_branch
          %452 = sbr.rel (%p450) target = $region80
        $region79: #{tpu_custom_call.1} parent=71 // pred_region
          %453 = dma.done [#allocation6], 512
        $region80: #{tpu_custom_call.1} parent=71 // pred_fallthru
          _
        // Predicated region
        $region81: #{tpu_custom_call.1} parent=71 // pred_check
          %p454 = pneg %p116
        $region82: #{tpu_custom_call.1} parent=71 // pred_check_branch
          %456 = sbr.rel (%p454) target = $region84
        $region83: #{tpu_custom_call.1} parent=71 // pred_region
          %457 = dma.done [#allocation6], 512
        $region84: #{tpu_custom_call.1} parent=71 // pred_fallthru
          _
        // Predicated region
        $region85: #{tpu_custom_call.1} parent=71 // pred_check
          %p458 = pneg %p200
        $region86: #{tpu_custom_call.1} parent=71 // pred_check_branch
          %460 = sbr.rel (%p458) target = $region88
        $region87: #{tpu_custom_call.1} parent=71 // pred_region
          %461 = dma.done [#allocation9], 512
        $region88: #{tpu_custom_call.1} parent=71 // pred_fallthru
          _
        %s462 = sand.u32 %s40, 1
        %s463 = scalar_lea.sflag [#allocation3], %s462
        %s464 = sand.u32 %s40, 1
        %s465 = smul.addr %s464, 8
        %s466 = scalar_lea.vmem [#allocation2], %s465
        %p467 = pneg %p53
        %p468 = pneg %p50
        %p469 = pneg %p74
        %p470 = pneg %p71
        %p471 = pneg %p95
        %p472 = pneg %p92
        %p473 = pneg %p116
        %p474 = pneg %p113
        %p475 = pneg %p137
        %p476 = pneg %p134
        %p477 = pneg %p158
        %p478 = pneg %p155
        %p479 = pneg %p179
        %p480 = pneg %p176
        %p481 = pneg %p200
        %p482 = pneg %p197
        %p483 = pneg %p221
        %p484 = pneg %p218
        %p485 = pneg %p242
        %p486 = pneg %p239
        %p487 = pneg %p263
        %p488 = pneg %p260
        %p489 = pneg %p284
        %p490 = pneg %p281
        %p491 = pneg %p305
        %p492 = pneg %p302
        %p493 = pneg %p331
        %p494 = pneg %p328
        %s495 = sand.u32 %s318, 1
        %s496 = scalar_lea.sflag [#allocation4], %s495
        %s497 = sand.u32 %s318, 1
        %s498 = smul.addr %s497, 8
        %s499 = scalar_lea.vmem [#allocation10], %s498
        %v500 = vld [vmem:[%s445] sm:$0xff]
        %v501 = vld [vmem:[#allocation5] sm:$0xff]
        %v502 = vld [vmem:[#allocation5 + $0x8] sm:$0xff]
        %v503 = vld [vmem:[#allocation5 + $0x10] sm:$0xff]
        %v504 = vld [vmem:[#allocation5 + $0x18] sm:$0xff]
        %v505 = vld [vmem:[%s2] sm:$0x1]
        %v507 = vlaneseq
        %v508 = vshrl.u32 %v507, 7
        %v509 = vsub.s32 0, %v508
        %v510 = vrot.slane %v505, %v509
        %vm512 = vcmask 261120
        %v514 = vsel %vm512, %v500, 0
        %516 = vmatprep.subr.mxu0 0.0
        %517 = vmatpush1.msra.mxu0 %v501
        %518 = vmatprep.subr.mxu0 0.0
        %519 = vmatpush1.msra.mxu0 %v502
        %520 = vmatprep.subr.mxu0 0.0
        %521 = vmatpush1.msra.mxu0 %v503
        %522 = vmatprep.subr.mxu0 0.0
        %523 = vmatpush1.msra.mxu0 %v504
        %524 = vmatprep.subr.mxu0 0.0
        %525 = vmatpush1.msra.mxu0 0.0
        %526 = vmatprep.subr.mxu0 0.0
        %527 = vmatpush1.msra.mxu0 0.0
        %528 = vmatprep.subr.mxu0 0.0
        %529 = vmatpush1.msra.mxu0 0.0
        %530 = vmatprep.subr.mxu0 0.0
        %531 = vmatpush1.msra.mxu0 0.0
        %532 = vmatprep.subr.mxu0 0.0
        %533 = vmatpush1.msra.mxu0 0.0
        %534 = vmatprep.subr.mxu0 0.0
        %535 = vmatpush1.msra.mxu0 0.0
        %536 = vmatprep.subr.mxu0 0.0
        %537 = vmatpush1.msra.mxu0 0.0
        %538 = vmatprep.subr.mxu0 0.0
        %539 = vmatpush1.msra.mxu0 0.0
        %540 = vmatprep.subr.mxu0 0.0
        %541 = vmatpush1.msra.mxu0 0.0
        %542 = vmatprep.subr.mxu0 0.0
        %543 = vmatpush1.msra.mxu0 0.0
        %544 = vmatprep.subr.mxu0 0.0
        %545 = vmatpush1.msra.mxu0 0.0
        %546 = vmatprep.subr.mxu0 0.0
        %547 = vmatpush1.msra.mxu0 0.0
        %548 = vmatprep.subr.mxu0 0.0
        %549 = vmatpush1.msra.mxu0 0.0
        %550 = vmatprep.subr.mxu0 0.0
        %551 = vmatpush1.msra.mxu0 0.0
        %552 = vmatprep.subr.mxu0 0.0
        %553 = vmatpush1.msra.mxu0 0.0
        %554 = vmatprep.subr.mxu0 0.0
        %555 = vmatpush1.msra.mxu0 0.0
        %556 = vmatprep.subr.mxu0 0.0
        %557 = vmatpush1.msra.mxu0 0.0
        %558 = vmatprep.subr.mxu0 0.0
        %559 = vmatpush1.msra.mxu0 0.0
        %560 = vmatprep.subr.mxu0 0.0
        %561 = vmatpush1.msra.mxu0 0.0
        %562 = vmatprep.subr.mxu0 0.0
        %563 = vmatpush1.msra.mxu0 0.0
        %564 = vmatprep.subr.mxu0 0.0
        %565 = vmatpush1.msra.mxu0 0.0
        %566 = vmatprep.subr.mxu0 0.0
        %567 = vmatpush1.msra.mxu0 0.0
        %568 = vmatprep.subr.mxu0 0.0
        %569 = vmatpush1.msra.mxu0 0.0
        %570 = vmatprep.subr.mxu0 0.0
        %571 = vmatpush1.msra.mxu0 0.0
        %572 = vmatprep.subr.mxu0 0.0
        %573 = vmatpush1.msra.mxu0 0.0
        %574 = vmatprep.subr.mxu0 0.0
        %575 = vmatpush1.msra.mxu0 0.0
        %576 = vmatprep.subr.mxu0 0.0
        %577 = vmatpush1.msra.mxu0 0.0
        %578 = vmatprep.subr.mxu0 0.0
        %579 = vmatpush1.msra.mxu0 0.0
        %580 = vmatprep.mubr.f32.mxu0 0.0
        %581 = vmatmul.mubr.f32.gmra.mrb[0].mxu0 %v514
        %v582 = vpop.f32.mrb[0].mxu0
        %v583 = vadd.f32 %v510, %v582
        %v584 = vpop.f32.mrb[0].mxu0
        %585 = vdwg.mxu0
        %587 = vrot.lane.b32.xlu0 %v583, 120
        %v588 = vpop.permute.xlu0 %587
        %590 = vrot.lane.b32.xlu0 %v583, 112
        %v591 = vpop.permute.xlu0 %590
        %593 = vrot.lane.b32.xlu0 %v583, 104
        %v594 = vpop.permute.xlu0 %593
        %v596 = vcombine.low %v583, %v591
        %v597 = vcombine.high %v583, %v591
        %v599 = vunpack.c.l.s4 1983009808
        %v600 = vunpack.c.0.s8 %v599
        %v601 = vlaneseq
        %v602 = vshrl.u32 %v601, 7
        %v603 = vsub.s32 %v600, %v602
        %v604 = vrot.slane %v596, %v603
        %v606 = vunpack.c.l.s4 1983009808
        %v607 = vunpack.c.0.s8 %v606
        %v608 = vlaneseq
        %v609 = vshrl.u32 %v608, 7
        %v610 = vsub.s32 %v607, %v609
        %v611 = vrot.slane %v597, %v610
        %v612 = vcombine.low %v588, %v594
        %v613 = vcombine.high %v588, %v594
        %v615 = vunpack.c.l.s4 1983009808
        %v616 = vunpack.c.0.s8 %v615
        %v617 = vlaneseq
        %v618 = vshrl.u32 %v617, 7
        %v619 = vsub.s32 %v616, %v618
        %v620 = vrot.slane %v612, %v619
        %v622 = vunpack.c.l.s4 1983009808
        %v623 = vunpack.c.0.s8 %v622
        %v624 = vlaneseq
        %v625 = vshrl.u32 %v624, 7
        %v626 = vsub.s32 %v623, %v625
        %v627 = vrot.slane %v613, %v626
        %v628 = vcombine.low %v604, %v620
        %v629 = vcombine.high %v604, %v620
        %v631 = vunpack.c.l.s4 1934713408
        %v632 = vunpack.c.0.s8 %v631
        %v633 = vlaneseq
        %v634 = vshrl.u32 %v633, 7
        %v635 = vsub.s32 %v632, %v634
        %v636 = vrot.slane %v628, %v635
        %v638 = vunpack.c.l.s4 1934713408
        %v639 = vunpack.c.0.s8 %v638
        %v640 = vlaneseq
        %v641 = vshrl.u32 %v640, 7
        %v642 = vsub.s32 %v639, %v641
        %v643 = vrot.slane %v629, %v642
        %v644 = vcombine.low %v611, %v627
        %v645 = vcombine.high %v611, %v627
        %v647 = vunpack.c.l.s4 1934713408
        %v648 = vunpack.c.0.s8 %v647
        %v649 = vlaneseq
        %v650 = vshrl.u32 %v649, 7
        %v651 = vsub.s32 %v648, %v650
        %v652 = vrot.slane %v644, %v651
        %v654 = vunpack.c.l.s4 1934713408
        %v655 = vunpack.c.0.s8 %v654
        %v656 = vlaneseq
        %v657 = vshrl.u32 %v656, 7
        %v658 = vsub.s32 %v655, %v657
        %v659 = vrot.slane %v645, %v658
        %v660 = vcombine.high %v636, 0.0
        %v661 = vcombine.high %v643, 0.0
        %v662 = vcombine.high %v652, 0.0
        %v663 = vcombine.high %v659, 0.0
        %v664 = vcombine.low %v636, %v643
        %v666 = vunpack.c.l.s4 1983009808
        %v667 = vunpack.c.0.s8 %v666
        %v668 = vlaneseq
        %v669 = vshrl.u32 %v668, 7
        %v670 = vsub.s32 %v667, %v669
        %v671 = vrot.slane %v664, %v670
        %v672 = vcombine.low %v660, %v661
        %v674 = vunpack.c.l.s4 1983009808
        %v675 = vunpack.c.0.s8 %v674
        %v676 = vlaneseq
        %v677 = vshrl.u32 %v676, 7
        %v678 = vsub.s32 %v675, %v677
        %v679 = vrot.slane %v672, %v678
        %v680 = vcombine.low %v652, %v659
        %v682 = vunpack.c.l.s4 1983009808
        %v683 = vunpack.c.0.s8 %v682
        %v684 = vlaneseq
        %v685 = vshrl.u32 %v684, 7
        %v686 = vsub.s32 %v683, %v685
        %v687 = vrot.slane %v680, %v686
        %v688 = vcombine.low %v662, %v663
        %v690 = vunpack.c.l.s4 1983009808
        %v691 = vunpack.c.0.s8 %v690
        %v692 = vlaneseq
        %v693 = vshrl.u32 %v692, 7
        %v694 = vsub.s32 %v691, %v693
        %v695 = vrot.slane %v688, %v694
        %v696 = vcombine.low %v671, %v679
        %v697 = vcombine.high %v671, %v679
        %v699 = vunpack.c.l.s4 1934713408
        %v700 = vunpack.c.0.s8 %v699
        %v701 = vlaneseq
        %v702 = vshrl.u32 %v701, 7
        %v703 = vsub.s32 %v700, %v702
        %v704 = vrot.slane %v696, %v703
        %v706 = vunpack.c.l.s4 1934713408
        %v707 = vunpack.c.0.s8 %v706
        %v708 = vlaneseq
        %v709 = vshrl.u32 %v708, 7
        %v710 = vsub.s32 %v707, %v709
        %v711 = vrot.slane %v697, %v710
        %v712 = vcombine.low %v687, %v695
        %v713 = vcombine.high %v687, %v695
        %v715 = vunpack.c.l.s4 1934713408
        %v716 = vunpack.c.0.s8 %v715
        %v717 = vlaneseq
        %v718 = vshrl.u32 %v717, 7
        %v719 = vsub.s32 %v716, %v718
        %v720 = vrot.slane %v712, %v719
        %v722 = vunpack.c.l.s4 1934713408
        %v723 = vunpack.c.0.s8 %v722
        %v724 = vlaneseq
        %v725 = vshrl.u32 %v724, 7
        %v726 = vsub.s32 %v723, %v725
        %v727 = vrot.slane %v713, %v726
        %v728 = vcombine.low %v704, %v720
        %v729 = vcombine.high %v704, %v720
        %v730 = vcombine.low %v711, %v727
        %v731 = vcombine.high %v711, %v727
        %732 = vrot.lane.b32.xlu0 %v583, 96
        %v733 = vpop.permute.xlu0 %732
        %734 = vrot.lane.b32.xlu0 %v588, 96
        %v735 = vpop.permute.xlu0 %734
        %736 = vrot.lane.b32.xlu0 %v591, 96
        %v737 = vpop.permute.xlu0 %736
        %738 = vrot.lane.b32.xlu0 %v594, 96
        %v739 = vpop.permute.xlu0 %738
        %v744 = vcombine.low %v733, %v737
        %v745 = vcombine.high %v733, %v737
        %v747 = vunpack.c.l.s4 1983009808
        %v748 = vunpack.c.0.s8 %v747
        %v749 = vlaneseq
        %v750 = vshrl.u32 %v749, 7
        %v751 = vsub.s32 %v748, %v750
        %v752 = vrot.slane %v744, %v751
        %v754 = vunpack.c.l.s4 1983009808
        %v755 = vunpack.c.0.s8 %v754
        %v756 = vlaneseq
        %v757 = vshrl.u32 %v756, 7
        %v758 = vsub.s32 %v755, %v757
        %v759 = vrot.slane %v745, %v758
        %v760 = vcombine.low %v735, %v739
        %v761 = vcombine.high %v735, %v739
        %v763 = vunpack.c.l.s4 1983009808
        %v764 = vunpack.c.0.s8 %v763
        %v765 = vlaneseq
        %v766 = vshrl.u32 %v765, 7
        %v767 = vsub.s32 %v764, %v766
        %v768 = vrot.slane %v760, %v767
        %v770 = vunpack.c.l.s4 1983009808
        %v771 = vunpack.c.0.s8 %v770
        %v772 = vlaneseq
        %v773 = vshrl.u32 %v772, 7
        %v774 = vsub.s32 %v771, %v773
        %v775 = vrot.slane %v761, %v774
        %v776 = vcombine.low %v752, %v768
        %v777 = vcombine.high %v752, %v768
        %v779 = vunpack.c.l.s4 1934713408
        %v780 = vunpack.c.0.s8 %v779
        %v781 = vlaneseq
        %v782 = vshrl.u32 %v781, 7
        %v783 = vsub.s32 %v780, %v782
        %v784 = vrot.slane %v776, %v783
        %v786 = vunpack.c.l.s4 1934713408
        %v787 = vunpack.c.0.s8 %v786
        %v788 = vlaneseq
        %v789 = vshrl.u32 %v788, 7
        %v790 = vsub.s32 %v787, %v789
        %v791 = vrot.slane %v777, %v790
        %v792 = vcombine.low %v759, %v775
        %v793 = vcombine.high %v759, %v775
        %v795 = vunpack.c.l.s4 1934713408
        %v796 = vunpack.c.0.s8 %v795
        %v797 = vlaneseq
        %v798 = vshrl.u32 %v797, 7
        %v799 = vsub.s32 %v796, %v798
        %v800 = vrot.slane %v792, %v799
        %v802 = vunpack.c.l.s4 1934713408
        %v803 = vunpack.c.0.s8 %v802
        %v804 = vlaneseq
        %v805 = vshrl.u32 %v804, 7
        %v806 = vsub.s32 %v803, %v805
        %v807 = vrot.slane %v793, %v806
        %v808 = vcombine.high %v784, 0.0
        %v809 = vcombine.high %v791, 0.0
        %v810 = vcombine.high %v800, 0.0
        %v811 = vcombine.high %v807, 0.0
        %v812 = vcombine.low %v784, %v791
        %v814 = vunpack.c.l.s4 1983009808
        %v815 = vunpack.c.0.s8 %v814
        %v816 = vlaneseq
        %v817 = vshrl.u32 %v816, 7
        %v818 = vsub.s32 %v815, %v817
        %v819 = vrot.slane %v812, %v818
        %v820 = vcombine.low %v808, %v809
        %v822 = vunpack.c.l.s4 1983009808
        %v823 = vunpack.c.0.s8 %v822
        %v824 = vlaneseq
        %v825 = vshrl.u32 %v824, 7
        %v826 = vsub.s32 %v823, %v825
        %v827 = vrot.slane %v820, %v826
        %v828 = vcombine.low %v800, %v807
        %v830 = vunpack.c.l.s4 1983009808
        %v831 = vunpack.c.0.s8 %v830
        %v832 = vlaneseq
        %v833 = vshrl.u32 %v832, 7
        %v834 = vsub.s32 %v831, %v833
        %v835 = vrot.slane %v828, %v834
        %v836 = vcombine.low %v810, %v811
        %v838 = vunpack.c.l.s4 1983009808
        %v839 = vunpack.c.0.s8 %v838
        %v840 = vlaneseq
        %v841 = vshrl.u32 %v840, 7
        %v842 = vsub.s32 %v839, %v841
        %v843 = vrot.slane %v836, %v842
        %v844 = vcombine.low %v819, %v827
        %v845 = vcombine.high %v819, %v827
        %v847 = vunpack.c.l.s4 1934713408
        %v848 = vunpack.c.0.s8 %v847
        %v849 = vlaneseq
        %v850 = vshrl.u32 %v849, 7
        %v851 = vsub.s32 %v848, %v850
        %v852 = vrot.slane %v844, %v851
        %v854 = vunpack.c.l.s4 1934713408
        %v855 = vunpack.c.0.s8 %v854
        %v856 = vlaneseq
        %v857 = vshrl.u32 %v856, 7
        %v858 = vsub.s32 %v855, %v857
        %v859 = vrot.slane %v845, %v858
        %v860 = vcombine.low %v835, %v843
        %v861 = vcombine.high %v835, %v843
        %v863 = vunpack.c.l.s4 1934713408
        %v864 = vunpack.c.0.s8 %v863
        %v865 = vlaneseq
        %v866 = vshrl.u32 %v865, 7
        %v867 = vsub.s32 %v864, %v866
        %v868 = vrot.slane %v860, %v867
        %v870 = vunpack.c.l.s4 1934713408
        %v871 = vunpack.c.0.s8 %v870
        %v872 = vlaneseq
        %v873 = vshrl.u32 %v872, 7
        %v874 = vsub.s32 %v871, %v873
        %v875 = vrot.slane %v861, %v874
        %v876 = vcombine.low %v852, %v868
        %v877 = vcombine.high %v852, %v868
        %v878 = vcombine.low %v859, %v875
        %v879 = vcombine.high %v859, %v875
        %880 = vrot.lane.b32.xlu0 %v583, 64
        %v881 = vpop.permute.xlu0 %880
        %882 = vrot.lane.b32.xlu0 %v588, 64
        %v883 = vpop.permute.xlu0 %882
        %884 = vrot.lane.b32.xlu0 %v591, 64
        %v885 = vpop.permute.xlu0 %884
        %886 = vrot.lane.b32.xlu0 %v594, 64
        %v887 = vpop.permute.xlu0 %886
        %v892 = vcombine.low %v881, %v885
        %v893 = vcombine.high %v881, %v885
        %v895 = vunpack.c.l.s4 1983009808
        %v896 = vunpack.c.0.s8 %v895
        %v897 = vlaneseq
        %v898 = vshrl.u32 %v897, 7
        %v899 = vsub.s32 %v896, %v898
        %v900 = vrot.slane %v892, %v899
        %v902 = vunpack.c.l.s4 1983009808
        %v903 = vunpack.c.0.s8 %v902
        %v904 = vlaneseq
        %v905 = vshrl.u32 %v904, 7
        %v906 = vsub.s32 %v903, %v905
        %v907 = vrot.slane %v893, %v906
        %v908 = vcombine.low %v883, %v887
        %v909 = vcombine.high %v883, %v887
        %v911 = vunpack.c.l.s4 1983009808
        %v912 = vunpack.c.0.s8 %v911
        %v913 = vlaneseq
        %v914 = vshrl.u32 %v913, 7
        %v915 = vsub.s32 %v912, %v914
        %v916 = vrot.slane %v908, %v915
        %v918 = vunpack.c.l.s4 1983009808
        %v919 = vunpack.c.0.s8 %v918
        %v920 = vlaneseq
        %v921 = vshrl.u32 %v920, 7
        %v922 = vsub.s32 %v919, %v921
        %v923 = vrot.slane %v909, %v922
        %v924 = vcombine.low %v900, %v916
        %v925 = vcombine.high %v900, %v916
        %v927 = vunpack.c.l.s4 1934713408
        %v928 = vunpack.c.0.s8 %v927
        %v929 = vlaneseq
        %v930 = vshrl.u32 %v929, 7
        %v931 = vsub.s32 %v928, %v930
        %v932 = vrot.slane %v924, %v931
        %v934 = vunpack.c.l.s4 1934713408
        %v935 = vunpack.c.0.s8 %v934
        %v936 = vlaneseq
        %v937 = vshrl.u32 %v936, 7
        %v938 = vsub.s32 %v935, %v937
        %v939 = vrot.slane %v925, %v938
        %v940 = vcombine.low %v907, %v923
        %v941 = vcombine.high %v907, %v923
        %v943 = vunpack.c.l.s4 1934713408
        %v944 = vunpack.c.0.s8 %v943
        %v945 = vlaneseq
        %v946 = vshrl.u32 %v945, 7
        %v947 = vsub.s32 %v944, %v946
        %v948 = vrot.slane %v940, %v947
        %v950 = vunpack.c.l.s4 1934713408
        %v951 = vunpack.c.0.s8 %v950
        %v952 = vlaneseq
        %v953 = vshrl.u32 %v952, 7
        %v954 = vsub.s32 %v951, %v953
        %v955 = vrot.slane %v941, %v954
        %v956 = vcombine.high %v932, 0.0
        %v957 = vcombine.high %v939, 0.0
        %v958 = vcombine.high %v948, 0.0
        %v959 = vcombine.high %v955, 0.0
        %v960 = vcombine.low %v932, %v939
        %v962 = vunpack.c.l.s4 1983009808
        %v963 = vunpack.c.0.s8 %v962
        %v964 = vlaneseq
        %v965 = vshrl.u32 %v964, 7
        %v966 = vsub.s32 %v963, %v965
        %v967 = vrot.slane %v960, %v966
        %v968 = vcombine.low %v956, %v957
        %v970 = vunpack.c.l.s4 1983009808
        %v971 = vunpack.c.0.s8 %v970
        %v972 = vlaneseq
        %v973 = vshrl.u32 %v972, 7
        %v974 = vsub.s32 %v971, %v973
        %v975 = vrot.slane %v968, %v974
        %v976 = vcombine.low %v948, %v955
        %v978 = vunpack.c.l.s4 1983009808
        %v979 = vunpack.c.0.s8 %v978
        %v980 = vlaneseq
        %v981 = vshrl.u32 %v980, 7
        %v982 = vsub.s32 %v979, %v981
        %v983 = vrot.slane %v976, %v982
        %v984 = vcombine.low %v958, %v959
        %v986 = vunpack.c.l.s4 1983009808
        %v987 = vunpack.c.0.s8 %v986
        %v988 = vlaneseq
        %v989 = vshrl.u32 %v988, 7
        %v990 = vsub.s32 %v987, %v989
        %v991 = vrot.slane %v984, %v990
        %v992 = vcombine.low %v967, %v975
        %v993 = vcombine.high %v967, %v975
        %v995 = vunpack.c.l.s4 1934713408
        %v996 = vunpack.c.0.s8 %v995
        %v997 = vlaneseq
        %v998 = vshrl.u32 %v997, 7
        %v999 = vsub.s32 %v996, %v998
        %v1000 = vrot.slane %v992, %v999
        %v1002 = vunpack.c.l.s4 1934713408
        %v1003 = vunpack.c.0.s8 %v1002
        %v1004 = vlaneseq
        %v1005 = vshrl.u32 %v1004, 7
        %v1006 = vsub.s32 %v1003, %v1005
        %v1007 = vrot.slane %v993, %v1006
        %v1008 = vcombine.low %v983, %v991
        %v1009 = vcombine.high %v983, %v991
        %v1011 = vunpack.c.l.s4 1934713408
        %v1012 = vunpack.c.0.s8 %v1011
        %v1013 = vlaneseq
        %v1014 = vshrl.u32 %v1013, 7
        %v1015 = vsub.s32 %v1012, %v1014
        %v1016 = vrot.slane %v1008, %v1015
        %v1018 = vunpack.c.l.s4 1934713408
        %v1019 = vunpack.c.0.s8 %v1018
        %v1020 = vlaneseq
        %v1021 = vshrl.u32 %v1020, 7
        %v1022 = vsub.s32 %v1019, %v1021
        %v1023 = vrot.slane %v1009, %v1022
        %v1024 = vcombine.low %v1000, %v1016
        %v1025 = vcombine.high %v1000, %v1016
        %v1026 = vcombine.low %v1007, %v1023
        %v1027 = vcombine.high %v1007, %v1023
        %vm1028 = vcmask 64512
        %v1030 = vsel %vm1028, %v728, 0
        %v1033 = vsel %vm1028, %v876, 0
        %1035 = vmatprep.subr.mxu0 0.0
        %1036 = vmatpush1.xpose.msra.mxu0 %v1033
        %1037 = vmatprep.subr.mxu0 0.0
        %1038 = vmatpush1.xpose.msra.mxu0 0.0
        %1039 = vmatprep.subr.mxu0 0.0
        %1040 = vmatpush1.xpose.msra.mxu0 0.0
        %1041 = vmatprep.subr.mxu0 0.0
        %1042 = vmatpush1.xpose.msra.mxu0 0.0
        %1043 = vmatprep.subr.mxu0 0.0
        %1044 = vmatpush1.xpose.msra.mxu0 0.0
        %1045 = vmatprep.subr.mxu0 0.0
        %1046 = vmatpush1.xpose.msra.mxu0 0.0
        %1047 = vmatprep.subr.mxu0 0.0
        %1048 = vmatpush1.xpose.msra.mxu0 0.0
        %1049 = vmatprep.subr.mxu0 0.0
        %1050 = vmatpush1.xpose.msra.mxu0 0.0
        %1051 = vmatprep.subr.mxu0 0.0
        %1052 = vmatpush1.xpose.msra.mxu0 0.0
        %1053 = vmatprep.subr.mxu0 0.0
        %1054 = vmatpush1.xpose.msra.mxu0 0.0
        %1055 = vmatprep.subr.mxu0 0.0
        %1056 = vmatpush1.xpose.msra.mxu0 0.0
        %1057 = vmatprep.subr.mxu0 0.0
        %1058 = vmatpush1.xpose.msra.mxu0 0.0
        %1059 = vmatprep.subr.mxu0 0.0
        %1060 = vmatpush1.xpose.msra.mxu0 0.0
        %1061 = vmatprep.subr.mxu0 0.0
        %1062 = vmatpush1.xpose.msra.mxu0 0.0
        %1063 = vmatprep.subr.mxu0 0.0
        %1064 = vmatpush1.xpose.msra.mxu0 0.0
        %1065 = vmatprep.subr.mxu0 0.0
        %1066 = vmatpush1.xpose.msra.mxu0 0.0
        %1067 = vmatprep.subr.mxu0 0.0
        %1068 = vmatpush1.xpose.msra.mxu0 0.0
        %1069 = vmatprep.subr.mxu0 0.0
        %1070 = vmatpush1.xpose.msra.mxu0 0.0
        %1071 = vmatprep.subr.mxu0 0.0
        %1072 = vmatpush1.xpose.msra.mxu0 0.0
        %1073 = vmatprep.subr.mxu0 0.0
        %1074 = vmatpush1.xpose.msra.mxu0 0.0
        %1075 = vmatprep.subr.mxu0 0.0
        %1076 = vmatpush1.xpose.msra.mxu0 0.0
        %1077 = vmatprep.subr.mxu0 0.0
        %1078 = vmatpush1.xpose.msra.mxu0 0.0
        %1079 = vmatprep.subr.mxu0 0.0
        %1080 = vmatpush1.xpose.msra.mxu0 0.0
        %1081 = vmatprep.subr.mxu0 0.0
        %1082 = vmatpush1.xpose.msra.mxu0 0.0
        %1083 = vmatprep.subr.mxu0 0.0
        %1084 = vmatpush1.xpose.msra.mxu0 0.0
        %1085 = vmatprep.subr.mxu0 0.0
        %1086 = vmatpush1.xpose.msra.mxu0 0.0
        %1087 = vmatprep.subr.mxu0 0.0
        %1088 = vmatpush1.xpose.msra.mxu0 0.0
        %1089 = vmatprep.subr.mxu0 0.0
        %1090 = vmatpush1.xpose.msra.mxu0 0.0
        %1091 = vmatprep.subr.mxu0 0.0
        %1092 = vmatpush1.xpose.msra.mxu0 0.0
        %1093 = vmatprep.subr.mxu0 0.0
        %1094 = vmatpush1.xpose.msra.mxu0 0.0
        %1095 = vmatprep.subr.mxu0 0.0
        %1096 = vmatpush1.xpose.msra.mxu0 0.0
        %1097 = vmatprep.subr.mxu0 0.0
        %1098 = vmatpush1.xpose.msra.mxu0 0.0
        %1099 = vmatprep.mubr.f32.mxu0 0.0
        %1100 = vmatmul.mubr.f32.gmra.mrb[0].mxu0 %v1030
        %v1101 = vpop.f32.mrb[0].mxu0
        %v1102 = vadd.f32 0.0, %v1101
        %v1103 = vpop.f32.mrb[0].mxu0
        %1104 = vdwg.mxu0
        %v1106 = vsel %vm1028, %v729, 0
        %v1109 = vsel %vm1028, %v877, 0
        %1111 = vmatprep.subr.mxu0 0.0
        %1112 = vmatpush1.xpose.msra.mxu0 %v1109
        %1113 = vmatprep.subr.mxu0 0.0
        %1114 = vmatpush1.xpose.msra.mxu0 0.0
        %1115 = vmatprep.subr.mxu0 0.0
        %1116 = vmatpush1.xpose.msra.mxu0 0.0
        %1117 = vmatprep.subr.mxu0 0.0
        %1118 = vmatpush1.xpose.msra.mxu0 0.0
        %1119 = vmatprep.subr.mxu0 0.0
        %1120 = vmatpush1.xpose.msra.mxu0 0.0
        %1121 = vmatprep.subr.mxu0 0.0
        %1122 = vmatpush1.xpose.msra.mxu0 0.0
        %1123 = vmatprep.subr.mxu0 0.0
        %1124 = vmatpush1.xpose.msra.mxu0 0.0
        %1125 = vmatprep.subr.mxu0 0.0
        %1126 = vmatpush1.xpose.msra.mxu0 0.0
        %1127 = vmatprep.subr.mxu0 0.0
        %1128 = vmatpush1.xpose.msra.mxu0 0.0
        %1129 = vmatprep.subr.mxu0 0.0
        %1130 = vmatpush1.xpose.msra.mxu0 0.0
        %1131 = vmatprep.subr.mxu0 0.0
        %1132 = vmatpush1.xpose.msra.mxu0 0.0
        %1133 = vmatprep.subr.mxu0 0.0
        %1134 = vmatpush1.xpose.msra.mxu0 0.0
        %1135 = vmatprep.subr.mxu0 0.0
        %1136 = vmatpush1.xpose.msra.mxu0 0.0
        %1137 = vmatprep.subr.mxu0 0.0
        %1138 = vmatpush1.xpose.msra.mxu0 0.0
        %1139 = vmatprep.subr.mxu0 0.0
        %1140 = vmatpush1.xpose.msra.mxu0 0.0
        %1141 = vmatprep.subr.mxu0 0.0
        %1142 = vmatpush1.xpose.msra.mxu0 0.0
        %1143 = vmatprep.subr.mxu0 0.0
        %1144 = vmatpush1.xpose.msra.mxu0 0.0
        %1145 = vmatprep.subr.mxu0 0.0
        %1146 = vmatpush1.xpose.msra.mxu0 0.0
        %1147 = vmatprep.subr.mxu0 0.0
        %1148 = vmatpush1.xpose.msra.mxu0 0.0
        %1149 = vmatprep.subr.mxu0 0.0
        %1150 = vmatpush1.xpose.msra.mxu0 0.0
        %1151 = vmatprep.subr.mxu0 0.0
        %1152 = vmatpush1.xpose.msra.mxu0 0.0
        %1153 = vmatprep.subr.mxu0 0.0
        %1154 = vmatpush1.xpose.msra.mxu0 0.0
        %1155 = vmatprep.subr.mxu0 0.0
        %1156 = vmatpush1.xpose.msra.mxu0 0.0
        %1157 = vmatprep.subr.mxu0 0.0
        %1158 = vmatpush1.xpose.msra.mxu0 0.0
        %1159 = vmatprep.subr.mxu0 0.0
        %1160 = vmatpush1.xpose.msra.mxu0 0.0
        %1161 = vmatprep.subr.mxu0 0.0
        %1162 = vmatpush1.xpose.msra.mxu0 0.0
        %1163 = vmatprep.subr.mxu0 0.0
        %1164 = vmatpush1.xpose.msra.mxu0 0.0
        %1165 = vmatprep.subr.mxu0 0.0
        %1166 = vmatpush1.xpose.msra.mxu0 0.0
        %1167 = vmatprep.subr.mxu0 0.0
        %1168 = vmatpush1.xpose.msra.mxu0 0.0
        %1169 = vmatprep.subr.mxu0 0.0
        %1170 = vmatpush1.xpose.msra.mxu0 0.0
        %1171 = vmatprep.subr.mxu0 0.0
        %1172 = vmatpush1.xpose.msra.mxu0 0.0
        %1173 = vmatprep.subr.mxu0 0.0
        %1174 = vmatpush1.xpose.msra.mxu0 0.0
        %1175 = vmatprep.mubr.f32.mxu0 0.0
        %1176 = vmatmul.mubr.f32.gmra.mrb[0].mxu0 %v1106
        %v1177 = vpop.f32.mrb[0].mxu0
        %v1178 = vadd.f32 0.0, %v1177
        %v1179 = vpop.f32.mrb[0].mxu0
        %1180 = vdwg.mxu0
        %v1182 = vsel %vm1028, %v730, 0
        %v1185 = vsel %vm1028, %v878, 0
        %1187 = vmatprep.subr.mxu0 0.0
        %1188 = vmatpush1.xpose.msra.mxu0 %v1185
        %1189 = vmatprep.subr.mxu0 0.0
        %1190 = vmatpush1.xpose.msra.mxu0 0.0
        %1191 = vmatprep.subr.mxu0 0.0
        %1192 = vmatpush1.xpose.msra.mxu0 0.0
        %1193 = vmatprep.subr.mxu0 0.0
        %1194 = vmatpush1.xpose.msra.mxu0 0.0
        %1195 = vmatprep.subr.mxu0 0.0
        %1196 = vmatpush1.xpose.msra.mxu0 0.0
        %1197 = vmatprep.subr.mxu0 0.0
        %1198 = vmatpush1.xpose.msra.mxu0 0.0
        %1199 = vmatprep.subr.mxu0 0.0
        %1200 = vmatpush1.xpose.msra.mxu0 0.0
        %1201 = vmatprep.subr.mxu0 0.0
        %1202 = vmatpush1.xpose.msra.mxu0 0.0
        %1203 = vmatprep.subr.mxu0 0.0
        %1204 = vmatpush1.xpose.msra.mxu0 0.0
        %1205 = vmatprep.subr.mxu0 0.0
        %1206 = vmatpush1.xpose.msra.mxu0 0.0
        %1207 = vmatprep.subr.mxu0 0.0
        %1208 = vmatpush1.xpose.msra.mxu0 0.0
        %1209 = vmatprep.subr.mxu0 0.0
        %1210 = vmatpush1.xpose.msra.mxu0 0.0
        %1211 = vmatprep.subr.mxu0 0.0
        %1212 = vmatpush1.xpose.msra.mxu0 0.0
        %1213 = vmatprep.subr.mxu0 0.0
        %1214 = vmatpush1.xpose.msra.mxu0 0.0
        %1215 = vmatprep.subr.mxu0 0.0
        %1216 = vmatpush1.xpose.msra.mxu0 0.0
        %1217 = vmatprep.subr.mxu0 0.0
        %1218 = vmatpush1.xpose.msra.mxu0 0.0
        %1219 = vmatprep.subr.mxu0 0.0
        %1220 = vmatpush1.xpose.msra.mxu0 0.0
        %1221 = vmatprep.subr.mxu0 0.0
        %1222 = vmatpush1.xpose.msra.mxu0 0.0
        %1223 = vmatprep.subr.mxu0 0.0
        %1224 = vmatpush1.xpose.msra.mxu0 0.0
        %1225 = vmatprep.subr.mxu0 0.0
        %1226 = vmatpush1.xpose.msra.mxu0 0.0
        %1227 = vmatprep.subr.mxu0 0.0
        %1228 = vmatpush1.xpose.msra.mxu0 0.0
        %1229 = vmatprep.subr.mxu0 0.0
        %1230 = vmatpush1.xpose.msra.mxu0 0.0
        %1231 = vmatprep.subr.mxu0 0.0
        %1232 = vmatpush1.xpose.msra.mxu0 0.0
        %1233 = vmatprep.subr.mxu0 0.0
        %1234 = vmatpush1.xpose.msra.mxu0 0.0
        %1235 = vmatprep.subr.mxu0 0.0
        %1236 = vmatpush1.xpose.msra.mxu0 0.0
        %1237 = vmatprep.subr.mxu0 0.0
        %1238 = vmatpush1.xpose.msra.mxu0 0.0
        %1239 = vmatprep.subr.mxu0 0.0
        %1240 = vmatpush1.xpose.msra.mxu0 0.0
        %1241 = vmatprep.subr.mxu0 0.0
        %1242 = vmatpush1.xpose.msra.mxu0 0.0
        %1243 = vmatprep.subr.mxu0 0.0
        %1244 = vmatpush1.xpose.msra.mxu0 0.0
        %1245 = vmatprep.subr.mxu0 0.0
        %1246 = vmatpush1.xpose.msra.mxu0 0.0
        %1247 = vmatprep.subr.mxu0 0.0
        %1248 = vmatpush1.xpose.msra.mxu0 0.0
        %1249 = vmatprep.subr.mxu0 0.0
        %1250 = vmatpush1.xpose.msra.mxu0 0.0
        %1251 = vmatprep.mubr.f32.mxu0 0.0
        %1252 = vmatmul.mubr.f32.gmra.mrb[0].mxu0 %v1182
        %v1253 = vpop.f32.mrb[0].mxu0
        %v1254 = vadd.f32 0.0, %v1253
        %v1255 = vpop.f32.mrb[0].mxu0
        %1256 = vdwg.mxu0
        %v1258 = vsel %vm1028, %v731, 0
        %v1261 = vsel %vm1028, %v879, 0
        %1263 = vmatprep.subr.mxu0 0.0
        %1264 = vmatpush1.xpose.msra.mxu0 %v1261
        %1265 = vmatprep.subr.mxu0 0.0
        %1266 = vmatpush1.xpose.msra.mxu0 0.0
        %1267 = vmatprep.subr.mxu0 0.0
        %1268 = vmatpush1.xpose.msra.mxu0 0.0
        %1269 = vmatprep.subr.mxu0 0.0
        %1270 = vmatpush1.xpose.msra.mxu0 0.0
        %1271 = vmatprep.subr.mxu0 0.0
        %1272 = vmatpush1.xpose.msra.mxu0 0.0
        %1273 = vmatprep.subr.mxu0 0.0
        %1274 = vmatpush1.xpose.msra.mxu0 0.0
        %1275 = vmatprep.subr.mxu0 0.0
        %1276 = vmatpush1.xpose.msra.mxu0 0.0
        %1277 = vmatprep.subr.mxu0 0.0
        %1278 = vmatpush1.xpose.msra.mxu0 0.0
        %1279 = vmatprep.subr.mxu0 0.0
        %1280 = vmatpush1.xpose.msra.mxu0 0.0
        %1281 = vmatprep.subr.mxu0 0.0
        %1282 = vmatpush1.xpose.msra.mxu0 0.0
        %1283 = vmatprep.subr.mxu0 0.0
        %1284 = vmatpush1.xpose.msra.mxu0 0.0
        %1285 = vmatprep.subr.mxu0 0.0
        %1286 = vmatpush1.xpose.msra.mxu0 0.0
        %1287 = vmatprep.subr.mxu0 0.0
        %1288 = vmatpush1.xpose.msra.mxu0 0.0
        %1289 = vmatprep.subr.mxu0 0.0
        %1290 = vmatpush1.xpose.msra.mxu0 0.0
        %1291 = vmatprep.subr.mxu0 0.0
        %1292 = vmatpush1.xpose.msra.mxu0 0.0
        %1293 = vmatprep.subr.mxu0 0.0
        %1294 = vmatpush1.xpose.msra.mxu0 0.0
        %1295 = vmatprep.subr.mxu0 0.0
        %1296 = vmatpush1.xpose.msra.mxu0 0.0
        %1297 = vmatprep.subr.mxu0 0.0
        %1298 = vmatpush1.xpose.msra.mxu0 0.0
        %1299 = vmatprep.subr.mxu0 0.0
        %1300 = vmatpush1.xpose.msra.mxu0 0.0
        %1301 = vmatprep.subr.mxu0 0.0
        %1302 = vmatpush1.xpose.msra.mxu0 0.0
        %1303 = vmatprep.subr.mxu0 0.0
        %1304 = vmatpush1.xpose.msra.mxu0 0.0
        %1305 = vmatprep.subr.mxu0 0.0
        %1306 = vmatpush1.xpose.msra.mxu0 0.0
        %1307 = vmatprep.subr.mxu0 0.0
        %1308 = vmatpush1.xpose.msra.mxu0 0.0
        %1309 = vmatprep.subr.mxu0 0.0
        %1310 = vmatpush1.xpose.msra.mxu0 0.0
        %1311 = vmatprep.subr.mxu0 0.0
        %1312 = vmatpush1.xpose.msra.mxu0 0.0
        %1313 = vmatprep.subr.mxu0 0.0
        %1314 = vmatpush1.xpose.msra.mxu0 0.0
        %1315 = vmatprep.subr.mxu0 0.0
        %1316 = vmatpush1.xpose.msra.mxu0 0.0
        %1317 = vmatprep.subr.mxu0 0.0
        %1318 = vmatpush1.xpose.msra.mxu0 0.0
        %1319 = vmatprep.subr.mxu0 0.0
        %1320 = vmatpush1.xpose.msra.mxu0 0.0
        %1321 = vmatprep.subr.mxu0 0.0
        %1322 = vmatpush1.xpose.msra.mxu0 0.0
        %1323 = vmatprep.subr.mxu0 0.0
        %1324 = vmatpush1.xpose.msra.mxu0 0.0
        %1325 = vmatprep.subr.mxu0 0.0
        %1326 = vmatpush1.xpose.msra.mxu0 0.0
        %1327 = vmatprep.mubr.f32.mxu0 0.0
        %1328 = vmatmul.mubr.f32.gmra.mrb[0].mxu0 %v1258
        %v1329 = vpop.f32.mrb[0].mxu0
        %v1330 = vadd.f32 0.0, %v1329
        %v1331 = vpop.f32.mrb[0].mxu0
        %1332 = vdwg.mxu0
        %v1333 = vsel %vm1028, %v1102, -inf
        %1334 = vmax.xlane.f32.xlu0 %v1333
        %v1335 = vpop.xlane.xlu0 %1334
        %v1336 = vsel %vm1028, %v1178, -inf
        %1337 = vmax.xlane.f32.xlu0 %v1336
        %v1338 = vpop.xlane.xlu0 %1337
        %v1339 = vsel %vm1028, %v1254, -inf
        %1340 = vmax.xlane.f32.xlu0 %v1339
        %v1341 = vpop.xlane.xlu0 %1340
        %v1342 = vsel %vm1028, %v1330, -inf
        %1343 = vmax.xlane.f32.xlu0 %v1342
        %v1344 = vpop.xlane.xlu0 %1343
        %v1345 = vsub.f32 %v1102, %v1335
        %v1346 = vsub.f32 %v1178, %v1338
        %v1347 = vsub.f32 %v1254, %v1341
        %v1348 = vsub.f32 %v1330, %v1344
        %v1349 = vmul.f32 %v1345, 1.442695
        %v1350 = vpow.pop %v1349
        %v1351 = vmul.f32 %v1346, 1.442695
        %v1352 = vpow.pop %v1351
        %v1353 = vmul.f32 %v1347, 1.442695
        %v1354 = vpow.pop %v1353
        %v1355 = vmul.f32 %v1348, 1.442695
        %v1356 = vpow.pop %v1355
        %v1357 = vsel %vm1028, %v1350, 0.0
        %1358 = vadd.xlane.f32.xlu0 %v1357
        %v1359 = vpop.xlane.xlu0 %1358
        %v1360 = vsel %vm1028, %v1352, 0.0
        %1361 = vadd.xlane.f32.xlu0 %v1360
        %v1362 = vpop.xlane.xlu0 %1361
        %v1363 = vsel %vm1028, %v1354, 0.0
        %1364 = vadd.xlane.f32.xlu0 %v1363
        %v1365 = vpop.xlane.xlu0 %1364
        %v1366 = vsel %vm1028, %v1356, 0.0
        %1367 = vadd.xlane.f32.xlu0 %v1366
        %v1368 = vpop.xlane.xlu0 %1367
        %v1369 = vrcp.pop %v1359
        %v1370 = vrcp.pop %v1362
        %v1371 = vrcp.pop %v1365
        %v1372 = vrcp.pop %v1368
        %v1373 = vmul.f32 %v1350, %v1369
        %v1374 = vmul.f32 %v1352, %v1370
        %v1375 = vmul.f32 %v1354, %v1371
        %v1376 = vmul.f32 %v1356, %v1372
        %v1378 = vsel %vm1028, %v1373, 0
        %1380 = vmatprep.subr.mxu0 0.0
        %1381 = vmatpush1.msra.mxu0 %v1024
        %1382 = vmatprep.subr.mxu0 0.0
        %1383 = vmatpush1.msra.mxu0 0.0
        %1384 = vmatprep.subr.mxu0 0.0
        %1385 = vmatpush1.msra.mxu0 0.0
        %1386 = vmatprep.subr.mxu0 0.0
        %1387 = vmatpush1.msra.mxu0 0.0
        %1388 = vmatprep.subr.mxu0 0.0
        %1389 = vmatpush1.msra.mxu0 0.0
        %1390 = vmatprep.subr.mxu0 0.0
        %1391 = vmatpush1.msra.mxu0 0.0
        %1392 = vmatprep.subr.mxu0 0.0
        %1393 = vmatpush1.msra.mxu0 0.0
        %1394 = vmatprep.subr.mxu0 0.0
        %1395 = vmatpush1.msra.mxu0 0.0
        %1396 = vmatprep.subr.mxu0 0.0
        %1397 = vmatpush1.msra.mxu0 0.0
        %1398 = vmatprep.subr.mxu0 0.0
        %1399 = vmatpush1.msra.mxu0 0.0
        %1400 = vmatprep.subr.mxu0 0.0
        %1401 = vmatpush1.msra.mxu0 0.0
        %1402 = vmatprep.subr.mxu0 0.0
        %1403 = vmatpush1.msra.mxu0 0.0
        %1404 = vmatprep.subr.mxu0 0.0
        %1405 = vmatpush1.msra.mxu0 0.0
        %1406 = vmatprep.subr.mxu0 0.0
        %1407 = vmatpush1.msra.mxu0 0.0
        %1408 = vmatprep.subr.mxu0 0.0
        %1409 = vmatpush1.msra.mxu0 0.0
        %1410 = vmatprep.subr.mxu0 0.0
        %1411 = vmatpush1.msra.mxu0 0.0
        %1412 = vmatprep.subr.mxu0 0.0
        %1413 = vmatpush1.msra.mxu0 0.0
        %1414 = vmatprep.subr.mxu0 0.0
        %1415 = vmatpush1.msra.mxu0 0.0
        %1416 = vmatprep.subr.mxu0 0.0
        %1417 = vmatpush1.msra.mxu0 0.0
        %1418 = vmatprep.subr.mxu0 0.0
        %1419 = vmatpush1.msra.mxu0 0.0
        %1420 = vmatprep.subr.mxu0 0.0
        %1421 = vmatpush1.msra.mxu0 0.0
        %1422 = vmatprep.subr.mxu0 0.0
        %1423 = vmatpush1.msra.mxu0 0.0
        %1424 = vmatprep.subr.mxu0 0.0
        %1425 = vmatpush1.msra.mxu0 0.0
        %1426 = vmatprep.subr.mxu0 0.0
        %1427 = vmatpush1.msra.mxu0 0.0
        %1428 = vmatprep.subr.mxu0 0.0
        %1429 = vmatpush1.msra.mxu0 0.0
        %1430 = vmatprep.subr.mxu0 0.0
        %1431 = vmatpush1.msra.mxu0 0.0
        %1432 = vmatprep.subr.mxu0 0.0
        %1433 = vmatpush1.msra.mxu0 0.0
        %1434 = vmatprep.subr.mxu0 0.0
        %1435 = vmatpush1.msra.mxu0 0.0
        %1436 = vmatprep.subr.mxu0 0.0
        %1437 = vmatpush1.msra.mxu0 0.0
        %1438 = vmatprep.subr.mxu0 0.0
        %1439 = vmatpush1.msra.mxu0 0.0
        %1440 = vmatprep.subr.mxu0 0.0
        %1441 = vmatpush1.msra.mxu0 0.0
        %1442 = vmatprep.subr.mxu0 0.0
        %1443 = vmatpush1.msra.mxu0 0.0
        %1444 = vmatprep.mubr.f32.mxu0 0.0
        %1445 = vmatmul.mubr.f32.gmra.mrb[0].mxu0 %v1378
        %v1446 = vpop.f32.mrb[0].mxu0
        %v1447 = vadd.f32 0.0, %v1446
        %v1448 = vpop.f32.mrb[0].mxu0
        %1449 = vdwg.mxu0
        %v1451 = vsel %vm1028, %v1374, 0
        %1453 = vmatprep.subr.mxu0 0.0
        %1454 = vmatpush1.msra.mxu0 %v1025
        %1455 = vmatprep.subr.mxu0 0.0
        %1456 = vmatpush1.msra.mxu0 0.0
        %1457 = vmatprep.subr.mxu0 0.0
        %1458 = vmatpush1.msra.mxu0 0.0
        %1459 = vmatprep.subr.mxu0 0.0
        %1460 = vmatpush1.msra.mxu0 0.0
        %1461 = vmatprep.subr.mxu0 0.0
        %1462 = vmatpush1.msra.mxu0 0.0
        %1463 = vmatprep.subr.mxu0 0.0
        %1464 = vmatpush1.msra.mxu0 0.0
        %1465 = vmatprep.subr.mxu0 0.0
        %1466 = vmatpush1.msra.mxu0 0.0
        %1467 = vmatprep.subr.mxu0 0.0
        %1468 = vmatpush1.msra.mxu0 0.0
        %1469 = vmatprep.subr.mxu0 0.0
        %1470 = vmatpush1.msra.mxu0 0.0
        %1471 = vmatprep.subr.mxu0 0.0
        %1472 = vmatpush1.msra.mxu0 0.0
        %1473 = vmatprep.subr.mxu0 0.0
        %1474 = vmatpush1.msra.mxu0 0.0
        %1475 = vmatprep.subr.mxu0 0.0
        %1476 = vmatpush1.msra.mxu0 0.0
        %1477 = vmatprep.subr.mxu0 0.0
        %1478 = vmatpush1.msra.mxu0 0.0
        %1479 = vmatprep.subr.mxu0 0.0
        %1480 = vmatpush1.msra.mxu0 0.0
        %1481 = vmatprep.subr.mxu0 0.0
        %1482 = vmatpush1.msra.mxu0 0.0
        %1483 = vmatprep.subr.mxu0 0.0
        %1484 = vmatpush1.msra.mxu0 0.0
        %1485 = vmatprep.subr.mxu0 0.0
        %1486 = vmatpush1.msra.mxu0 0.0
        %1487 = vmatprep.subr.mxu0 0.0
        %1488 = vmatpush1.msra.mxu0 0.0
        %1489 = vmatprep.subr.mxu0 0.0
        %1490 = vmatpush1.msra.mxu0 0.0
        %1491 = vmatprep.subr.mxu0 0.0
        %1492 = vmatpush1.msra.mxu0 0.0
        %1493 = vmatprep.subr.mxu0 0.0
        %1494 = vmatpush1.msra.mxu0 0.0
        %1495 = vmatprep.subr.mxu0 0.0
        %1496 = vmatpush1.msra.mxu0 0.0
        %1497 = vmatprep.subr.mxu0 0.0
        %1498 = vmatpush1.msra.mxu0 0.0
        %1499 = vmatprep.subr.mxu0 0.0
        %1500 = vmatpush1.msra.mxu0 0.0
        %1501 = vmatprep.subr.mxu0 0.0
        %1502 = vmatpush1.msra.mxu0 0.0
        %1503 = vmatprep.subr.mxu0 0.0
        %1504 = vmatpush1.msra.mxu0 0.0
        %1505 = vmatprep.subr.mxu0 0.0
        %1506 = vmatpush1.msra.mxu0 0.0
        %1507 = vmatprep.subr.mxu0 0.0
        %1508 = vmatpush1.msra.mxu0 0.0
        %1509 = vmatprep.subr.mxu0 0.0
        %1510 = vmatpush1.msra.mxu0 0.0
        %1511 = vmatprep.subr.mxu0 0.0
        %1512 = vmatpush1.msra.mxu0 0.0
        %1513 = vmatprep.subr.mxu0 0.0
        %1514 = vmatpush1.msra.mxu0 0.0
        %1515 = vmatprep.subr.mxu0 0.0
        %1516 = vmatpush1.msra.mxu0 0.0
        %1517 = vmatprep.mubr.f32.mxu0 0.0
        %1518 = vmatmul.mubr.f32.gmra.mrb[0].mxu0 %v1451
        %v1519 = vpop.f32.mrb[0].mxu0
        %v1520 = vadd.f32 0.0, %v1519
        %v1521 = vpop.f32.mrb[0].mxu0
        %1522 = vdwg.mxu0
        %v1524 = vsel %vm1028, %v1375, 0
        %1526 = vmatprep.subr.mxu0 0.0
        %1527 = vmatpush1.msra.mxu0 %v1026
        %1528 = vmatprep.subr.mxu0 0.0
        %1529 = vmatpush1.msra.mxu0 0.0
        %1530 = vmatprep.subr.mxu0 0.0
        %1531 = vmatpush1.msra.mxu0 0.0
        %1532 = vmatprep.subr.mxu0 0.0
        %1533 = vmatpush1.msra.mxu0 0.0
        %1534 = vmatprep.subr.mxu0 0.0
        %1535 = vmatpush1.msra.mxu0 0.0
        %1536 = vmatprep.subr.mxu0 0.0
        %1537 = vmatpush1.msra.mxu0 0.0
        %1538 = vmatprep.subr.mxu0 0.0
        %1539 = vmatpush1.msra.mxu0 0.0
        %1540 = vmatprep.subr.mxu0 0.0
        %1541 = vmatpush1.msra.mxu0 0.0
        %1542 = vmatprep.subr.mxu0 0.0
        %1543 = vmatpush1.msra.mxu0 0.0
        %1544 = vmatprep.subr.mxu0 0.0
        %1545 = vmatpush1.msra.mxu0 0.0
        %1546 = vmatprep.subr.mxu0 0.0
        %1547 = vmatpush1.msra.mxu0 0.0
        %1548 = vmatprep.subr.mxu0 0.0
        %1549 = vmatpush1.msra.mxu0 0.0
        %1550 = vmatprep.subr.mxu0 0.0
        %1551 = vmatpush1.msra.mxu0 0.0
        %1552 = vmatprep.subr.mxu0 0.0
        %1553 = vmatpush1.msra.mxu0 0.0
        %1554 = vmatprep.subr.mxu0 0.0
        %1555 = vmatpush1.msra.mxu0 0.0
        %1556 = vmatprep.subr.mxu0 0.0
        %1557 = vmatpush1.msra.mxu0 0.0
        %1558 = vmatprep.subr.mxu0 0.0
        %1559 = vmatpush1.msra.mxu0 0.0
        %1560 = vmatprep.subr.mxu0 0.0
        %1561 = vmatpush1.msra.mxu0 0.0
        %1562 = vmatprep.subr.mxu0 0.0
        %1563 = vmatpush1.msra.mxu0 0.0
        %1564 = vmatprep.subr.mxu0 0.0
        %1565 = vmatpush1.msra.mxu0 0.0
        %1566 = vmatprep.subr.mxu0 0.0
        %1567 = vmatpush1.msra.mxu0 0.0
        %1568 = vmatprep.subr.mxu0 0.0
        %1569 = vmatpush1.msra.mxu0 0.0
        %1570 = vmatprep.subr.mxu0 0.0
        %1571 = vmatpush1.msra.mxu0 0.0
        %1572 = vmatprep.subr.mxu0 0.0
        %1573 = vmatpush1.msra.mxu0 0.0
        %1574 = vmatprep.subr.mxu0 0.0
        %1575 = vmatpush1.msra.mxu0 0.0
        %1576 = vmatprep.subr.mxu0 0.0
        %1577 = vmatpush1.msra.mxu0 0.0
        %1578 = vmatprep.subr.mxu0 0.0
        %1579 = vmatpush1.msra.mxu0 0.0
        %1580 = vmatprep.subr.mxu0 0.0
        %1581 = vmatpush1.msra.mxu0 0.0
        %1582 = vmatprep.subr.mxu0 0.0
        %1583 = vmatpush1.msra.mxu0 0.0
        %1584 = vmatprep.subr.mxu0 0.0
        %1585 = vmatpush1.msra.mxu0 0.0
        %1586 = vmatprep.subr.mxu0 0.0
        %1587 = vmatpush1.msra.mxu0 0.0
        %1588 = vmatprep.subr.mxu0 0.0
        %1589 = vmatpush1.msra.mxu0 0.0
        %1590 = vmatprep.mubr.f32.mxu0 0.0
        %1591 = vmatmul.mubr.f32.gmra.mrb[0].mxu0 %v1524
        %v1592 = vpop.f32.mrb[0].mxu0
        %v1593 = vadd.f32 0.0, %v1592
        %v1594 = vpop.f32.mrb[0].mxu0
        %1595 = vdwg.mxu0
        %v1597 = vsel %vm1028, %v1376, 0
        %1599 = vmatprep.subr.mxu0 0.0
        %1600 = vmatpush1.msra.mxu0 %v1027
        %1601 = vmatprep.subr.mxu0 0.0
        %1602 = vmatpush1.msra.mxu0 0.0
        %1603 = vmatprep.subr.mxu0 0.0
        %1604 = vmatpush1.msra.mxu0 0.0
        %1605 = vmatprep.subr.mxu0 0.0
        %1606 = vmatpush1.msra.mxu0 0.0
        %1607 = vmatprep.subr.mxu0 0.0
        %1608 = vmatpush1.msra.mxu0 0.0
        %1609 = vmatprep.subr.mxu0 0.0
        %1610 = vmatpush1.msra.mxu0 0.0
        %1611 = vmatprep.subr.mxu0 0.0
        %1612 = vmatpush1.msra.mxu0 0.0
        %1613 = vmatprep.subr.mxu0 0.0
        %1614 = vmatpush1.msra.mxu0 0.0
        %1615 = vmatprep.subr.mxu0 0.0
        %1616 = vmatpush1.msra.mxu0 0.0
        %1617 = vmatprep.subr.mxu0 0.0
        %1618 = vmatpush1.msra.mxu0 0.0
        %1619 = vmatprep.subr.mxu0 0.0
        %1620 = vmatpush1.msra.mxu0 0.0
        %1621 = vmatprep.subr.mxu0 0.0
        %1622 = vmatpush1.msra.mxu0 0.0
        %1623 = vmatprep.subr.mxu0 0.0
        %1624 = vmatpush1.msra.mxu0 0.0
        %1625 = vmatprep.subr.mxu0 0.0
        %1626 = vmatpush1.msra.mxu0 0.0
        %1627 = vmatprep.subr.mxu0 0.0
        %1628 = vmatpush1.msra.mxu0 0.0
        %1629 = vmatprep.subr.mxu0 0.0
        %1630 = vmatpush1.msra.mxu0 0.0
        %1631 = vmatprep.subr.mxu0 0.0
        %1632 = vmatpush1.msra.mxu0 0.0
        %1633 = vmatprep.subr.mxu0 0.0
        %1634 = vmatpush1.msra.mxu0 0.0
        %1635 = vmatprep.subr.mxu0 0.0
        %1636 = vmatpush1.msra.mxu0 0.0
        %1637 = vmatprep.subr.mxu0 0.0
        %1638 = vmatpush1.msra.mxu0 0.0
        %1639 = vmatprep.subr.mxu0 0.0
        %1640 = vmatpush1.msra.mxu0 0.0
        %1641 = vmatprep.subr.mxu0 0.0
        %1642 = vmatpush1.msra.mxu0 0.0
        %1643 = vmatprep.subr.mxu0 0.0
        %1644 = vmatpush1.msra.mxu0 0.0
        %1645 = vmatprep.subr.mxu0 0.0
        %1646 = vmatpush1.msra.mxu0 0.0
        %1647 = vmatprep.subr.mxu0 0.0
        %1648 = vmatpush1.msra.mxu0 0.0
        %1649 = vmatprep.subr.mxu0 0.0
        %1650 = vmatpush1.msra.mxu0 0.0
        %1651 = vmatprep.subr.mxu0 0.0
        %1652 = vmatpush1.msra.mxu0 0.0
        %1653 = vmatprep.subr.mxu0 0.0
        %1654 = vmatpush1.msra.mxu0 0.0
        %1655 = vmatprep.subr.mxu0 0.0
        %1656 = vmatpush1.msra.mxu0 0.0
        %1657 = vmatprep.subr.mxu0 0.0
        %1658 = vmatpush1.msra.mxu0 0.0
        %1659 = vmatprep.subr.mxu0 0.0
        %1660 = vmatpush1.msra.mxu0 0.0
        %1661 = vmatprep.subr.mxu0 0.0
        %1662 = vmatpush1.msra.mxu0 0.0
        %1663 = vmatprep.mubr.f32.mxu0 0.0
        %1664 = vmatmul.mubr.f32.gmra.mrb[0].mxu0 %v1597
        %v1665 = vpop.f32.mrb[0].mxu0
        %v1666 = vadd.f32 0.0, %v1665
        %v1667 = vpop.f32.mrb[0].mxu0
        %1668 = vdwg.mxu0
        %v1669 = vcombine.low %v1447, %v1593
        %v1670 = vcombine.high %v1447, %v1593
        %v1672 = vunpack.c.l.s4 1983009808
        %v1673 = vunpack.c.0.s8 %v1672
        %v1674 = vlaneseq
        %v1675 = vshrl.u32 %v1674, 7
        %v1676 = vsub.s32 %v1673, %v1675
        %v1677 = vrot.slane %v1669, %v1676
        %v1679 = vunpack.c.l.s4 1983009808
        %v1680 = vunpack.c.0.s8 %v1679
        %v1681 = vlaneseq
        %v1682 = vshrl.u32 %v1681, 7
        %v1683 = vsub.s32 %v1680, %v1682
        %v1684 = vrot.slane %v1670, %v1683
        %v1685 = vcombine.low %v1520, %v1666
        %v1686 = vcombine.high %v1520, %v1666
        %v1688 = vunpack.c.l.s4 1983009808
        %v1689 = vunpack.c.0.s8 %v1688
        %v1690 = vlaneseq
        %v1691 = vshrl.u32 %v1690, 7
        %v1692 = vsub.s32 %v1689, %v1691
        %v1693 = vrot.slane %v1685, %v1692
        %v1695 = vunpack.c.l.s4 1983009808
        %v1696 = vunpack.c.0.s8 %v1695
        %v1697 = vlaneseq
        %v1698 = vshrl.u32 %v1697, 7
        %v1699 = vsub.s32 %v1696, %v1698
        %v1700 = vrot.slane %v1686, %v1699
        %v1701 = vcombine.low %v1677, %v1693
        %v1702 = vcombine.high %v1677, %v1693
        %v1704 = vunpack.c.l.s4 1934713408
        %v1705 = vunpack.c.0.s8 %v1704
        %v1706 = vlaneseq
        %v1707 = vshrl.u32 %v1706, 7
        %v1708 = vsub.s32 %v1705, %v1707
        %v1709 = vrot.slane %v1701, %v1708
        %v1711 = vunpack.c.l.s4 1934713408
        %v1712 = vunpack.c.0.s8 %v1711
        %v1713 = vlaneseq
        %v1714 = vshrl.u32 %v1713, 7
        %v1715 = vsub.s32 %v1712, %v1714
        %v1716 = vrot.slane %v1702, %v1715
        %v1717 = vcombine.low %v1684, %v1700
        %v1718 = vcombine.high %v1684, %v1700
        %v1720 = vunpack.c.l.s4 1934713408
        %v1721 = vunpack.c.0.s8 %v1720
        %v1722 = vlaneseq
        %v1723 = vshrl.u32 %v1722, 7
        %v1724 = vsub.s32 %v1721, %v1723
        %v1725 = vrot.slane %v1717, %v1724
        %v1727 = vunpack.c.l.s4 1934713408
        %v1728 = vunpack.c.0.s8 %v1727
        %v1729 = vlaneseq
        %v1730 = vshrl.u32 %v1729, 7
        %v1731 = vsub.s32 %v1728, %v1730
        %v1732 = vrot.slane %v1718, %v1731
        %v1733 = vcombine.high %v1709, 0.0
        %v1734 = vcombine.high %v1716, 0.0
        %v1735 = vcombine.high %v1725, 0.0
        %v1736 = vcombine.high %v1732, 0.0
        %v1737 = vcombine.low %v1709, %v1716
        %v1739 = vunpack.c.l.s4 1983009808
        %v1740 = vunpack.c.0.s8 %v1739
        %v1741 = vlaneseq
        %v1742 = vshrl.u32 %v1741, 7
        %v1743 = vsub.s32 %v1740, %v1742
        %v1744 = vrot.slane %v1737, %v1743
        %v1745 = vcombine.low %v1733, %v1734
        %v1747 = vunpack.c.l.s4 1983009808
        %v1748 = vunpack.c.0.s8 %v1747
        %v1749 = vlaneseq
        %v1750 = vshrl.u32 %v1749, 7
        %v1751 = vsub.s32 %v1748, %v1750
        %v1752 = vrot.slane %v1745, %v1751
        %v1753 = vcombine.low %v1725, %v1732
        %v1755 = vunpack.c.l.s4 1983009808
        %v1756 = vunpack.c.0.s8 %v1755
        %v1757 = vlaneseq
        %v1758 = vshrl.u32 %v1757, 7
        %v1759 = vsub.s32 %v1756, %v1758
        %v1760 = vrot.slane %v1753, %v1759
        %v1761 = vcombine.low %v1735, %v1736
        %v1763 = vunpack.c.l.s4 1983009808
        %v1764 = vunpack.c.0.s8 %v1763
        %v1765 = vlaneseq
        %v1766 = vshrl.u32 %v1765, 7
        %v1767 = vsub.s32 %v1764, %v1766
        %v1768 = vrot.slane %v1761, %v1767
        %v1769 = vcombine.low %v1744, %v1752
        %v1770 = vcombine.high %v1744, %v1752
        %v1772 = vunpack.c.l.s4 1934713408
        %v1773 = vunpack.c.0.s8 %v1772
        %v1774 = vlaneseq
        %v1775 = vshrl.u32 %v1774, 7
        %v1776 = vsub.s32 %v1773, %v1775
        %v1777 = vrot.slane %v1769, %v1776
        %v1779 = vunpack.c.l.s4 1934713408
        %v1780 = vunpack.c.0.s8 %v1779
        %v1781 = vlaneseq
        %v1782 = vshrl.u32 %v1781, 7
        %v1783 = vsub.s32 %v1780, %v1782
        %v1784 = vrot.slane %v1770, %v1783
        %v1785 = vcombine.low %v1760, %v1768
        %v1786 = vcombine.high %v1760, %v1768
        %v1788 = vunpack.c.l.s4 1934713408
        %v1789 = vunpack.c.0.s8 %v1788
        %v1790 = vlaneseq
        %v1791 = vshrl.u32 %v1790, 7
        %v1792 = vsub.s32 %v1789, %v1791
        %v1793 = vrot.slane %v1785, %v1792
        %v1795 = vunpack.c.l.s4 1934713408
        %v1796 = vunpack.c.0.s8 %v1795
        %v1797 = vlaneseq
        %v1798 = vshrl.u32 %v1797, 7
        %v1799 = vsub.s32 %v1796, %v1798
        %v1800 = vrot.slane %v1786, %v1799
        %v1801 = vcombine.low %v1777, %v1793
        %v1802 = vcombine.high %v1777, %v1793
        %v1803 = vcombine.low %v1784, %v1800
        %v1804 = vcombine.high %v1784, %v1800
        %1806 = vrot.lane.b32.xlu0 %v1802, 8
        %v1807 = vpop.permute.xlu0 %1806
        %1810 = vrot.lane.b32.xlu0 %v1803, 16
        %v1811 = vpop.permute.xlu0 %1810
        %1814 = vrot.lane.b32.xlu0 %v1804, 24
        %v1815 = vpop.permute.xlu0 %1814
        %v1817 = vsel %vm1028, %v1801, %v1807
        %vm1818 = vcmask 130048
        %v1819 = vsel %vm1818, %v1817, %v1811
        %vm1820 = vcmask 195584
        %v1821 = vsel %vm1820, %v1819, %v1815
        %v1822 = vld [vmem:[#allocation7] sm:$0xff]
        %v1823 = vld [vmem:[#allocation7 + $0x8] sm:$0xff]
        %v1824 = vld [vmem:[#allocation7 + $0x10] sm:$0xff]
        %v1825 = vld [vmem:[#allocation7 + $0x18] sm:$0xff]
        %v1826 = vld [vmem:[%s4] sm:$0x1]
        %v1828 = vlaneseq
        %v1829 = vshrl.u32 %v1828, 7
        %v1830 = vsub.s32 0, %v1829
        %v1831 = vrot.slane %v1826, %v1830
        %v1834 = vsel %vm512, %v1821, 0
        %1836 = vmatprep.subr.mxu0 0.0
        %1837 = vmatpush1.msra.mxu0 %v1822
        %1838 = vmatprep.subr.mxu0 0.0
        %1839 = vmatpush1.msra.mxu0 %v1823
        %1840 = vmatprep.subr.mxu0 0.0
        %1841 = vmatpush1.msra.mxu0 %v1824
        %1842 = vmatprep.subr.mxu0 0.0
        %1843 = vmatpush1.msra.mxu0 %v1825
        %1844 = vmatprep.subr.mxu0 0.0
        %1845 = vmatpush1.msra.mxu0 0.0
        %1846 = vmatprep.subr.mxu0 0.0
        %1847 = vmatpush1.msra.mxu0 0.0
        %1848 = vmatprep.subr.mxu0 0.0
        %1849 = vmatpush1.msra.mxu0 0.0
        %1850 = vmatprep.subr.mxu0 0.0
        %1851 = vmatpush1.msra.mxu0 0.0
        %1852 = vmatprep.subr.mxu0 0.0
        %1853 = vmatpush1.msra.mxu0 0.0
        %1854 = vmatprep.subr.mxu0 0.0
        %1855 = vmatpush1.msra.mxu0 0.0
        %1856 = vmatprep.subr.mxu0 0.0
        %1857 = vmatpush1.msra.mxu0 0.0
        %1858 = vmatprep.subr.mxu0 0.0
        %1859 = vmatpush1.msra.mxu0 0.0
        %1860 = vmatprep.subr.mxu0 0.0
        %1861 = vmatpush1.msra.mxu0 0.0
        %1862 = vmatprep.subr.mxu0 0.0
        %1863 = vmatpush1.msra.mxu0 0.0
        %1864 = vmatprep.subr.mxu0 0.0
        %1865 = vmatpush1.msra.mxu0 0.0
        %1866 = vmatprep.subr.mxu0 0.0
        %1867 = vmatpush1.msra.mxu0 0.0
        %1868 = vmatprep.subr.mxu0 0.0
        %1869 = vmatpush1.msra.mxu0 0.0
        %1870 = vmatprep.subr.mxu0 0.0
        %1871 = vmatpush1.msra.mxu0 0.0
        %1872 = vmatprep.subr.mxu0 0.0
        %1873 = vmatpush1.msra.mxu0 0.0
        %1874 = vmatprep.subr.mxu0 0.0
        %1875 = vmatpush1.msra.mxu0 0.0
        %1876 = vmatprep.subr.mxu0 0.0
        %1877 = vmatpush1.msra.mxu0 0.0
        %1878 = vmatprep.subr.mxu0 0.0
        %1879 = vmatpush1.msra.mxu0 0.0
        %1880 = vmatprep.subr.mxu0 0.0
        %1881 = vmatpush1.msra.mxu0 0.0
        %1882 = vmatprep.subr.mxu0 0.0
        %1883 = vmatpush1.msra.mxu0 0.0
        %1884 = vmatprep.subr.mxu0 0.0
        %1885 = vmatpush1.msra.mxu0 0.0
        %1886 = vmatprep.subr.mxu0 0.0
        %1887 = vmatpush1.msra.mxu0 0.0
        %1888 = vmatprep.subr.mxu0 0.0
        %1889 = vmatpush1.msra.mxu0 0.0
        %1890 = vmatprep.subr.mxu0 0.0
        %1891 = vmatpush1.msra.mxu0 0.0
        %1892 = vmatprep.subr.mxu0 0.0
        %1893 = vmatpush1.msra.mxu0 0.0
        %1894 = vmatprep.subr.mxu0 0.0
        %1895 = vmatpush1.msra.mxu0 0.0
        %1896 = vmatprep.subr.mxu0 0.0
        %1897 = vmatpush1.msra.mxu0 0.0
        %1898 = vmatprep.subr.mxu0 0.0
        %1899 = vmatpush1.msra.mxu0 0.0
        %1900 = vmatprep.mubr.f32.mxu0 0.0
        %1901 = vmatmul.mubr.f32.gmra.mrb[0].mxu0 %v1834
        %v1902 = vpop.f32.mrb[0].mxu0
        %v1903 = vadd.f32 %v1831, %v1902
        %v1904 = vpop.f32.mrb[0].mxu0
        %1905 = vdwg.mxu0
        %v1906 = vadd.f32 %v500, %v1903
        %v1907 = vsel %vm512, %v1906, 0.0
        %1908 = vadd.xlane.f32.xlu0 %v1907
        %v1909 = vpop.xlane.xlu0 %1908
        %v1910 = vrcp.pop 32.0
        %v1911 = vmul.f32 %v1909, %v1910
        %v1912 = vsub.f32 %v1906, %v1911
        %v1913 = vmul.f32 %v1912, %v1912
        %v1914 = vsel %vm512, %v1913, 0.0
        %1915 = vadd.xlane.f32.xlu0 %v1914
        %v1916 = vpop.xlane.xlu0 %1915
        %v1917 = vmul.f32 %v1916, %v1910
        %v1918 = vadd.f32 %v1917, 1e-05
        %v1919 = vrsqrt.pop %v1918
        %v1920 = vmul.f32 %v1912, %v1919
        %v1921 = vld [vmem:[%s5] sm:$0x1]
        %v1923 = vlaneseq
        %v1924 = vshrl.u32 %v1923, 7
        %v1925 = vsub.s32 0, %v1924
        %v1926 = vrot.slane %v1921, %v1925
        %v1928 = vmul.f32 %v1920, %v1926
        %v1929 = vld [vmem:[%s6] sm:$0x1]
        %v1931 = vlaneseq
        %v1932 = vshrl.u32 %v1931, 7
        %v1933 = vsub.s32 0, %v1932
        %v1934 = vrot.slane %v1929, %v1933
        %v1936 = vadd.f32 %v1928, %v1934
        %v1937 = vld [vmem:[#allocation8] sm:$0xff]
        %v1938 = vld [vmem:[#allocation8 + $0x8] sm:$0xff]
        %v1939 = vld [vmem:[#allocation8 + $0x10] sm:$0xff]
        %v1940 = vld [vmem:[#allocation8 + $0x18] sm:$0xff]
        %v1941 = vld [vmem:[%s8] sm:$0x1]
        %v1943 = vlaneseq
        %v1944 = vshrl.u32 %v1943, 7
        %v1945 = vsub.s32 0, %v1944
        %v1946 = vrot.slane %v1941, %v1945
        %v1949 = vsel %vm512, %v1936, 0
        %1951 = vmatprep.subr.mxu0 0.0
        %1952 = vmatpush1.msra.mxu0 %v1937
        %1953 = vmatprep.subr.mxu0 0.0
        %1954 = vmatpush1.msra.mxu0 %v1938
        %1955 = vmatprep.subr.mxu0 0.0
        %1956 = vmatpush1.msra.mxu0 %v1939
        %1957 = vmatprep.subr.mxu0 0.0
        %1958 = vmatpush1.msra.mxu0 %v1940
        %1959 = vmatprep.subr.mxu0 0.0
        %1960 = vmatpush1.msra.mxu0 0.0
        %1961 = vmatprep.subr.mxu0 0.0
        %1962 = vmatpush1.msra.mxu0 0.0
        %1963 = vmatprep.subr.mxu0 0.0
        %1964 = vmatpush1.msra.mxu0 0.0
        %1965 = vmatprep.subr.mxu0 0.0
        %1966 = vmatpush1.msra.mxu0 0.0
        %1967 = vmatprep.subr.mxu0 0.0
        %1968 = vmatpush1.msra.mxu0 0.0
        %1969 = vmatprep.subr.mxu0 0.0
        %1970 = vmatpush1.msra.mxu0 0.0
        %1971 = vmatprep.subr.mxu0 0.0
        %1972 = vmatpush1.msra.mxu0 0.0
        %1973 = vmatprep.subr.mxu0 0.0
        %1974 = vmatpush1.msra.mxu0 0.0
        %1975 = vmatprep.subr.mxu0 0.0
        %1976 = vmatpush1.msra.mxu0 0.0
        %1977 = vmatprep.subr.mxu0 0.0
        %1978 = vmatpush1.msra.mxu0 0.0
        %1979 = vmatprep.subr.mxu0 0.0
        %1980 = vmatpush1.msra.mxu0 0.0
        %1981 = vmatprep.subr.mxu0 0.0
        %1982 = vmatpush1.msra.mxu0 0.0
        %1983 = vmatprep.subr.mxu0 0.0
        %1984 = vmatpush1.msra.mxu0 0.0
        %1985 = vmatprep.subr.mxu0 0.0
        %1986 = vmatpush1.msra.mxu0 0.0
        %1987 = vmatprep.subr.mxu0 0.0
        %1988 = vmatpush1.msra.mxu0 0.0
        %1989 = vmatprep.subr.mxu0 0.0
        %1990 = vmatpush1.msra.mxu0 0.0
        %1991 = vmatprep.subr.mxu0 0.0
        %1992 = vmatpush1.msra.mxu0 0.0
        %1993 = vmatprep.subr.mxu0 0.0
        %1994 = vmatpush1.msra.mxu0 0.0
        %1995 = vmatprep.subr.mxu0 0.0
        %1996 = vmatpush1.msra.mxu0 0.0
        %1997 = vmatprep.subr.mxu0 0.0
        %1998 = vmatpush1.msra.mxu0 0.0
        %1999 = vmatprep.subr.mxu0 0.0
        %2000 = vmatpush1.msra.mxu0 0.0
        %2001 = vmatprep.subr.mxu0 0.0
        %2002 = vmatpush1.msra.mxu0 0.0
        %2003 = vmatprep.subr.mxu0 0.0
        %2004 = vmatpush1.msra.mxu0 0.0
        %2005 = vmatprep.subr.mxu0 0.0
        %2006 = vmatpush1.msra.mxu0 0.0
        %2007 = vmatprep.subr.mxu0 0.0
        %2008 = vmatpush1.msra.mxu0 0.0
        %2009 = vmatprep.subr.mxu0 0.0
        %2010 = vmatpush1.msra.mxu0 0.0
        %2011 = vmatprep.subr.mxu0 0.0
        %2012 = vmatpush1.msra.mxu0 0.0
        %2013 = vmatprep.subr.mxu0 0.0
        %2014 = vmatpush1.msra.mxu0 0.0
        %2015 = vmatprep.mubr.f32.mxu0 0.0
        %2016 = vmatmul.mubr.f32.gmra.mrb[0].mxu0 %v1949
        %v2017 = vpop.f32.mrb[0].mxu0
        %v2018 = vadd.f32 %v1946, %v2017
        %v2019 = vpop.f32.mrb[0].mxu0
        %2020 = vdwg.mxu0
        %v2021 = vmax.f32 %v2018, 0.0
        %v2022 = vadd.f32 %v1936, %v2021
        %v2023 = vsel %vm512, %v2022, 0.0
        %2024 = vadd.xlane.f32.xlu0 %v2023
        %v2025 = vpop.xlane.xlu0 %2024
        %v2026 = vmul.f32 %v2025, %v1910
        %v2027 = vsub.f32 %v2022, %v2026
        %v2028 = vmul.f32 %v2027, %v2027
        %v2029 = vsel %vm512, %v2028, 0.0
        %2030 = vadd.xlane.f32.xlu0 %v2029
        %v2031 = vpop.xlane.xlu0 %2030
        %v2032 = vmul.f32 %v2031, %v1910
        %v2033 = vadd.f32 %v2032, 1e-05
        %v2034 = vrsqrt.pop %v2033
        %v2035 = vmul.f32 %v2027, %v2034
        %v2036 = vld [vmem:[%s9] sm:$0x1]
        %v2038 = vlaneseq
        %v2039 = vshrl.u32 %v2038, 7
        %v2040 = vsub.s32 0, %v2039
        %v2041 = vrot.slane %v2036, %v2040
        %v2043 = vmul.f32 %v2035, %v2041
        %v2044 = vld [vmem:[%s10] sm:$0x1]
        %v2046 = vlaneseq
        %v2047 = vshrl.u32 %v2046, 7
        %v2048 = vsub.s32 0, %v2047
        %v2049 = vrot.slane %v2044, %v2048
        %v2051 = vadd.f32 %v2043, %v2049
        %v2052 = vld [vmem:[%s11] sm:$0xff]
        %v2053 = vld [vmem:[%s11 + $0x8] sm:$0xff]
        %v2054 = vld [vmem:[%s11 + $0x10] sm:$0xff]
        %v2055 = vld [vmem:[%s11 + $0x18] sm:$0xff]
        %v2056 = vld [vmem:[%s12] sm:$0x1]
        %v2058 = vlaneseq
        %v2059 = vshrl.u32 %v2058, 7
        %v2060 = vsub.s32 0, %v2059
        %v2061 = vrot.slane %v2056, %v2060
        %v2064 = vsel %vm512, %v2051, 0
        %2066 = vmatprep.subr.mxu0 0.0
        %2067 = vmatpush1.msra.mxu0 %v2052
        %2068 = vmatprep.subr.mxu0 0.0
        %2069 = vmatpush1.msra.mxu0 %v2053
        %2070 = vmatprep.subr.mxu0 0.0
        %2071 = vmatpush1.msra.mxu0 %v2054
        %2072 = vmatprep.subr.mxu0 0.0
        %2073 = vmatpush1.msra.mxu0 %v2055
        %2074 = vmatprep.subr.mxu0 0.0
        %2075 = vmatpush1.msra.mxu0 0.0
        %2076 = vmatprep.subr.mxu0 0.0
        %2077 = vmatpush1.msra.mxu0 0.0
        %2078 = vmatprep.subr.mxu0 0.0
        %2079 = vmatpush1.msra.mxu0 0.0
        %2080 = vmatprep.subr.mxu0 0.0
        %2081 = vmatpush1.msra.mxu0 0.0
        %2082 = vmatprep.subr.mxu0 0.0
        %2083 = vmatpush1.msra.mxu0 0.0
        %2084 = vmatprep.subr.mxu0 0.0
        %2085 = vmatpush1.msra.mxu0 0.0
        %2086 = vmatprep.subr.mxu0 0.0
        %2087 = vmatpush1.msra.mxu0 0.0
        %2088 = vmatprep.subr.mxu0 0.0
        %2089 = vmatpush1.msra.mxu0 0.0
        %2090 = vmatprep.subr.mxu0 0.0
        %2091 = vmatpush1.msra.mxu0 0.0
        %2092 = vmatprep.subr.mxu0 0.0
        %2093 = vmatpush1.msra.mxu0 0.0
        %2094 = vmatprep.subr.mxu0 0.0
        %2095 = vmatpush1.msra.mxu0 0.0
        %2096 = vmatprep.subr.mxu0 0.0
        %2097 = vmatpush1.msra.mxu0 0.0
        %2098 = vmatprep.subr.mxu0 0.0
        %2099 = vmatpush1.msra.mxu0 0.0
        %2100 = vmatprep.subr.mxu0 0.0
        %2101 = vmatpush1.msra.mxu0 0.0
        %2102 = vmatprep.subr.mxu0 0.0
        %2103 = vmatpush1.msra.mxu0 0.0
        %2104 = vmatprep.subr.mxu0 0.0
        %2105 = vmatpush1.msra.mxu0 0.0
        %2106 = vmatprep.subr.mxu0 0.0
        %2107 = vmatpush1.msra.mxu0 0.0
        %2108 = vmatprep.subr.mxu0 0.0
        %2109 = vmatpush1.msra.mxu0 0.0
        %2110 = vmatprep.subr.mxu0 0.0
        %2111 = vmatpush1.msra.mxu0 0.0
        %2112 = vmatprep.subr.mxu0 0.0
        %2113 = vmatpush1.msra.mxu0 0.0
        %2114 = vmatprep.subr.mxu0 0.0
        %2115 = vmatpush1.msra.mxu0 0.0
        %2116 = vmatprep.subr.mxu0 0.0
        %2117 = vmatpush1.msra.mxu0 0.0
        %2118 = vmatprep.subr.mxu0 0.0
        %2119 = vmatpush1.msra.mxu0 0.0
        %2120 = vmatprep.subr.mxu0 0.0
        %2121 = vmatpush1.msra.mxu0 0.0
        %2122 = vmatprep.subr.mxu0 0.0
        %2123 = vmatpush1.msra.mxu0 0.0
        %2124 = vmatprep.subr.mxu0 0.0
        %2125 = vmatpush1.msra.mxu0 0.0
        %2126 = vmatprep.subr.mxu0 0.0
        %2127 = vmatpush1.msra.mxu0 0.0
        %2128 = vmatprep.subr.mxu0 0.0
        %2129 = vmatpush1.msra.mxu0 0.0
        %2130 = vmatprep.mubr.f32.mxu0 0.0
        %2131 = vmatmul.mubr.f32.gmra.mrb[0].mxu0 %v2064
        %v2132 = vpop.f32.mrb[0].mxu0
        %v2133 = vadd.f32 %v2061, %v2132
        %v2134 = vpop.f32.mrb[0].mxu0
        %2135 = vdwg.mxu0
        %2136 = vst [vmem:[%s499] sm:$0xff] %v2133
        %s2137 = sand.u32 %s318, 1
        %s2138 = scalar_lea.sflag [#allocation4], %s2137
        %s2139 = sand.u32 %s318, 1
        %s2140 = smul.addr %s2139, 8
        %s2141 = scalar_lea.vmem [#allocation10], %s2140
        // Predicated region
        $region89: #{tpu_custom_call.1} parent=71 // pred_check
          %p2142 = pneg %p328
        $region90: #{tpu_custom_call.1} parent=71 // pred_check_branch
          %2144 = sbr.rel (%p2142) target = $region92
        $region91: #{tpu_custom_call.1} parent=71 // pred_region
          %s2146 = ssub.s32 128, 128
          %2147 = vsyncadd %s2138, %s2146
          %s2148 = smul.addr %s32, 128
          %s2149 = scalar_lea.hbm %s13, %s2148
          %s2151 = sshll.u32 %s2141, 4
          %s2152 = int_to_ptr.vmem [resolvable:$true] %s2151
          %2154 = dma.vmem_to_hbm [thread:$0]  %s2152, 128, %s2149, %s2138
        $region92: #{tpu_custom_call.1} parent=71 // pred_fallthru
          _
      $region72: #{tpu_custom_call.1} parent=5 // pred_fallthru
        _
      %p2155 = scmp.le.s32.totalorder 2, %s27
      // Predicated region
      $region93: #{tpu_custom_call.1} parent=5 // pred_check
        %p2156 = pneg %p2155
      $region94: #{tpu_custom_call.1} parent=5 // pred_check_branch
        %2158 = sbr.rel (%p2156) target = $region96
      $region95: #{tpu_custom_call.1} parent=5 // pred_region
        %s2159 = ssub.s32 %s27, 2
        // Predicated region
        $region97: #{tpu_custom_call.1} parent=95 // pred_check
          %p2160 = pneg %p334
        $region98: #{tpu_custom_call.1} parent=95 // pred_check_branch
          %2162 = sbr.rel (%p2160) target = $region100
        $region99: #{tpu_custom_call.1} parent=95 // pred_region
          %s2163 = sand.u32 %s319, 1
          %s2164 = scalar_lea.sflag [#allocation4], %s2163
          %s2165 = sand.u32 %s319, 1
          %s2166 = smul.addr %s2165, 8
          %s2167 = scalar_lea.vmem [#allocation10], %s2166
          %2168 = dma.done %s2164, 128
        $region100: #{tpu_custom_call.1} parent=95 // pred_fallthru
          _
      $region96: #{tpu_custom_call.1} parent=5 // pred_fallthru
        _
    $region6: #{tpu_custom_call.1} parent=1 // loop_footer
      %s31 = sadd.s32 1, %s27
    $region7: #{tpu_custom_call.1} parent=1 // loop_footer_branch
      %26 = sbr.rel target = $region3
    $region8: #{tpu_custom_call.1} parent=1 // loop_exit
      _
    %2169 = vsyncpa [#allocation3], 1
    %s2170 = scalar_lea.sflag [#allocation3], 1
    %2171 = vsyncpa %s2170, 1
    %2172 = vsyncpa [#allocation6], 1
    %2173 = vsyncpa [#allocation9], 1
    %2174 = vsyncpa [#allocation4], 1
    %s2175 = scalar_lea.sflag [#allocation4], 1
    %2176 = vsyncpa %s2175, 1

</llo_original>
